<compile_context>
chip_gen: v7x
topology: tpu7x:2x2x1
jax: 0.10.0
libtpu: 0.0.40
codegen_flags: <defaults>
</compile_context>

<pallas_src>
import jax
import jax.numpy as jnp
from jax import lax
from jax.experimental import pallas as pl
from jax.experimental.pallas import tpu as pltpu
import numpy as np


def residual_lstm_kernel(x_ref, w_ih_t_ref, w_hh_t_ref, b_ref, w_proj_t_ref, b_proj_ref,
                         out_ref, h_out_ref, c_out_ref, hs_scr):
    """Whole ResidualLSTM forward in one kernel invocation (everything VMEM-resident)."""
    B, T, D = x_ref.shape
    H = w_hh_t_ref.shape[0]

    x = x_ref[...]                                   # (B, T, D)
    w_hh_t = w_hh_t_ref[...]                         # (H, 4H)

    # ---- Batched input GEMM, hoisted off the sequential critical path ----
    gx = jnp.dot(x.reshape(B * T, D), w_ih_t_ref[...],
                 preferred_element_type=jnp.float32) + b_ref[...]       # (B*T, 4H)
    gx = gx.reshape(B, T, 4 * H)                                        # (B, T, 4H)

    # ---- Sequential recurrence: only h @ W_hh^T per step (PyTorch gate order [i, f, g, o]) ----
    h = jnp.zeros((B, H), jnp.float32)
    c = jnp.zeros((B, H), jnp.float32)
    for t in range(T):                               # static unroll; T is small
        gates = gx[:, t, :] + jnp.dot(h, w_hh_t, preferred_element_type=jnp.float32)  # (B, 4H)
        i_g = jax.nn.sigmoid(gates[:, 0 * H:1 * H])
        f_g = jax.nn.sigmoid(gates[:, 1 * H:2 * H])
        g_g = jnp.tanh(gates[:, 2 * H:3 * H])
        o_g = jax.nn.sigmoid(gates[:, 3 * H:4 * H])
        c = f_g * c + i_g * g_g
        h = o_g * jnp.tanh(c)
        hs_scr[:, t, :] = h                          # stash per-step hidden for batched proj

    # ---- Batched output projection + residual (single GEMM over all T) ----
    proj = jnp.dot(hs_scr[...].reshape(B * T, H), w_proj_t_ref[...],
                   preferred_element_type=jnp.float32) + b_proj_ref[...]  # (B*T, D)
    out_ref[...] = (x + proj.reshape(B, T, D)).astype(out_ref.dtype)

    # Final states written once (not per step).
    h_out_ref[...] = h.astype(h_out_ref.dtype)
    c_out_ref[...] = c.astype(c_out_ref.dtype)


def residual_lstm_forward(x, params):
    """x: (B, T, D) batch_first, float32.  Returns (output (B,T,D), (h_n (1,B,H), c_n (1,B,H)))."""
    w_ih, w_hh, b_ih, b_hh, w_proj, b_proj = (
        params["w_ih"], params["w_hh"], params["b_ih"], params["b_hh"],
        params["w_proj"], params["b_proj"])
    B, T, D = x.shape
    H = w_hh.shape[1]

    # Pre-transpose weights so every kernel matmul is a plain (M, K) @ (K, N) MXU op.
    w_ih_t = jnp.transpose(w_ih, (1, 0))             # (D, 4H)
    w_hh_t = jnp.transpose(w_hh, (1, 0))             # (H, 4H)
    b = (b_ih + b_hh).reshape(1, 4 * H)              # (1, 4H)
    w_proj_t = jnp.transpose(w_proj, (1, 0))         # (H, D)
    b_proj2 = b_proj.reshape(1, D)                   # (1, D)

    # Pad batch up to a sublane multiple (8). Rows are independent; padding is sliced off below.
    Bp = ((B + 7) // 8) * 8
    x_p = x if Bp == B else jnp.pad(x, ((0, Bp - B), (0, 0), (0, 0)))

    out_p, h_p, c_p = pl.pallas_call(
        residual_lstm_kernel,
        out_shape=(
            jax.ShapeDtypeStruct((Bp, T, D), x.dtype),
            jax.ShapeDtypeStruct((Bp, H), x.dtype),
            jax.ShapeDtypeStruct((Bp, H), x.dtype),
        ),
        grid_spec=pltpu.PrefetchScalarGridSpec(
            num_scalar_prefetch=0,
            grid=(1,),                                              # single step: no per-t grid overhead
            in_specs=[
                pl.BlockSpec((Bp, T, D), lambda i: (0, 0, 0)),      # x (batch-first, no transpose)
                pl.BlockSpec((D, 4 * H), lambda i: (0, 0)),         # W_ih^T
                pl.BlockSpec((H, 4 * H), lambda i: (0, 0)),         # W_hh^T
                pl.BlockSpec((1, 4 * H), lambda i: (0, 0)),         # b_ih + b_hh
                pl.BlockSpec((H, D), lambda i: (0, 0)),             # W_proj^T
                pl.BlockSpec((1, D), lambda i: (0, 0)),             # b_proj
            ],
            out_specs=[
                pl.BlockSpec((Bp, T, D), lambda i: (0, 0, 0)),      # output
                pl.BlockSpec((Bp, H), lambda i: (0, 0)),            # h_n
                pl.BlockSpec((Bp, H), lambda i: (0, 0)),            # c_n
            ],
            scratch_shapes=[
                pltpu.VMEM((Bp, T, H), jnp.float32),                # per-step hidden states
            ],
        ),
        compiler_params=pltpu.CompilerParams(
            dimension_semantics=("arbitrary",),
        ),
    )(x_p, w_ih_t, w_hh_t, b, w_proj_t, b_proj2)

    out = out_p[:B]
    h_n = h_p[:B][None, ...]                         # (1, B, H) like PyTorch
    c_n = c_p[:B][None, ...]
    return out, (h_n, c_n)


def residual_lstm_ref(x, params):
    """Pure-JAX reference matching PyTorch nn.LSTM(batch_first=True) + Linear + residual."""
    w_ih, w_hh, b_ih, b_hh, w_proj, b_proj = (
        params["w_ih"], params["w_hh"], params["b_ih"], params["b_hh"],
        params["w_proj"], params["b_proj"])
    B, T, D = x.shape
    H = w_hh.shape[1]

    def step(carry, x_t):
        h, c = carry
        gates = x_t @ w_ih.T + b_ih + h @ w_hh.T + b_hh
        i, f, g, o = jnp.split(gates, 4, axis=-1)
        i = jax.nn.sigmoid(i); f = jax.nn.sigmoid(f)
        g = jnp.tanh(g); o = jax.nn.sigmoid(o)
        c = f * c + i * g
        h = o * jnp.tanh(c)
        return (h, c), h

    (h_n, c_n), hs = lax.scan(step,
                              (jnp.zeros((B, H), x.dtype), jnp.zeros((B, H), x.dtype)),
                              jnp.transpose(x, (1, 0, 2)))
    rnn_out = jnp.transpose(hs, (1, 0, 2))           # (B, T, H)
    proj = rnn_out @ w_proj.T + b_proj
    return x + proj, (h_n[None, ...], c_n[None, ...])


def init_params(key, input_size, hidden_size):
    """Deterministic init mimicking PyTorch's uniform(-1/sqrt(H), 1/sqrt(H))."""
    k = 1.0 / np.sqrt(hidden_size)
    keys = jax.random.split(key, 6)
    return {
        "w_ih":   jax.random.uniform(keys[0], (4 * hidden_size, input_size), jnp.float32, -k, k),
        "w_hh":   jax.random.uniform(keys[1], (4 * hidden_size, hidden_size), jnp.float32, -k, k),
        "b_ih":   jax.random.uniform(keys[2], (4 * hidden_size,), jnp.float32, -k, k),
        "b_hh":   jax.random.uniform(keys[3], (4 * hidden_size,), jnp.float32, -k, k),
        "w_proj": jax.random.uniform(keys[4], (input_size, hidden_size), jnp.float32, -k, k),
        "b_proj": jax.random.uniform(keys[5], (input_size,), jnp.float32, -k, k),
    }


if __name__ == "__main__":
    # Small shapes consistent with the module: batch=2, seq=8, input_size=32, hidden=32.
    B, T, D, H = 2, 8, 32, 32
    key = jax.random.PRNGKey(0)
    k_x, k_p = jax.random.split(key)
    x = jax.random.normal(k_x, (B, T, D), dtype=jnp.float32)
    params = init_params(k_p, D, H)

    # TODO(synk): packed_input=True (pack_padded_sequence) and bidirectional=True paths have no
    # Pallas equivalent here; only the default dense, batch_first, unidirectional path is implemented.

    out, (h_n, c_n) = jax.jit(residual_lstm_forward)(x, params)
    jax.block_until_ready((out, h_n, c_n))

    ref_out, (ref_h, ref_c) = residual_lstm_ref(x, params)
    np.testing.assert_allclose(np.asarray(out), np.asarray(ref_out), rtol=1e-4, atol=1e-4)
    np.testing.assert_allclose(np.asarray(h_n), np.asarray(ref_h), rtol=1e-4, atol=1e-4)
    np.testing.assert_allclose(np.asarray(c_n), np.asarray(ref_c), rtol=1e-4, atol=1e-4)

    print("KERNEL_OK")
</pallas_src>

<mosaic_0001>
module attributes {stable_mosaic.version = 11 : i64} {
  func.func @residual_lstm_kernel(%arg0: i32, %arg1: memref<8x8x32xf32, #tpu.memory_space<vmem>>, %arg2: memref<32x128xf32, #tpu.memory_space<vmem>>, %arg3: memref<32x128xf32, #tpu.memory_space<vmem>>, %arg4: memref<1x128xf32, #tpu.memory_space<vmem>>, %arg5: memref<32x32xf32, #tpu.memory_space<vmem>>, %arg6: memref<1x32xf32, #tpu.memory_space<vmem>>, %arg7: memref<8x8x32xf32, #tpu.memory_space<vmem>>, %arg8: memref<8x32xf32, #tpu.memory_space<vmem>>, %arg9: memref<8x32xf32, #tpu.memory_space<vmem>>, %arg10: memref<8x8x32xf32, #tpu.memory_space<vmem>>) attributes {dimension_semantics = [#tpu.dimension_semantics<arbitrary>], iteration_bounds = array<i64: 1>, scalar_prefetch = 0 : i64, scratch_operands = 1 : i64, tpu.core_type = #tpu.core_type<tc>, window_params = [{pipeline_mode = #tpu.pipeline_mode<synchronous>, transform_indices = @transform_0, window_bounds = array<i64: 8, 8, 32>}, {pipeline_mode = #tpu.pipeline_mode<synchronous>, transform_indices = @transform_1, window_bounds = array<i64: 32, 128>}, {pipeline_mode = #tpu.pipeline_mode<synchronous>, transform_indices = @transform_2, window_bounds = array<i64: 32, 128>}, {pipeline_mode = #tpu.pipeline_mode<synchronous>, transform_indices = @transform_3, window_bounds = array<i64: 1, 128>}, {pipeline_mode = #tpu.pipeline_mode<synchronous>, transform_indices = @transform_4, window_bounds = array<i64: 32, 32>}, {pipeline_mode = #tpu.pipeline_mode<synchronous>, transform_indices = @transform_5, window_bounds = array<i64: 1, 32>}, {pipeline_mode = #tpu.pipeline_mode<synchronous>, transform_indices = @transform_6, window_bounds = array<i64: 8, 8, 32>}, {pipeline_mode = #tpu.pipeline_mode<synchronous>, transform_indices = @transform_7, window_bounds = array<i64: 8, 32>}, {pipeline_mode = #tpu.pipeline_mode<synchronous>, transform_indices = @transform_8, window_bounds = array<i64: 8, 32>}]} {
    %c0 = arith.constant 0 : index
    %c0_0 = arith.constant 0 : index
    %c0_1 = arith.constant 0 : index
    %0 = vector.load %arg1[%c0, %c0_0, %c0_1] : memref<8x8x32xf32, #tpu.memory_space<vmem>>, vector<8x8x32xf32>
    %c0_2 = arith.constant 0 : index
    %c0_3 = arith.constant 0 : index
    %1 = vector.load %arg3[%c0_2, %c0_3] : memref<32x128xf32, #tpu.memory_space<vmem>>, vector<32x128xf32>
    %2 = vector.shape_cast %0 : vector<8x8x32xf32> to vector<64x32xf32>
    %c0_4 = arith.constant 0 : index
    %c0_5 = arith.constant 0 : index
    %3 = vector.load %arg2[%c0_4, %c0_5] : memref<32x128xf32, #tpu.memory_space<vmem>>, vector<32x128xf32>
    %cst = arith.constant dense<0.000000e+00> : vector<64x128xf32>
    %4 = tpu.matmul %2, %3, %cst {dimension_numbers = #tpu.dot_dimension_numbers<[1], [0], [0], [1], [0, 0, 1, 1], [], []>} : vector<64x32xf32>, vector<32x128xf32>, vector<64x128xf32> -> vector<64x128xf32>
    %c0_6 = arith.constant 0 : index
    %c0_7 = arith.constant 0 : index
    %5 = vector.load %arg4[%c0_6, %c0_7] : memref<1x128xf32, #tpu.memory_space<vmem>>, vector<1x128xf32>
    %6 = vector.broadcast %5 : vector<1x128xf32> to vector<64x128xf32>
    %7 = arith.addf %4, %6 : vector<64x128xf32>
    %8 = vector.shape_cast %7 : vector<64x128xf32> to vector<8x8x128xf32>
    %cst_8 = arith.constant 0.000000e+00 : f32
    %9 = vector.broadcast %cst_8 : f32 to vector<8x32xf32>
    %cst_9 = arith.constant 0.000000e+00 : f32
    %10 = vector.broadcast %cst_9 : f32 to vector<8x32xf32>
    %11 = vector.extract_strided_slice %8 {offsets = [0, 0, 0], sizes = [8, 1, 128], strides = [1, 1, 1]} : vector<8x8x128xf32> to vector<8x1x128xf32>
    %12 = vector.shape_cast %11 : vector<8x1x128xf32> to vector<8x128xf32>
    %cst_10 = arith.constant dense<0.000000e+00> : vector<8x128xf32>
    %13 = tpu.matmul %9, %1, %cst_10 {dimension_numbers = #tpu.dot_dimension_numbers<[1], [0], [0], [1], [0, 0, 1, 1], [], []>} : vector<8x32xf32>, vector<32x128xf32>, vector<8x128xf32> -> vector<8x128xf32>
    %14 = arith.addf %12, %13 : vector<8x128xf32>
    %15 = vector.extract_strided_slice %14 {offsets = [0, 0], sizes = [8, 32], strides = [1, 1]} : vector<8x128xf32> to vector<8x32xf32>
    %16 = arith.negf %15 : vector<8x32xf32>
    %17 = math.exp %16 : vector<8x32xf32>
    %cst_11 = arith.constant 1.000000e+00 : f32
    %18 = vector.broadcast %cst_11 : f32 to vector<8x32xf32>
    %19 = arith.addf %18, %17 : vector<8x32xf32>
    %20 = arith.divf %18, %19 : vector<8x32xf32>
    %21 = vector.extract_strided_slice %14 {offsets = [0, 32], sizes = [8, 32], strides = [1, 1]} : vector<8x128xf32> to vector<8x32xf32>
    %22 = arith.negf %21 : vector<8x32xf32>
    %23 = math.exp %22 : vector<8x32xf32>
    %cst_12 = arith.constant 1.000000e+00 : f32
    %24 = vector.broadcast %cst_12 : f32 to vector<8x32xf32>
    %25 = arith.addf %24, %23 : vector<8x32xf32>
    %26 = arith.divf %24, %25 : vector<8x32xf32>
    %27 = vector.extract_strided_slice %14 {offsets = [0, 64], sizes = [8, 32], strides = [1, 1]} : vector<8x128xf32> to vector<8x32xf32>
    %28 = math.tanh %27 : vector<8x32xf32>
    %29 = vector.extract_strided_slice %14 {offsets = [0, 96], sizes = [8, 32], strides = [1, 1]} : vector<8x128xf32> to vector<8x32xf32>
    %30 = arith.negf %29 : vector<8x32xf32>
    %31 = math.exp %30 : vector<8x32xf32>
    %cst_13 = arith.constant 1.000000e+00 : f32
    %32 = vector.broadcast %cst_13 : f32 to vector<8x32xf32>
    %33 = arith.addf %32, %31 : vector<8x32xf32>
    %34 = arith.divf %32, %33 : vector<8x32xf32>
    %35 = arith.mulf %26, %10 : vector<8x32xf32>
    %36 = arith.mulf %20, %28 : vector<8x32xf32>
    %37 = arith.addf %35, %36 : vector<8x32xf32>
    %38 = math.tanh %37 : vector<8x32xf32>
    %39 = arith.mulf %34, %38 : vector<8x32xf32>
    %c0_14 = arith.constant 0 : index
    %c0_15 = arith.constant 0 : index
    %c0_16 = arith.constant 0 : index
    %40 = vector.load %arg10[%c0_14, %c0_15, %c0_16] : memref<8x8x32xf32, #tpu.memory_space<vmem>>, vector<8x1x32xf32>
    %41 = vector.shape_cast %40 : vector<8x1x32xf32> to vector<8x32xf32>
    %42 = vector.shape_cast %39 : vector<8x32xf32> to vector<8x1x32xf32>
    tpu.vector_store %arg10[%c0_14, %c0_15, %c0_16], %42 {strides = array<i32>} : memref<8x8x32xf32, #tpu.memory_space<vmem>>, vector<8x1x32xf32>,
    %43 = vector.extract_strided_slice %8 {offsets = [0, 1, 0], sizes = [8, 1, 128], strides = [1, 1, 1]} : vector<8x8x128xf32> to vector<8x1x128xf32>
    %44 = vector.shape_cast %43 : vector<8x1x128xf32> to vector<8x128xf32>
    %cst_17 = arith.constant dense<0.000000e+00> : vector<8x128xf32>
    %45 = tpu.matmul %39, %1, %cst_17 {dimension_numbers = #tpu.dot_dimension_numbers<[1], [0], [0], [1], [0, 0, 1, 1], [], []>} : vector<8x32xf32>, vector<32x128xf32>, vector<8x128xf32> -> vector<8x128xf32>
    %46 = arith.addf %44, %45 : vector<8x128xf32>
    %47 = vector.extract_strided_slice %46 {offsets = [0, 0], sizes = [8, 32], strides = [1, 1]} : vector<8x128xf32> to vector<8x32xf32>
    %48 = arith.negf %47 : vector<8x32xf32>
    %49 = math.exp %48 : vector<8x32xf32>
    %cst_18 = arith.constant 1.000000e+00 : f32
    %50 = vector.broadcast %cst_18 : f32 to vector<8x32xf32>
    %51 = arith.addf %50, %49 : vector<8x32xf32>
    %52 = arith.divf %50, %51 : vector<8x32xf32>
    %53 = vector.extract_strided_slice %46 {offsets = [0, 32], sizes = [8, 32], strides = [1, 1]} : vector<8x128xf32> to vector<8x32xf32>
    %54 = arith.negf %53 : vector<8x32xf32>
    %55 = math.exp %54 : vector<8x32xf32>
    %cst_19 = arith.constant 1.000000e+00 : f32
    %56 = vector.broadcast %cst_19 : f32 to vector<8x32xf32>
    %57 = arith.addf %56, %55 : vector<8x32xf32>
    %58 = arith.divf %56, %57 : vector<8x32xf32>
    %59 = vector.extract_strided_slice %46 {offsets = [0, 64], sizes = [8, 32], strides = [1, 1]} : vector<8x128xf32> to vector<8x32xf32>
    %60 = math.tanh %59 : vector<8x32xf32>
    %61 = vector.extract_strided_slice %46 {offsets = [0, 96], sizes = [8, 32], strides = [1, 1]} : vector<8x128xf32> to vector<8x32xf32>
    %62 = arith.negf %61 : vector<8x32xf32>
    %63 = math.exp %62 : vector<8x32xf32>
    %cst_20 = arith.constant 1.000000e+00 : f32
    %64 = vector.broadcast %cst_20 : f32 to vector<8x32xf32>
    %65 = arith.addf %64, %63 : vector<8x32xf32>
    %66 = arith.divf %64, %65 : vector<8x32xf32>
    %67 = arith.mulf %58, %37 : vector<8x32xf32>
    %68 = arith.mulf %52, %60 : vector<8x32xf32>
    %69 = arith.addf %67, %68 : vector<8x32xf32>
    %70 = math.tanh %69 : vector<8x32xf32>
    %71 = arith.mulf %66, %70 : vector<8x32xf32>
    %c0_21 = arith.constant 0 : index
    %c1 = arith.constant 1 : index
    %c0_22 = arith.constant 0 : index
    %72 = vector.load %arg10[%c0_21, %c1, %c0_22] : memref<8x8x32xf32, #tpu.memory_space<vmem>>, vector<8x1x32xf32>
    %73 = vector.shape_cast %72 : vector<8x1x32xf32> to vector<8x32xf32>
    %74 = vector.shape_cast %71 : vector<8x32xf32> to vector<8x1x32xf32>
    tpu.vector_store %arg10[%c0_21, %c1, %c0_22], %74 {strides = array<i32>} : memref<8x8x32xf32, #tpu.memory_space<vmem>>, vector<8x1x32xf32>,
    %75 = vector.extract_strided_slice %8 {offsets = [0, 2, 0], sizes = [8, 1, 128], strides = [1, 1, 1]} : vector<8x8x128xf32> to vector<8x1x128xf32>
    %76 = vector.shape_cast %75 : vector<8x1x128xf32> to vector<8x128xf32>
    %cst_23 = arith.constant dense<0.000000e+00> : vector<8x128xf32>
    %77 = tpu.matmul %71, %1, %cst_23 {dimension_numbers = #tpu.dot_dimension_numbers<[1], [0], [0], [1], [0, 0, 1, 1], [], []>} : vector<8x32xf32>, vector<32x128xf32>, vector<8x128xf32> -> vector<8x128xf32>
    %78 = arith.addf %76, %77 : vector<8x128xf32>
    %79 = vector.extract_strided_slice %78 {offsets = [0, 0], sizes = [8, 32], strides = [1, 1]} : vector<8x128xf32> to vector<8x32xf32>
    %80 = arith.negf %79 : vector<8x32xf32>
    %81 = math.exp %80 : vector<8x32xf32>
    %cst_24 = arith.constant 1.000000e+00 : f32
    %82 = vector.broadcast %cst_24 : f32 to vector<8x32xf32>
    %83 = arith.addf %82, %81 : vector<8x32xf32>
    %84 = arith.divf %82, %83 : vector<8x32xf32>
    %85 = vector.extract_strided_slice %78 {offsets = [0, 32], sizes = [8, 32], strides = [1, 1]} : vector<8x128xf32> to vector<8x32xf32>
    %86 = arith.negf %85 : vector<8x32xf32>
    %87 = math.exp %86 : vector<8x32xf32>
    %cst_25 = arith.constant 1.000000e+00 : f32
    %88 = vector.broadcast %cst_25 : f32 to vector<8x32xf32>
    %89 = arith.addf %88, %87 : vector<8x32xf32>
    %90 = arith.divf %88, %89 : vector<8x32xf32>
    %91 = vector.extract_strided_slice %78 {offsets = [0, 64], sizes = [8, 32], strides = [1, 1]} : vector<8x128xf32> to vector<8x32xf32>
    %92 = math.tanh %91 : vector<8x32xf32>
    %93 = vector.extract_strided_slice %78 {offsets = [0, 96], sizes = [8, 32], strides = [1, 1]} : vector<8x128xf32> to vector<8x32xf32>
    %94 = arith.negf %93 : vector<8x32xf32>
    %95 = math.exp %94 : vector<8x32xf32>
    %cst_26 = arith.constant 1.000000e+00 : f32
    %96 = vector.broadcast %cst_26 : f32 to vector<8x32xf32>
    %97 = arith.addf %96, %95 : vector<8x32xf32>
    %98 = arith.divf %96, %97 : vector<8x32xf32>
    %99 = arith.mulf %90, %69 : vector<8x32xf32>
    %100 = arith.mulf %84, %92 : vector<8x32xf32>
    %101 = arith.addf %99, %100 : vector<8x32xf32>
    %102 = math.tanh %101 : vector<8x32xf32>
    %103 = arith.mulf %98, %102 : vector<8x32xf32>
    %c0_27 = arith.constant 0 : index
    %c2 = arith.constant 2 : index
    %c0_28 = arith.constant 0 : index
    %104 = vector.load %arg10[%c0_27, %c2, %c0_28] : memref<8x8x32xf32, #tpu.memory_space<vmem>>, vector<8x1x32xf32>
    %105 = vector.shape_cast %104 : vector<8x1x32xf32> to vector<8x32xf32>
    %106 = vector.shape_cast %103 : vector<8x32xf32> to vector<8x1x32xf32>
    tpu.vector_store %arg10[%c0_27, %c2, %c0_28], %106 {strides = array<i32>} : memref<8x8x32xf32, #tpu.memory_space<vmem>>, vector<8x1x32xf32>,
    %107 = vector.extract_strided_slice %8 {offsets = [0, 3, 0], sizes = [8, 1, 128], strides = [1, 1, 1]} : vector<8x8x128xf32> to vector<8x1x128xf32>
    %108 = vector.shape_cast %107 : vector<8x1x128xf32> to vector<8x128xf32>
    %cst_29 = arith.constant dense<0.000000e+00> : vector<8x128xf32>
    %109 = tpu.matmul %103, %1, %cst_29 {dimension_numbers = #tpu.dot_dimension_numbers<[1], [0], [0], [1], [0, 0, 1, 1], [], []>} : vector<8x32xf32>, vector<32x128xf32>, vector<8x128xf32> -> vector<8x128xf32>
    %110 = arith.addf %108, %109 : vector<8x128xf32>
    %111 = vector.extract_strided_slice %110 {offsets = [0, 0], sizes = [8, 32], strides = [1, 1]} : vector<8x128xf32> to vector<8x32xf32>
    %112 = arith.negf %111 : vector<8x32xf32>
    %113 = math.exp %112 : vector<8x32xf32>
    %cst_30 = arith.constant 1.000000e+00 : f32
    %114 = vector.broadcast %cst_30 : f32 to vector<8x32xf32>
    %115 = arith.addf %114, %113 : vector<8x32xf32>
    %116 = arith.divf %114, %115 : vector<8x32xf32>
    %117 = vector.extract_strided_slice %110 {offsets = [0, 32], sizes = [8, 32], strides = [1, 1]} : vector<8x128xf32> to vector<8x32xf32>
    %118 = arith.negf %117 : vector<8x32xf32>
    %119 = math.exp %118 : vector<8x32xf32>
    %cst_31 = arith.constant 1.000000e+00 : f32
    %120 = vector.broadcast %cst_31 : f32 to vector<8x32xf32>
    %121 = arith.addf %120, %119 : vector<8x32xf32>
    %122 = arith.divf %120, %121 : vector<8x32xf32>
    %123 = vector.extract_strided_slice %110 {offsets = [0, 64], sizes = [8, 32], strides = [1, 1]} : vector<8x128xf32> to vector<8x32xf32>
    %124 = math.tanh %123 : vector<8x32xf32>
    %125 = vector.extract_strided_slice %110 {offsets = [0, 96], sizes = [8, 32], strides = [1, 1]} : vector<8x128xf32> to vector<8x32xf32>
    %126 = arith.negf %125 : vector<8x32xf32>
    %127 = math.exp %126 : vector<8x32xf32>
    %cst_32 = arith.constant 1.000000e+00 : f32
    %128 = vector.broadcast %cst_32 : f32 to vector<8x32xf32>
    %129 = arith.addf %128, %127 : vector<8x32xf32>
    %130 = arith.divf %128, %129 : vector<8x32xf32>
    %131 = arith.mulf %122, %101 : vector<8x32xf32>
    %132 = arith.mulf %116, %124 : vector<8x32xf32>
    %133 = arith.addf %131, %132 : vector<8x32xf32>
    %134 = math.tanh %133 : vector<8x32xf32>
    %135 = arith.mulf %130, %134 : vector<8x32xf32>
    %c0_33 = arith.constant 0 : index
    %c3 = arith.constant 3 : index
    %c0_34 = arith.constant 0 : index
    %136 = vector.load %arg10[%c0_33, %c3, %c0_34] : memref<8x8x32xf32, #tpu.memory_space<vmem>>, vector<8x1x32xf32>
    %137 = vector.shape_cast %136 : vector<8x1x32xf32> to vector<8x32xf32>
    %138 = vector.shape_cast %135 : vector<8x32xf32> to vector<8x1x32xf32>
    tpu.vector_store %arg10[%c0_33, %c3, %c0_34], %138 {strides = array<i32>} : memref<8x8x32xf32, #tpu.memory_space<vmem>>, vector<8x1x32xf32>,
    %139 = vector.extract_strided_slice %8 {offsets = [0, 4, 0], sizes = [8, 1, 128], strides = [1, 1, 1]} : vector<8x8x128xf32> to vector<8x1x128xf32>
    %140 = vector.shape_cast %139 : vector<8x1x128xf32> to vector<8x128xf32>
    %cst_35 = arith.constant dense<0.000000e+00> : vector<8x128xf32>
    %141 = tpu.matmul %135, %1, %cst_35 {dimension_numbers = #tpu.dot_dimension_numbers<[1], [0], [0], [1], [0, 0, 1, 1], [], []>} : vector<8x32xf32>, vector<32x128xf32>, vector<8x128xf32> -> vector<8x128xf32>
    %142 = arith.addf %140, %141 : vector<8x128xf32>
    %143 = vector.extract_strided_slice %142 {offsets = [0, 0], sizes = [8, 32], strides = [1, 1]} : vector<8x128xf32> to vector<8x32xf32>
    %144 = arith.negf %143 : vector<8x32xf32>
    %145 = math.exp %144 : vector<8x32xf32>
    %cst_36 = arith.constant 1.000000e+00 : f32
    %146 = vector.broadcast %cst_36 : f32 to vector<8x32xf32>
    %147 = arith.addf %146, %145 : vector<8x32xf32>
    %148 = arith.divf %146, %147 : vector<8x32xf32>
    %149 = vector.extract_strided_slice %142 {offsets = [0, 32], sizes = [8, 32], strides = [1, 1]} : vector<8x128xf32> to vector<8x32xf32>
    %150 = arith.negf %149 : vector<8x32xf32>
    %151 = math.exp %150 : vector<8x32xf32>
    %cst_37 = arith.constant 1.000000e+00 : f32
    %152 = vector.broadcast %cst_37 : f32 to vector<8x32xf32>
    %153 = arith.addf %152, %151 : vector<8x32xf32>
    %154 = arith.divf %152, %153 : vector<8x32xf32>
    %155 = vector.extract_strided_slice %142 {offsets = [0, 64], sizes = [8, 32], strides = [1, 1]} : vector<8x128xf32> to vector<8x32xf32>
    %156 = math.tanh %155 : vector<8x32xf32>
    %157 = vector.extract_strided_slice %142 {offsets = [0, 96], sizes = [8, 32], strides = [1, 1]} : vector<8x128xf32> to vector<8x32xf32>
    %158 = arith.negf %157 : vector<8x32xf32>
    %159 = math.exp %158 : vector<8x32xf32>
    %cst_38 = arith.constant 1.000000e+00 : f32
    %160 = vector.broadcast %cst_38 : f32 to vector<8x32xf32>
    %161 = arith.addf %160, %159 : vector<8x32xf32>
    %162 = arith.divf %160, %161 : vector<8x32xf32>
    %163 = arith.mulf %154, %133 : vector<8x32xf32>
    %164 = arith.mulf %148, %156 : vector<8x32xf32>
    %165 = arith.addf %163, %164 : vector<8x32xf32>
    %166 = math.tanh %165 : vector<8x32xf32>
    %167 = arith.mulf %162, %166 : vector<8x32xf32>
    %c0_39 = arith.constant 0 : index
    %c4 = arith.constant 4 : index
    %c0_40 = arith.constant 0 : index
    %168 = vector.load %arg10[%c0_39, %c4, %c0_40] : memref<8x8x32xf32, #tpu.memory_space<vmem>>, vector<8x1x32xf32>
    %169 = vector.shape_cast %168 : vector<8x1x32xf32> to vector<8x32xf32>
    %170 = vector.shape_cast %167 : vector<8x32xf32> to vector<8x1x32xf32>
    tpu.vector_store %arg10[%c0_39, %c4, %c0_40], %170 {strides = array<i32>} : memref<8x8x32xf32, #tpu.memory_space<vmem>>, vector<8x1x32xf32>,
    %171 = vector.extract_strided_slice %8 {offsets = [0, 5, 0], sizes = [8, 1, 128], strides = [1, 1, 1]} : vector<8x8x128xf32> to vector<8x1x128xf32>
    %172 = vector.shape_cast %171 : vector<8x1x128xf32> to vector<8x128xf32>
    %cst_41 = arith.constant dense<0.000000e+00> : vector<8x128xf32>
    %173 = tpu.matmul %167, %1, %cst_41 {dimension_numbers = #tpu.dot_dimension_numbers<[1], [0], [0], [1], [0, 0, 1, 1], [], []>} : vector<8x32xf32>, vector<32x128xf32>, vector<8x128xf32> -> vector<8x128xf32>
    %174 = arith.addf %172, %173 : vector<8x128xf32>
    %175 = vector.extract_strided_slice %174 {offsets = [0, 0], sizes = [8, 32], strides = [1, 1]} : vector<8x128xf32> to vector<8x32xf32>
    %176 = arith.negf %175 : vector<8x32xf32>
    %177 = math.exp %176 : vector<8x32xf32>
    %cst_42 = arith.constant 1.000000e+00 : f32
    %178 = vector.broadcast %cst_42 : f32 to vector<8x32xf32>
    %179 = arith.addf %178, %177 : vector<8x32xf32>
    %180 = arith.divf %178, %179 : vector<8x32xf32>
    %181 = vector.extract_strided_slice %174 {offsets = [0, 32], sizes = [8, 32], strides = [1, 1]} : vector<8x128xf32> to vector<8x32xf32>
    %182 = arith.negf %181 : vector<8x32xf32>
    %183 = math.exp %182 : vector<8x32xf32>
    %cst_43 = arith.constant 1.000000e+00 : f32
    %184 = vector.broadcast %cst_43 : f32 to vector<8x32xf32>
    %185 = arith.addf %184, %183 : vector<8x32xf32>
    %186 = arith.divf %184, %185 : vector<8x32xf32>
    %187 = vector.extract_strided_slice %174 {offsets = [0, 64], sizes = [8, 32], strides = [1, 1]} : vector<8x128xf32> to vector<8x32xf32>
    %188 = math.tanh %187 : vector<8x32xf32>
    %189 = vector.extract_strided_slice %174 {offsets = [0, 96], sizes = [8, 32], strides = [1, 1]} : vector<8x128xf32> to vector<8x32xf32>
    %190 = arith.negf %189 : vector<8x32xf32>
    %191 = math.exp %190 : vector<8x32xf32>
    %cst_44 = arith.constant 1.000000e+00 : f32
    %192 = vector.broadcast %cst_44 : f32 to vector<8x32xf32>
    %193 = arith.addf %192, %191 : vector<8x32xf32>
    %194 = arith.divf %192, %193 : vector<8x32xf32>
    %195 = arith.mulf %186, %165 : vector<8x32xf32>
    %196 = arith.mulf %180, %188 : vector<8x32xf32>
    %197 = arith.addf %195, %196 : vector<8x32xf32>
    %198 = math.tanh %197 : vector<8x32xf32>
    %199 = arith.mulf %194, %198 : vector<8x32xf32>
    %c0_45 = arith.constant 0 : index
    %c5 = arith.constant 5 : index
    %c0_46 = arith.constant 0 : index
    %200 = vector.load %arg10[%c0_45, %c5, %c0_46] : memref<8x8x32xf32, #tpu.memory_space<vmem>>, vector<8x1x32xf32>
    %201 = vector.shape_cast %200 : vector<8x1x32xf32> to vector<8x32xf32>
    %202 = vector.shape_cast %199 : vector<8x32xf32> to vector<8x1x32xf32>
    tpu.vector_store %arg10[%c0_45, %c5, %c0_46], %202 {strides = array<i32>} : memref<8x8x32xf32, #tpu.memory_space<vmem>>, vector<8x1x32xf32>,
    %203 = vector.extract_strided_slice %8 {offsets = [0, 6, 0], sizes = [8, 1, 128], strides = [1, 1, 1]} : vector<8x8x128xf32> to vector<8x1x128xf32>
    %204 = vector.shape_cast %203 : vector<8x1x128xf32> to vector<8x128xf32>
    %cst_47 = arith.constant dense<0.000000e+00> : vector<8x128xf32>
    %205 = tpu.matmul %199, %1, %cst_47 {dimension_numbers = #tpu.dot_dimension_numbers<[1], [0], [0], [1], [0, 0, 1, 1], [], []>} : vector<8x32xf32>, vector<32x128xf32>, vector<8x128xf32> -> vector<8x128xf32>
    %206 = arith.addf %204, %205 : vector<8x128xf32>
    %207 = vector.extract_strided_slice %206 {offsets = [0, 0], sizes = [8, 32], strides = [1, 1]} : vector<8x128xf32> to vector<8x32xf32>
    %208 = arith.negf %207 : vector<8x32xf32>
    %209 = math.exp %208 : vector<8x32xf32>
    %cst_48 = arith.constant 1.000000e+00 : f32
    %210 = vector.broadcast %cst_48 : f32 to vector<8x32xf32>
    %211 = arith.addf %210, %209 : vector<8x32xf32>
    %212 = arith.divf %210, %211 : vector<8x32xf32>
    %213 = vector.extract_strided_slice %206 {offsets = [0, 32], sizes = [8, 32], strides = [1, 1]} : vector<8x128xf32> to vector<8x32xf32>
    %214 = arith.negf %213 : vector<8x32xf32>
    %215 = math.exp %214 : vector<8x32xf32>
    %cst_49 = arith.constant 1.000000e+00 : f32
    %216 = vector.broadcast %cst_49 : f32 to vector<8x32xf32>
    %217 = arith.addf %216, %215 : vector<8x32xf32>
    %218 = arith.divf %216, %217 : vector<8x32xf32>
    %219 = vector.extract_strided_slice %206 {offsets = [0, 64], sizes = [8, 32], strides = [1, 1]} : vector<8x128xf32> to vector<8x32xf32>
    %220 = math.tanh %219 : vector<8x32xf32>
    %221 = vector.extract_strided_slice %206 {offsets = [0, 96], sizes = [8, 32], strides = [1, 1]} : vector<8x128xf32> to vector<8x32xf32>
    %222 = arith.negf %221 : vector<8x32xf32>
    %223 = math.exp %222 : vector<8x32xf32>
    %cst_50 = arith.constant 1.000000e+00 : f32
    %224 = vector.broadcast %cst_50 : f32 to vector<8x32xf32>
    %225 = arith.addf %224, %223 : vector<8x32xf32>
    %226 = arith.divf %224, %225 : vector<8x32xf32>
    %227 = arith.mulf %218, %197 : vector<8x32xf32>
    %228 = arith.mulf %212, %220 : vector<8x32xf32>
    %229 = arith.addf %227, %228 : vector<8x32xf32>
    %230 = math.tanh %229 : vector<8x32xf32>
    %231 = arith.mulf %226, %230 : vector<8x32xf32>
    %c0_51 = arith.constant 0 : index
    %c6 = arith.constant 6 : index
    %c0_52 = arith.constant 0 : index
    %232 = vector.load %arg10[%c0_51, %c6, %c0_52] : memref<8x8x32xf32, #tpu.memory_space<vmem>>, vector<8x1x32xf32>
    %233 = vector.shape_cast %232 : vector<8x1x32xf32> to vector<8x32xf32>
    %234 = vector.shape_cast %231 : vector<8x32xf32> to vector<8x1x32xf32>
    tpu.vector_store %arg10[%c0_51, %c6, %c0_52], %234 {strides = array<i32>} : memref<8x8x32xf32, #tpu.memory_space<vmem>>, vector<8x1x32xf32>,
    %235 = vector.extract_strided_slice %8 {offsets = [0, 7, 0], sizes = [8, 1, 128], strides = [1, 1, 1]} : vector<8x8x128xf32> to vector<8x1x128xf32>
    %236 = vector.shape_cast %235 : vector<8x1x128xf32> to vector<8x128xf32>
    %cst_53 = arith.constant dense<0.000000e+00> : vector<8x128xf32>
    %237 = tpu.matmul %231, %1, %cst_53 {dimension_numbers = #tpu.dot_dimension_numbers<[1], [0], [0], [1], [0, 0, 1, 1], [], []>} : vector<8x32xf32>, vector<32x128xf32>, vector<8x128xf32> -> vector<8x128xf32>
    %238 = arith.addf %236, %237 : vector<8x128xf32>
    %239 = vector.extract_strided_slice %238 {offsets = [0, 0], sizes = [8, 32], strides = [1, 1]} : vector<8x128xf32> to vector<8x32xf32>
    %240 = arith.negf %239 : vector<8x32xf32>
    %241 = math.exp %240 : vector<8x32xf32>
    %cst_54 = arith.constant 1.000000e+00 : f32
    %242 = vector.broadcast %cst_54 : f32 to vector<8x32xf32>
    %243 = arith.addf %242, %241 : vector<8x32xf32>
    %244 = arith.divf %242, %243 : vector<8x32xf32>
    %245 = vector.extract_strided_slice %238 {offsets = [0, 32], sizes = [8, 32], strides = [1, 1]} : vector<8x128xf32> to vector<8x32xf32>
    %246 = arith.negf %245 : vector<8x32xf32>
    %247 = math.exp %246 : vector<8x32xf32>
    %cst_55 = arith.constant 1.000000e+00 : f32
    %248 = vector.broadcast %cst_55 : f32 to vector<8x32xf32>
    %249 = arith.addf %248, %247 : vector<8x32xf32>
    %250 = arith.divf %248, %249 : vector<8x32xf32>
    %251 = vector.extract_strided_slice %238 {offsets = [0, 64], sizes = [8, 32], strides = [1, 1]} : vector<8x128xf32> to vector<8x32xf32>
    %252 = math.tanh %251 : vector<8x32xf32>
    %253 = vector.extract_strided_slice %238 {offsets = [0, 96], sizes = [8, 32], strides = [1, 1]} : vector<8x128xf32> to vector<8x32xf32>
    %254 = arith.negf %253 : vector<8x32xf32>
    %255 = math.exp %254 : vector<8x32xf32>
    %cst_56 = arith.constant 1.000000e+00 : f32
    %256 = vector.broadcast %cst_56 : f32 to vector<8x32xf32>
    %257 = arith.addf %256, %255 : vector<8x32xf32>
    %258 = arith.divf %256, %257 : vector<8x32xf32>
    %259 = arith.mulf %250, %229 : vector<8x32xf32>
    %260 = arith.mulf %244, %252 : vector<8x32xf32>
    %261 = arith.addf %259, %260 : vector<8x32xf32>
    %262 = math.tanh %261 : vector<8x32xf32>
    %263 = arith.mulf %258, %262 : vector<8x32xf32>
    %c0_57 = arith.constant 0 : index
    %c7 = arith.constant 7 : index
    %c0_58 = arith.constant 0 : index
    %264 = vector.load %arg10[%c0_57, %c7, %c0_58] : memref<8x8x32xf32, #tpu.memory_space<vmem>>, vector<8x1x32xf32>
    %265 = vector.shape_cast %264 : vector<8x1x32xf32> to vector<8x32xf32>
    %266 = vector.shape_cast %263 : vector<8x32xf32> to vector<8x1x32xf32>
    tpu.vector_store %arg10[%c0_57, %c7, %c0_58], %266 {strides = array<i32>} : memref<8x8x32xf32, #tpu.memory_space<vmem>>, vector<8x1x32xf32>,
    %c0_59 = arith.constant 0 : index
    %c0_60 = arith.constant 0 : index
    %c0_61 = arith.constant 0 : index
    %267 = vector.load %arg10[%c0_59, %c0_60, %c0_61] : memref<8x8x32xf32, #tpu.memory_space<vmem>>, vector<8x8x32xf32>
    %268 = vector.shape_cast %267 : vector<8x8x32xf32> to vector<64x32xf32>
    %c0_62 = arith.constant 0 : index
    %c0_63 = arith.constant 0 : index
    %269 = vector.load %arg5[%c0_62, %c0_63] : memref<32x32xf32, #tpu.memory_space<vmem>>, vector<32x32xf32>
    %cst_64 = arith.constant dense<0.000000e+00> : vector<64x32xf32>
    %270 = tpu.matmul %268, %269, %cst_64 {dimension_numbers = #tpu.dot_dimension_numbers<[1], [0], [0], [1], [0, 0, 1, 1], [], []>} : vector<64x32xf32>, vector<32x32xf32>, vector<64x32xf32> -> vector<64x32xf32>
    %c0_65 = arith.constant 0 : index
    %c0_66 = arith.constant 0 : index
    %271 = vector.load %arg6[%c0_65, %c0_66] : memref<1x32xf32, #tpu.memory_space<vmem>>, vector<1x32xf32>
    %272 = vector.broadcast %271 : vector<1x32xf32> to vector<64x32xf32>
    %273 = arith.addf %270, %272 : vector<64x32xf32>
    %274 = vector.shape_cast %273 : vector<64x32xf32> to vector<8x8x32xf32>
    %275 = arith.addf %0, %274 : vector<8x8x32xf32>
    %c0_67 = arith.constant 0 : index
    %c0_68 = arith.constant 0 : index
    %c0_69 = arith.constant 0 : index
    %276 = vector.load %arg7[%c0_67, %c0_68, %c0_69] : memref<8x8x32xf32, #tpu.memory_space<vmem>>, vector<8x8x32xf32>
    tpu.vector_store %arg7[%c0_67, %c0_68, %c0_69], %275 {strides = array<i32>} : memref<8x8x32xf32, #tpu.memory_space<vmem>>, vector<8x8x32xf32>,
    %c0_70 = arith.constant 0 : index
    %c0_71 = arith.constant 0 : index
    %277 = vector.load %arg8[%c0_70, %c0_71] : memref<8x32xf32, #tpu.memory_space<vmem>>, vector<8x32xf32>
    tpu.vector_store %arg8[%c0_70, %c0_71], %263 {strides = array<i32>} : memref<8x32xf32, #tpu.memory_space<vmem>>, vector<8x32xf32>,
    %c0_72 = arith.constant 0 : index
    %c0_73 = arith.constant 0 : index
    %278 = vector.load %arg9[%c0_72, %c0_73] : memref<8x32xf32, #tpu.memory_space<vmem>>, vector<8x32xf32>
    tpu.vector_store %arg9[%c0_72, %c0_73], %261 {strides = array<i32>} : memref<8x32xf32, #tpu.memory_space<vmem>>, vector<8x32xf32>,
    return
  }
  func.func @transform_0(%arg0: i32) -> (i32, i32, i32) {
    %c0_i32 = arith.constant 0 : i32
    %c0_i32_0 = arith.constant 0 : i32
    %c0_i32_1 = arith.constant 0 : i32
    %c0_i32_2 = arith.constant 0 : i32
    return %c0_i32, %c0_i32_0, %c0_i32_1 : i32, i32, i32
  }
  func.func @transform_1(%arg0: i32) -> (i32, i32) {
    %c0_i32 = arith.constant 0 : i32
    %c0_i32_0 = arith.constant 0 : i32
    %c0_i32_1 = arith.constant 0 : i32
    return %c0_i32, %c0_i32_0 : i32, i32
  }
  func.func @transform_2(%arg0: i32) -> (i32, i32) {
    %c0_i32 = arith.constant 0 : i32
    %c0_i32_0 = arith.constant 0 : i32
    %c0_i32_1 = arith.constant 0 : i32
    return %c0_i32, %c0_i32_0 : i32, i32
  }
  func.func @transform_3(%arg0: i32) -> (i32, i32) {
    %c0_i32 = arith.constant 0 : i32
    %c0_i32_0 = arith.constant 0 : i32
    %c0_i32_1 = arith.constant 0 : i32
    return %c0_i32, %c0_i32_0 : i32, i32
  }
  func.func @transform_4(%arg0: i32) -> (i32, i32) {
    %c0_i32 = arith.constant 0 : i32
    %c0_i32_0 = arith.constant 0 : i32
    %c0_i32_1 = arith.constant 0 : i32
    return %c0_i32, %c0_i32_0 : i32, i32
  }
  func.func @transform_5(%arg0: i32) -> (i32, i32) {
    %c0_i32 = arith.constant 0 : i32
    %c0_i32_0 = arith.constant 0 : i32
    %c0_i32_1 = arith.constant 0 : i32
    return %c0_i32, %c0_i32_0 : i32, i32
  }
  func.func @transform_6(%arg0: i32) -> (i32, i32, i32) {
    %c0_i32 = arith.constant 0 : i32
    %c0_i32_0 = arith.constant 0 : i32
    %c0_i32_1 = arith.constant 0 : i32
    %c0_i32_2 = arith.constant 0 : i32
    return %c0_i32, %c0_i32_0, %c0_i32_1 : i32, i32, i32
  }
  func.func @transform_7(%arg0: i32) -> (i32, i32) {
    %c0_i32 = arith.constant 0 : i32
    %c0_i32_0 = arith.constant 0 : i32
    %c0_i32_1 = arith.constant 0 : i32
    return %c0_i32, %c0_i32_0 : i32, i32
  }
  func.func @transform_8(%arg0: i32) -> (i32, i32) {
    %c0_i32 = arith.constant 0 : i32
    %c0_i32_0 = arith.constant 0 : i32
    %c0_i32_1 = arith.constant 0 : i32
    return %c0_i32, %c0_i32_0 : i32, i32
  }
}

</mosaic_0001>

<llo_original>
// kernel: residual_lstm_forward.1
$region0: #{residual_lstm_forward.1}
  #allocation0 [shape = 'u32[]', space=smem, size = 0x4, offset = 0x4, fixed_abs, tag = 'smem constant byte address 0x4 - core index']
  #allocation1 [shape = 'u32[144,128]{1,0:T(1,128)}', space=vmem, size = 0x12000, scoped, tag = 'internal scratch']
  #allocation2 [shape = 'f32[8,8,32]{2,1,0:T(8,128)}', space=vmem, size = 0x8000, scoped, tag = 'scratch operand']
  %s0 = inlined_call_operand.vmem [shape: f32[8,8,32], index: 0, kind: input, shape index: {}]
  %s1 = inlined_call_operand.vmem [shape: f32[32,128], index: 1, kind: input, shape index: {}]
  %s2 = inlined_call_operand.vmem [shape: f32[32,128], index: 2, kind: input, shape index: {}]
  %s3 = inlined_call_operand.vmem [shape: f32[1,128], index: 3, kind: input, shape index: {}]
  %s4 = inlined_call_operand.vmem [shape: f32[32,32], index: 4, kind: input, shape index: {}]
  %s5 = inlined_call_operand.vmem [shape: f32[1,32], index: 5, kind: input, shape index: {}]
  %s6 = inlined_call_operand.vmem [shape: f32[8,8,32], index: 6, kind: output, shape index: {0}]
  %s7 = inlined_call_operand.vmem [shape: f32[8,32], index: 7, kind: output, shape index: {1}]
  %s8 = inlined_call_operand.vmem [shape: f32[8,32], index: 8, kind: output, shape index: {2}]
  %9 = xla_tuple %s6, %s7, %s8
  %s10 = sld [smem:[#allocation0]]
  $region50: #{residual_lstm_forward.1} parent=0
    _
  %s12 = ssub.s32 1, %s10
  %s13 = scalar_select 0, %s12, %s10
  // Predicated region
  $region2: #{residual_lstm_forward.1} parent=0 // pred_check
    _
  $region3: #{residual_lstm_forward.1} parent=0 // pred_check_branch
    %15 = sbr.rel (0) target = $region5
  $region4: #{residual_lstm_forward.1} parent=0 // pred_region
    _
  $region5: #{residual_lstm_forward.1} parent=0 // pred_fallthru
    _
  // Predicated region
  $region6: #{residual_lstm_forward.1} parent=0 // pred_check
    _
  $region7: #{residual_lstm_forward.1} parent=0 // pred_check_branch
    %17 = sbr.rel (0) target = $region9
  $region8: #{residual_lstm_forward.1} parent=0 // pred_region
    _
  $region9: #{residual_lstm_forward.1} parent=0 // pred_fallthru
    _
  // Predicated region
  $region10: #{residual_lstm_forward.1} parent=0 // pred_check
    _
  $region11: #{residual_lstm_forward.1} parent=0 // pred_check_branch
    %19 = sbr.rel (0) target = $region13
  $region12: #{residual_lstm_forward.1} parent=0 // pred_region
    _
  $region13: #{residual_lstm_forward.1} parent=0 // pred_fallthru
    _
  // Predicated region
  $region14: #{residual_lstm_forward.1} parent=0 // pred_check
    _
  $region15: #{residual_lstm_forward.1} parent=0 // pred_check_branch
    %21 = sbr.rel (0) target = $region17
  $region16: #{residual_lstm_forward.1} parent=0 // pred_region
    _
  $region17: #{residual_lstm_forward.1} parent=0 // pred_fallthru
    _
  // Predicated region
  $region18: #{residual_lstm_forward.1} parent=0 // pred_check
    _
  $region19: #{residual_lstm_forward.1} parent=0 // pred_check_branch
    %23 = sbr.rel (0) target = $region21
  $region20: #{residual_lstm_forward.1} parent=0 // pred_region
    _
  $region21: #{residual_lstm_forward.1} parent=0 // pred_fallthru
    _
  // Predicated region
  $region22: #{residual_lstm_forward.1} parent=0 // pred_check
    _
  $region23: #{residual_lstm_forward.1} parent=0 // pred_check_branch
    %25 = sbr.rel (0) target = $region25
  $region24: #{residual_lstm_forward.1} parent=0 // pred_region
    _
  $region25: #{residual_lstm_forward.1} parent=0 // pred_fallthru
    _
  %v26 = vld [vmem:[%s0] sm:$0xff]
  %v27 = vld [vmem:[%s0 + $0x8] sm:$0xff]
  %v28 = vld [vmem:[%s0 + $0x10] sm:$0xff]
  %v29 = vld [vmem:[%s0 + $0x18] sm:$0xff]
  %v30 = vld [vmem:[%s0 + $0x20] sm:$0xff]
  %v31 = vld [vmem:[%s0 + $0x28] sm:$0xff]
  %v32 = vld [vmem:[%s0 + $0x30] sm:$0xff]
  %v33 = vld [vmem:[%s0 + $0x38] sm:$0xff]
  %v34 = vld [vmem:[%s2] sm:$0xff]
  %v35 = vld [vmem:[%s2 + $0x8] sm:$0xff]
  %v36 = vld [vmem:[%s2 + $0x10] sm:$0xff]
  %v37 = vld [vmem:[%s2 + $0x18] sm:$0xff]
  %v38 = vld [vmem:[%s1] sm:$0xff]
  %v39 = vld [vmem:[%s1 + $0x8] sm:$0xff]
  %v40 = vld [vmem:[%s1 + $0x10] sm:$0xff]
  %v41 = vld [vmem:[%s1 + $0x18] sm:$0xff]
  %v42 = vld [vmem:[%s3] sm:$0x1]
  %v44 = vlaneseq
  %v45 = vshrl.u32 %v44, 7
  %v46 = vsub.s32 0, %v45
  %v47 = vrot.slane %v42, %v46
  %vm49 = vcmask 261120
  %v51 = vsel %vm49, %v26, 0
  %v54 = vsel %vm49, %v27, 0
  %v57 = vsel %vm49, %v28, 0
  %v60 = vsel %vm49, %v29, 0
  %v63 = vsel %vm49, %v30, 0
  %v66 = vsel %vm49, %v31, 0
  %v69 = vsel %vm49, %v32, 0
  %v72 = vsel %vm49, %v33, 0
  %74 = vmatprep.subr.mxu0 0.0
  %75 = vmatpush1.msra.mxu0 %v38
  %76 = vmatprep.subr.mxu0 0.0
  %77 = vmatpush1.msra.mxu0 %v39
  %78 = vmatprep.subr.mxu0 0.0
  %79 = vmatpush1.msra.mxu0 %v40
  %80 = vmatprep.subr.mxu0 0.0
  %81 = vmatpush1.msra.mxu0 %v41
  %82 = vmatprep.subr.mxu0 0.0
  %83 = vmatpush1.msra.mxu0 0.0
  %84 = vmatprep.subr.mxu0 0.0
  %85 = vmatpush1.msra.mxu0 0.0
  %86 = vmatprep.subr.mxu0 0.0
  %87 = vmatpush1.msra.mxu0 0.0
  %88 = vmatprep.subr.mxu0 0.0
  %89 = vmatpush1.msra.mxu0 0.0
  %90 = vmatprep.subr.mxu0 0.0
  %91 = vmatpush1.msra.mxu0 0.0
  %92 = vmatprep.subr.mxu0 0.0
  %93 = vmatpush1.msra.mxu0 0.0
  %94 = vmatprep.subr.mxu0 0.0
  %95 = vmatpush1.msra.mxu0 0.0
  %96 = vmatprep.subr.mxu0 0.0
  %97 = vmatpush1.msra.mxu0 0.0
  %98 = vmatprep.subr.mxu0 0.0
  %99 = vmatpush1.msra.mxu0 0.0
  %100 = vmatprep.subr.mxu0 0.0
  %101 = vmatpush1.msra.mxu0 0.0
  %102 = vmatprep.subr.mxu0 0.0
  %103 = vmatpush1.msra.mxu0 0.0
  %104 = vmatprep.subr.mxu0 0.0
  %105 = vmatpush1.msra.mxu0 0.0
  %106 = vmatprep.subr.mxu0 0.0
  %107 = vmatpush1.msra.mxu0 0.0
  %108 = vmatprep.subr.mxu0 0.0
  %109 = vmatpush1.msra.mxu0 0.0
  %110 = vmatprep.subr.mxu0 0.0
  %111 = vmatpush1.msra.mxu0 0.0
  %112 = vmatprep.subr.mxu0 0.0
  %113 = vmatpush1.msra.mxu0 0.0
  %114 = vmatprep.subr.mxu0 0.0
  %115 = vmatpush1.msra.mxu0 0.0
  %116 = vmatprep.subr.mxu0 0.0
  %117 = vmatpush1.msra.mxu0 0.0
  %118 = vmatprep.subr.mxu0 0.0
  %119 = vmatpush1.msra.mxu0 0.0
  %120 = vmatprep.subr.mxu0 0.0
  %121 = vmatpush1.msra.mxu0 0.0
  %122 = vmatprep.subr.mxu0 0.0
  %123 = vmatpush1.msra.mxu0 0.0
  %124 = vmatprep.subr.mxu0 0.0
  %125 = vmatpush1.msra.mxu0 0.0
  %126 = vmatprep.subr.mxu0 0.0
  %127 = vmatpush1.msra.mxu0 0.0
  %128 = vmatprep.subr.mxu0 0.0
  %129 = vmatpush1.msra.mxu0 0.0
  %130 = vmatprep.subr.mxu0 0.0
  %131 = vmatpush1.msra.mxu0 0.0
  %132 = vmatprep.subr.mxu0 0.0
  %133 = vmatpush1.msra.mxu0 0.0
  %134 = vmatprep.subr.mxu0 0.0
  %135 = vmatpush1.msra.mxu0 0.0
  %136 = vmatprep.subr.mxu0 0.0
  %137 = vmatpush1.msra.mxu0 0.0
  %138 = vmatprep.mubr.f32.mxu0 0.0
  %139 = vmatmul.mubr.f32.gmra.mrb[0].mxu0 %v51
  %v140 = vpop.f32.mrb[0].mxu0
  %v141 = vadd.f32 %v47, %v140
  %v142 = vpop.f32.mrb[0].mxu0
  %143 = vmatprep.mubr.f32.mxu0 0.0
  %144 = vmatmul.mubr.f32.gmra.mrb[0].mxu0 %v54
  %v145 = vpop.f32.mrb[0].mxu0
  %v146 = vadd.f32 %v47, %v145
  %v147 = vpop.f32.mrb[0].mxu0
  %148 = vmatprep.mubr.f32.mxu0 0.0
  %149 = vmatmul.mubr.f32.gmra.mrb[0].mxu0 %v57
  %v150 = vpop.f32.mrb[0].mxu0
  %v151 = vadd.f32 %v47, %v150
  %v152 = vpop.f32.mrb[0].mxu0
  %153 = vmatprep.mubr.f32.mxu0 0.0
  %154 = vmatmul.mubr.f32.gmra.mrb[0].mxu0 %v60
  %v155 = vpop.f32.mrb[0].mxu0
  %v156 = vadd.f32 %v47, %v155
  %v157 = vpop.f32.mrb[0].mxu0
  %158 = vmatprep.mubr.f32.mxu0 0.0
  %159 = vmatmul.mubr.f32.gmra.mrb[0].mxu0 %v63
  %v160 = vpop.f32.mrb[0].mxu0
  %v161 = vadd.f32 %v47, %v160
  %v162 = vpop.f32.mrb[0].mxu0
  %163 = vmatprep.mubr.f32.mxu0 0.0
  %164 = vmatmul.mubr.f32.gmra.mrb[0].mxu0 %v66
  %v165 = vpop.f32.mrb[0].mxu0
  %v166 = vadd.f32 %v47, %v165
  %v167 = vpop.f32.mrb[0].mxu0
  %168 = vmatprep.mubr.f32.mxu0 0.0
  %169 = vmatmul.mubr.f32.gmra.mrb[0].mxu0 %v69
  %v170 = vpop.f32.mrb[0].mxu0
  %v171 = vadd.f32 %v47, %v170
  %v172 = vpop.f32.mrb[0].mxu0
  %173 = vmatprep.mubr.f32.mxu0 0.0
  %174 = vmatmul.mubr.f32.gmra.mrb[0].mxu0 %v72
  %v175 = vpop.f32.mrb[0].mxu0
  %v176 = vadd.f32 %v47, %v175
  %v177 = vpop.f32.mrb[0].mxu0
  %178 = vdwg.mxu0
  %v180 = vsel %vm49, 0.0, 0
  %182 = vmatprep.subr.mxu0 0.0
  %183 = vmatpush1.msra.mxu0 %v34
  %184 = vmatprep.subr.mxu0 0.0
  %185 = vmatpush1.msra.mxu0 %v35
  %186 = vmatprep.subr.mxu0 0.0
  %187 = vmatpush1.msra.mxu0 %v36
  %188 = vmatprep.subr.mxu0 0.0
  %189 = vmatpush1.msra.mxu0 %v37
  %190 = vmatprep.subr.mxu0 0.0
  %191 = vmatpush1.msra.mxu0 0.0
  %192 = vmatprep.subr.mxu0 0.0
  %193 = vmatpush1.msra.mxu0 0.0
  %194 = vmatprep.subr.mxu0 0.0
  %195 = vmatpush1.msra.mxu0 0.0
  %196 = vmatprep.subr.mxu0 0.0
  %197 = vmatpush1.msra.mxu0 0.0
  %198 = vmatprep.subr.mxu0 0.0
  %199 = vmatpush1.msra.mxu0 0.0
  %200 = vmatprep.subr.mxu0 0.0
  %201 = vmatpush1.msra.mxu0 0.0
  %202 = vmatprep.subr.mxu0 0.0
  %203 = vmatpush1.msra.mxu0 0.0
  %204 = vmatprep.subr.mxu0 0.0
  %205 = vmatpush1.msra.mxu0 0.0
  %206 = vmatprep.subr.mxu0 0.0
  %207 = vmatpush1.msra.mxu0 0.0
  %208 = vmatprep.subr.mxu0 0.0
  %209 = vmatpush1.msra.mxu0 0.0
  %210 = vmatprep.subr.mxu0 0.0
  %211 = vmatpush1.msra.mxu0 0.0
  %212 = vmatprep.subr.mxu0 0.0
  %213 = vmatpush1.msra.mxu0 0.0
  %214 = vmatprep.subr.mxu0 0.0
  %215 = vmatpush1.msra.mxu0 0.0
  %216 = vmatprep.subr.mxu0 0.0
  %217 = vmatpush1.msra.mxu0 0.0
  %218 = vmatprep.subr.mxu0 0.0
  %219 = vmatpush1.msra.mxu0 0.0
  %220 = vmatprep.subr.mxu0 0.0
  %221 = vmatpush1.msra.mxu0 0.0
  %222 = vmatprep.subr.mxu0 0.0
  %223 = vmatpush1.msra.mxu0 0.0
  %224 = vmatprep.subr.mxu0 0.0
  %225 = vmatpush1.msra.mxu0 0.0
  %226 = vmatprep.subr.mxu0 0.0
  %227 = vmatpush1.msra.mxu0 0.0
  %228 = vmatprep.subr.mxu0 0.0
  %229 = vmatpush1.msra.mxu0 0.0
  %230 = vmatprep.subr.mxu0 0.0
  %231 = vmatpush1.msra.mxu0 0.0
  %232 = vmatprep.subr.mxu0 0.0
  %233 = vmatpush1.msra.mxu0 0.0
  %234 = vmatprep.subr.mxu0 0.0
  %235 = vmatpush1.msra.mxu0 0.0
  %236 = vmatprep.subr.mxu0 0.0
  %237 = vmatpush1.msra.mxu0 0.0
  %238 = vmatprep.subr.mxu0 0.0
  %239 = vmatpush1.msra.mxu0 0.0
  %240 = vmatprep.subr.mxu0 0.0
  %241 = vmatpush1.msra.mxu0 0.0
  %242 = vmatprep.subr.mxu0 0.0
  %243 = vmatpush1.msra.mxu0 0.0
  %244 = vmatprep.subr.mxu0 0.0
  %245 = vmatpush1.msra.mxu0 0.0
  %246 = vmatprep.mubr.f32.mxu0 0.0
  %247 = vmatmul.mubr.f32.gmra.mrb[0].mxu0 %v180
  %v248 = vpop.f32.mrb[0].mxu0
  %v249 = vadd.f32 0.0, %v248
  %v250 = vpop.f32.mrb[0].mxu0
  %251 = vdwg.mxu0
  %v253 = vrot.slane %v249, 1
  %v254 = vrot.slane %v249, 2
  %v255 = vrot.slane %v249, 3
  %v256 = vrot.slane %v249, 4
  %v257 = vrot.slane %v249, 5
  %v258 = vrot.slane %v249, 6
  %v259 = vrot.slane %v249, 7
  %v268 = vadd.f32 %v141, %v249
  %v269 = vadd.f32 %v146, %v253
  %v270 = vadd.f32 %v151, %v254
  %v271 = vadd.f32 %v156, %v255
  %v272 = vadd.f32 %v161, %v256
  %v273 = vadd.f32 %v166, %v257
  %v274 = vadd.f32 %v171, %v258
  %v275 = vadd.f32 %v176, %v259
  %v276 = vxor.u32 %v268, 2147483648
  %v277 = vxor.u32 %v269, 2147483648
  %v278 = vxor.u32 %v270, 2147483648
  %v279 = vxor.u32 %v271, 2147483648
  %v280 = vxor.u32 %v272, 2147483648
  %v281 = vxor.u32 %v273, 2147483648
  %v282 = vxor.u32 %v274, 2147483648
  %v283 = vxor.u32 %v275, 2147483648
  %v284 = vmul.f32 %v276, 1.442695
  %v285 = vpow.pop %v284
  %v286 = vmul.f32 %v277, 1.442695
  %v287 = vpow.pop %v286
  %v288 = vmul.f32 %v278, 1.442695
  %v289 = vpow.pop %v288
  %v290 = vmul.f32 %v279, 1.442695
  %v291 = vpow.pop %v290
  %v292 = vmul.f32 %v280, 1.442695
  %v293 = vpow.pop %v292
  %v294 = vmul.f32 %v281, 1.442695
  %v295 = vpow.pop %v294
  %v296 = vmul.f32 %v282, 1.442695
  %v297 = vpow.pop %v296
  %v298 = vmul.f32 %v283, 1.442695
  %v299 = vpow.pop %v298
  %v300 = vadd.f32 %v285, 1.0
  %v301 = vadd.f32 %v287, 1.0
  %v302 = vadd.f32 %v289, 1.0
  %v303 = vadd.f32 %v291, 1.0
  %v304 = vadd.f32 %v293, 1.0
  %v305 = vadd.f32 %v295, 1.0
  %v306 = vadd.f32 %v297, 1.0
  %v307 = vadd.f32 %v299, 1.0
  %v308 = vrcp.pop %v300
  %v309 = vmul.f32 1.0, %v308
  %v310 = vrcp.pop %v301
  %v311 = vmul.f32 1.0, %v310
  %v312 = vrcp.pop %v302
  %v313 = vmul.f32 1.0, %v312
  %v314 = vrcp.pop %v303
  %v315 = vmul.f32 1.0, %v314
  %v316 = vrcp.pop %v304
  %v317 = vmul.f32 1.0, %v316
  %v318 = vrcp.pop %v305
  %v319 = vmul.f32 1.0, %v318
  %v320 = vrcp.pop %v306
  %v321 = vmul.f32 1.0, %v320
  %v322 = vrcp.pop %v307
  %v323 = vmul.f32 1.0, %v322
  %v324 = vtanh.pop %v268
  %v325 = vtanh.pop %v269
  %v326 = vtanh.pop %v270
  %v327 = vtanh.pop %v271
  %v328 = vtanh.pop %v272
  %v329 = vtanh.pop %v273
  %v330 = vtanh.pop %v274
  %v331 = vtanh.pop %v275
  %v332 = vmul.f32 %v309, 0.0
  %v333 = vmul.f32 %v311, 0.0
  %v334 = vmul.f32 %v313, 0.0
  %v335 = vmul.f32 %v315, 0.0
  %v336 = vmul.f32 %v317, 0.0
  %v337 = vmul.f32 %v319, 0.0
  %v338 = vmul.f32 %v321, 0.0
  %v339 = vmul.f32 %v323, 0.0
  %348 = vrot.lane.b32.xlu0 %v324, 64
  %v349 = vpop.permute.xlu0 %348
  %350 = vrot.lane.b32.xlu0 %v325, 64
  %v351 = vpop.permute.xlu0 %350
  %352 = vrot.lane.b32.xlu0 %v326, 64
  %v353 = vpop.permute.xlu0 %352
  %354 = vrot.lane.b32.xlu0 %v327, 64
  %v355 = vpop.permute.xlu0 %354
  %356 = vrot.lane.b32.xlu0 %v328, 64
  %v357 = vpop.permute.xlu0 %356
  %358 = vrot.lane.b32.xlu0 %v329, 64
  %v359 = vpop.permute.xlu0 %358
  %360 = vrot.lane.b32.xlu0 %v330, 64
  %v361 = vpop.permute.xlu0 %360
  %362 = vrot.lane.b32.xlu0 %v331, 64
  %v363 = vpop.permute.xlu0 %362
  %v372 = vmul.f32 %v309, %v349
  %v373 = vmul.f32 %v311, %v351
  %v374 = vmul.f32 %v313, %v353
  %v375 = vmul.f32 %v315, %v355
  %v376 = vmul.f32 %v317, %v357
  %v377 = vmul.f32 %v319, %v359
  %v378 = vmul.f32 %v321, %v361
  %v379 = vmul.f32 %v323, %v363
  %388 = vrot.lane.b32.xlu0 %v372, 32
  %v389 = vpop.permute.xlu0 %388
  %390 = vrot.lane.b32.xlu0 %v373, 32
  %v391 = vpop.permute.xlu0 %390
  %392 = vrot.lane.b32.xlu0 %v374, 32
  %v393 = vpop.permute.xlu0 %392
  %394 = vrot.lane.b32.xlu0 %v375, 32
  %v395 = vpop.permute.xlu0 %394
  %396 = vrot.lane.b32.xlu0 %v376, 32
  %v397 = vpop.permute.xlu0 %396
  %398 = vrot.lane.b32.xlu0 %v377, 32
  %v399 = vpop.permute.xlu0 %398
  %400 = vrot.lane.b32.xlu0 %v378, 32
  %v401 = vpop.permute.xlu0 %400
  %402 = vrot.lane.b32.xlu0 %v379, 32
  %v403 = vpop.permute.xlu0 %402
  %v412 = vadd.f32 %v332, %v389
  %v413 = vadd.f32 %v333, %v391
  %v414 = vadd.f32 %v334, %v393
  %v415 = vadd.f32 %v335, %v395
  %v416 = vadd.f32 %v336, %v397
  %v417 = vadd.f32 %v337, %v399
  %v418 = vadd.f32 %v338, %v401
  %v419 = vadd.f32 %v339, %v403
  %v420 = vtanh.pop %v412
  %v421 = vtanh.pop %v413
  %v422 = vtanh.pop %v414
  %v423 = vtanh.pop %v415
  %v424 = vtanh.pop %v416
  %v425 = vtanh.pop %v417
  %v426 = vtanh.pop %v418
  %v427 = vtanh.pop %v419
  %436 = vrot.lane.b32.xlu0 %v420, 64
  %v437 = vpop.permute.xlu0 %436
  %438 = vrot.lane.b32.xlu0 %v421, 64
  %v439 = vpop.permute.xlu0 %438
  %440 = vrot.lane.b32.xlu0 %v422, 64
  %v441 = vpop.permute.xlu0 %440
  %442 = vrot.lane.b32.xlu0 %v423, 64
  %v443 = vpop.permute.xlu0 %442
  %444 = vrot.lane.b32.xlu0 %v424, 64
  %v445 = vpop.permute.xlu0 %444
  %446 = vrot.lane.b32.xlu0 %v425, 64
  %v447 = vpop.permute.xlu0 %446
  %448 = vrot.lane.b32.xlu0 %v426, 64
  %v449 = vpop.permute.xlu0 %448
  %450 = vrot.lane.b32.xlu0 %v427, 64
  %v451 = vpop.permute.xlu0 %450
  %v460 = vmul.f32 %v309, %v437
  %v461 = vmul.f32 %v311, %v439
  %v462 = vmul.f32 %v313, %v441
  %v463 = vmul.f32 %v315, %v443
  %v464 = vmul.f32 %v317, %v445
  %v465 = vmul.f32 %v319, %v447
  %v466 = vmul.f32 %v321, %v449
  %v467 = vmul.f32 %v323, %v451
  %476 = vrot.lane.b32.xlu0 %v460, 32
  %v477 = vpop.permute.xlu0 %476
  %478 = vrot.lane.b32.xlu0 %v461, 32
  %v479 = vpop.permute.xlu0 %478
  %480 = vrot.lane.b32.xlu0 %v462, 32
  %v481 = vpop.permute.xlu0 %480
  %482 = vrot.lane.b32.xlu0 %v463, 32
  %v483 = vpop.permute.xlu0 %482
  %484 = vrot.lane.b32.xlu0 %v464, 32
  %v485 = vpop.permute.xlu0 %484
  %486 = vrot.lane.b32.xlu0 %v465, 32
  %v487 = vpop.permute.xlu0 %486
  %488 = vrot.lane.b32.xlu0 %v466, 32
  %v489 = vpop.permute.xlu0 %488
  %490 = vrot.lane.b32.xlu0 %v467, 32
  %v491 = vpop.permute.xlu0 %490
  %vm500 = vcmask 253952
  %501 = vst.msk [vmem:[#allocation2] sm:$0x1] %vm500, %v477
  %502 = vst.msk [vmem:[#allocation2 + $0x8] sm:$0x1] %vm500, %v479
  %503 = vst.msk [vmem:[#allocation2 + $0x10] sm:$0x1] %vm500, %v481
  %504 = vst.msk [vmem:[#allocation2 + $0x18] sm:$0x1] %vm500, %v483
  %505 = vst.msk [vmem:[#allocation2 + $0x20] sm:$0x1] %vm500, %v485
  %506 = vst.msk [vmem:[#allocation2 + $0x28] sm:$0x1] %vm500, %v487
  %507 = vst.msk [vmem:[#allocation2 + $0x30] sm:$0x1] %vm500, %v489
  %508 = vst.msk [vmem:[#allocation2 + $0x38] sm:$0x1] %vm500, %v491
  %v509 = vrot.slane %v461, 7
  %vm510 = vcmask 1041409
  %v511 = vsel %vm510, %v509, %v460
  %v512 = vrot.slane %v462, 6
  %vm513 = vcmask 1042434
  %v514 = vsel %vm513, %v512, %v511
  %v515 = vrot.slane %v463, 5
  %vm516 = vcmask 1043459
  %v517 = vsel %vm516, %v515, %v514
  %v518 = vrot.slane %v464, 4
  %vm519 = vcmask 1044484
  %v520 = vsel %vm519, %v518, %v517
  %v521 = vrot.slane %v465, 3
  %vm522 = vcmask 1045509
  %v523 = vsel %vm522, %v521, %v520
  %v524 = vrot.slane %v466, 2
  %vm525 = vcmask 1046534
  %v526 = vsel %vm525, %v524, %v523
  %v527 = vrot.slane %v467, 1
  %vm528 = vcmask 1047559
  %v529 = vsel %vm528, %v527, %v526
  %530 = vrot.lane.b32.xlu0 %v529, 32
  %v531 = vpop.permute.xlu0 %530
  %v532 = vsel %vm49, %v531, 0
  %534 = vmatprep.subr.mxu0 0.0
  %535 = vmatpush1.msra.mxu0 %v34
  %536 = vmatprep.subr.mxu0 0.0
  %537 = vmatpush1.msra.mxu0 %v35
  %538 = vmatprep.subr.mxu0 0.0
  %539 = vmatpush1.msra.mxu0 %v36
  %540 = vmatprep.subr.mxu0 0.0
  %541 = vmatpush1.msra.mxu0 %v37
  %542 = vmatprep.subr.mxu0 0.0
  %543 = vmatpush1.msra.mxu0 0.0
  %544 = vmatprep.subr.mxu0 0.0
  %545 = vmatpush1.msra.mxu0 0.0
  %546 = vmatprep.subr.mxu0 0.0
  %547 = vmatpush1.msra.mxu0 0.0
  %548 = vmatprep.subr.mxu0 0.0
  %549 = vmatpush1.msra.mxu0 0.0
  %550 = vmatprep.subr.mxu0 0.0
  %551 = vmatpush1.msra.mxu0 0.0
  %552 = vmatprep.subr.mxu0 0.0
  %553 = vmatpush1.msra.mxu0 0.0
  %554 = vmatprep.subr.mxu0 0.0
  %555 = vmatpush1.msra.mxu0 0.0
  %556 = vmatprep.subr.mxu0 0.0
  %557 = vmatpush1.msra.mxu0 0.0
  %558 = vmatprep.subr.mxu0 0.0
  %559 = vmatpush1.msra.mxu0 0.0
  %560 = vmatprep.subr.mxu0 0.0
  %561 = vmatpush1.msra.mxu0 0.0
  %562 = vmatprep.subr.mxu0 0.0
  %563 = vmatpush1.msra.mxu0 0.0
  %564 = vmatprep.subr.mxu0 0.0
  %565 = vmatpush1.msra.mxu0 0.0
  %566 = vmatprep.subr.mxu0 0.0
  %567 = vmatpush1.msra.mxu0 0.0
  %568 = vmatprep.subr.mxu0 0.0
  %569 = vmatpush1.msra.mxu0 0.0
  %570 = vmatprep.subr.mxu0 0.0
  %571 = vmatpush1.msra.mxu0 0.0
  %572 = vmatprep.subr.mxu0 0.0
  %573 = vmatpush1.msra.mxu0 0.0
  %574 = vmatprep.subr.mxu0 0.0
  %575 = vmatpush1.msra.mxu0 0.0
  %576 = vmatprep.subr.mxu0 0.0
  %577 = vmatpush1.msra.mxu0 0.0
  %578 = vmatprep.subr.mxu0 0.0
  %579 = vmatpush1.msra.mxu0 0.0
  %580 = vmatprep.subr.mxu0 0.0
  %581 = vmatpush1.msra.mxu0 0.0
  %582 = vmatprep.subr.mxu0 0.0
  %583 = vmatpush1.msra.mxu0 0.0
  %584 = vmatprep.subr.mxu0 0.0
  %585 = vmatpush1.msra.mxu0 0.0
  %586 = vmatprep.subr.mxu0 0.0
  %587 = vmatpush1.msra.mxu0 0.0
  %588 = vmatprep.subr.mxu0 0.0
  %589 = vmatpush1.msra.mxu0 0.0
  %590 = vmatprep.subr.mxu0 0.0
  %591 = vmatpush1.msra.mxu0 0.0
  %592 = vmatprep.subr.mxu0 0.0
  %593 = vmatpush1.msra.mxu0 0.0
  %594 = vmatprep.subr.mxu0 0.0
  %595 = vmatpush1.msra.mxu0 0.0
  %596 = vmatprep.subr.mxu0 0.0
  %597 = vmatpush1.msra.mxu0 0.0
  %598 = vmatprep.mubr.f32.mxu0 0.0
  %599 = vmatmul.mubr.f32.gmra.mrb[0].mxu0 %v532
  %v600 = vpop.f32.mrb[0].mxu0
  %v601 = vadd.f32 0.0, %v600
  %v602 = vpop.f32.mrb[0].mxu0
  %603 = vdwg.mxu0
  %v605 = vrot.slane %v601, 7
  %v606 = vrot.slane %v601, 1
  %v607 = vrot.slane %v601, 2
  %v608 = vrot.slane %v601, 3
  %v609 = vrot.slane %v601, 4
  %v610 = vrot.slane %v601, 5
  %v611 = vrot.slane %v601, 6
  %v620 = vadd.f32 %v141, %v605
  %v621 = vadd.f32 %v146, %v601
  %v622 = vadd.f32 %v151, %v606
  %v623 = vadd.f32 %v156, %v607
  %v624 = vadd.f32 %v161, %v608
  %v625 = vadd.f32 %v166, %v609
  %v626 = vadd.f32 %v171, %v610
  %v627 = vadd.f32 %v176, %v611
  %v628 = vxor.u32 %v620, 2147483648
  %v629 = vxor.u32 %v621, 2147483648
  %v630 = vxor.u32 %v622, 2147483648
  %v631 = vxor.u32 %v623, 2147483648
  %v632 = vxor.u32 %v624, 2147483648
  %v633 = vxor.u32 %v625, 2147483648
  %v634 = vxor.u32 %v626, 2147483648
  %v635 = vxor.u32 %v627, 2147483648
  %v636 = vmul.f32 %v628, 1.442695
  %v637 = vpow.pop %v636
  %v638 = vmul.f32 %v629, 1.442695
  %v639 = vpow.pop %v638
  %v640 = vmul.f32 %v630, 1.442695
  %v641 = vpow.pop %v640
  %v642 = vmul.f32 %v631, 1.442695
  %v643 = vpow.pop %v642
  %v644 = vmul.f32 %v632, 1.442695
  %v645 = vpow.pop %v644
  %v646 = vmul.f32 %v633, 1.442695
  %v647 = vpow.pop %v646
  %v648 = vmul.f32 %v634, 1.442695
  %v649 = vpow.pop %v648
  %v650 = vmul.f32 %v635, 1.442695
  %v651 = vpow.pop %v650
  %v652 = vadd.f32 %v637, 1.0
  %v653 = vadd.f32 %v639, 1.0
  %v654 = vadd.f32 %v641, 1.0
  %v655 = vadd.f32 %v643, 1.0
  %v656 = vadd.f32 %v645, 1.0
  %v657 = vadd.f32 %v647, 1.0
  %v658 = vadd.f32 %v649, 1.0
  %v659 = vadd.f32 %v651, 1.0
  %v660 = vrcp.pop %v652
  %v661 = vmul.f32 1.0, %v660
  %v662 = vrcp.pop %v653
  %v663 = vmul.f32 1.0, %v662
  %v664 = vrcp.pop %v654
  %v665 = vmul.f32 1.0, %v664
  %v666 = vrcp.pop %v655
  %v667 = vmul.f32 1.0, %v666
  %v668 = vrcp.pop %v656
  %v669 = vmul.f32 1.0, %v668
  %v670 = vrcp.pop %v657
  %v671 = vmul.f32 1.0, %v670
  %v672 = vrcp.pop %v658
  %v673 = vmul.f32 1.0, %v672
  %v674 = vrcp.pop %v659
  %v675 = vmul.f32 1.0, %v674
  %v676 = vtanh.pop %v620
  %v677 = vtanh.pop %v621
  %v678 = vtanh.pop %v622
  %v679 = vtanh.pop %v623
  %v680 = vtanh.pop %v624
  %v681 = vtanh.pop %v625
  %v682 = vtanh.pop %v626
  %v683 = vtanh.pop %v627
  %v692 = vrot.slane %v412, 7
  %v693 = vrot.slane %v413, 7
  %v694 = vrot.slane %v414, 7
  %v695 = vrot.slane %v415, 7
  %v696 = vrot.slane %v416, 7
  %v697 = vrot.slane %v417, 7
  %v698 = vrot.slane %v418, 7
  %v699 = vrot.slane %v419, 7
  %v708 = vmul.f32 %v661, %v692
  %v709 = vmul.f32 %v663, %v693
  %v710 = vmul.f32 %v665, %v694
  %v711 = vmul.f32 %v667, %v695
  %v712 = vmul.f32 %v669, %v696
  %v713 = vmul.f32 %v671, %v697
  %v714 = vmul.f32 %v673, %v698
  %v715 = vmul.f32 %v675, %v699
  %724 = vrot.lane.b32.xlu0 %v676, 64
  %v725 = vpop.permute.xlu0 %724
  %726 = vrot.lane.b32.xlu0 %v677, 64
  %v727 = vpop.permute.xlu0 %726
  %728 = vrot.lane.b32.xlu0 %v678, 64
  %v729 = vpop.permute.xlu0 %728
  %730 = vrot.lane.b32.xlu0 %v679, 64
  %v731 = vpop.permute.xlu0 %730
  %732 = vrot.lane.b32.xlu0 %v680, 64
  %v733 = vpop.permute.xlu0 %732
  %734 = vrot.lane.b32.xlu0 %v681, 64
  %v735 = vpop.permute.xlu0 %734
  %736 = vrot.lane.b32.xlu0 %v682, 64
  %v737 = vpop.permute.xlu0 %736
  %738 = vrot.lane.b32.xlu0 %v683, 64
  %v739 = vpop.permute.xlu0 %738
  %v748 = vmul.f32 %v661, %v725
  %v749 = vmul.f32 %v663, %v727
  %v750 = vmul.f32 %v665, %v729
  %v751 = vmul.f32 %v667, %v731
  %v752 = vmul.f32 %v669, %v733
  %v753 = vmul.f32 %v671, %v735
  %v754 = vmul.f32 %v673, %v737
  %v755 = vmul.f32 %v675, %v739
  %764 = vrot.lane.b32.xlu0 %v748, 32
  %v765 = vpop.permute.xlu0 %764
  %766 = vrot.lane.b32.xlu0 %v749, 32
  %v767 = vpop.permute.xlu0 %766
  %768 = vrot.lane.b32.xlu0 %v750, 32
  %v769 = vpop.permute.xlu0 %768
  %770 = vrot.lane.b32.xlu0 %v751, 32
  %v771 = vpop.permute.xlu0 %770
  %772 = vrot.lane.b32.xlu0 %v752, 32
  %v773 = vpop.permute.xlu0 %772
  %774 = vrot.lane.b32.xlu0 %v753, 32
  %v775 = vpop.permute.xlu0 %774
  %776 = vrot.lane.b32.xlu0 %v754, 32
  %v777 = vpop.permute.xlu0 %776
  %778 = vrot.lane.b32.xlu0 %v755, 32
  %v779 = vpop.permute.xlu0 %778
  %v788 = vadd.f32 %v708, %v765
  %v789 = vadd.f32 %v709, %v767
  %v790 = vadd.f32 %v710, %v769
  %v791 = vadd.f32 %v711, %v771
  %v792 = vadd.f32 %v712, %v773
  %v793 = vadd.f32 %v713, %v775
  %v794 = vadd.f32 %v714, %v777
  %v795 = vadd.f32 %v715, %v779
  %v796 = vtanh.pop %v788
  %v797 = vtanh.pop %v789
  %v798 = vtanh.pop %v790
  %v799 = vtanh.pop %v791
  %v800 = vtanh.pop %v792
  %v801 = vtanh.pop %v793
  %v802 = vtanh.pop %v794
  %v803 = vtanh.pop %v795
  %812 = vrot.lane.b32.xlu0 %v796, 64
  %v813 = vpop.permute.xlu0 %812
  %814 = vrot.lane.b32.xlu0 %v797, 64
  %v815 = vpop.permute.xlu0 %814
  %816 = vrot.lane.b32.xlu0 %v798, 64
  %v817 = vpop.permute.xlu0 %816
  %818 = vrot.lane.b32.xlu0 %v799, 64
  %v819 = vpop.permute.xlu0 %818
  %820 = vrot.lane.b32.xlu0 %v800, 64
  %v821 = vpop.permute.xlu0 %820
  %822 = vrot.lane.b32.xlu0 %v801, 64
  %v823 = vpop.permute.xlu0 %822
  %824 = vrot.lane.b32.xlu0 %v802, 64
  %v825 = vpop.permute.xlu0 %824
  %826 = vrot.lane.b32.xlu0 %v803, 64
  %v827 = vpop.permute.xlu0 %826
  %v836 = vmul.f32 %v661, %v813
  %v837 = vmul.f32 %v663, %v815
  %v838 = vmul.f32 %v665, %v817
  %v839 = vmul.f32 %v667, %v819
  %v840 = vmul.f32 %v669, %v821
  %v841 = vmul.f32 %v671, %v823
  %v842 = vmul.f32 %v673, %v825
  %v843 = vmul.f32 %v675, %v827
  %852 = vrot.lane.b32.xlu0 %v836, 32
  %v853 = vpop.permute.xlu0 %852
  %854 = vrot.lane.b32.xlu0 %v837, 32
  %v855 = vpop.permute.xlu0 %854
  %856 = vrot.lane.b32.xlu0 %v838, 32
  %v857 = vpop.permute.xlu0 %856
  %858 = vrot.lane.b32.xlu0 %v839, 32
  %v859 = vpop.permute.xlu0 %858
  %860 = vrot.lane.b32.xlu0 %v840, 32
  %v861 = vpop.permute.xlu0 %860
  %862 = vrot.lane.b32.xlu0 %v841, 32
  %v863 = vpop.permute.xlu0 %862
  %864 = vrot.lane.b32.xlu0 %v842, 32
  %v865 = vpop.permute.xlu0 %864
  %866 = vrot.lane.b32.xlu0 %v843, 32
  %v867 = vpop.permute.xlu0 %866
  %vm876 = vcmask 254977
  %877 = vst.msk [vmem:[#allocation2] sm:$0x2] %vm876, %v853
  %878 = vst.msk [vmem:[#allocation2 + $0x8] sm:$0x2] %vm876, %v855
  %879 = vst.msk [vmem:[#allocation2 + $0x10] sm:$0x2] %vm876, %v857
  %880 = vst.msk [vmem:[#allocation2 + $0x18] sm:$0x2] %vm876, %v859
  %881 = vst.msk [vmem:[#allocation2 + $0x20] sm:$0x2] %vm876, %v861
  %882 = vst.msk [vmem:[#allocation2 + $0x28] sm:$0x2] %vm876, %v863
  %883 = vst.msk [vmem:[#allocation2 + $0x30] sm:$0x2] %vm876, %v865
  %884 = vst.msk [vmem:[#allocation2 + $0x38] sm:$0x2] %vm876, %v867
  %v885 = vrot.slane %v836, 1
  %v886 = vsel %vm510, %v837, %v885
  %v887 = vrot.slane %v838, 7
  %v888 = vsel %vm513, %v887, %v886
  %v889 = vrot.slane %v839, 6
  %v890 = vsel %vm516, %v889, %v888
  %v891 = vrot.slane %v840, 5
  %v892 = vsel %vm519, %v891, %v890
  %v893 = vrot.slane %v841, 4
  %v894 = vsel %vm522, %v893, %v892
  %v895 = vrot.slane %v842, 3
  %v896 = vsel %vm525, %v895, %v894
  %v897 = vrot.slane %v843, 2
  %v898 = vsel %vm528, %v897, %v896
  %899 = vrot.lane.b32.xlu0 %v898, 32
  %v900 = vpop.permute.xlu0 %899
  %v901 = vsel %vm49, %v900, 0
  %903 = vmatprep.subr.mxu0 0.0
  %904 = vmatpush1.msra.mxu0 %v34
  %905 = vmatprep.subr.mxu0 0.0
  %906 = vmatpush1.msra.mxu0 %v35
  %907 = vmatprep.subr.mxu0 0.0
  %908 = vmatpush1.msra.mxu0 %v36
  %909 = vmatprep.subr.mxu0 0.0
  %910 = vmatpush1.msra.mxu0 %v37
  %911 = vmatprep.subr.mxu0 0.0
  %912 = vmatpush1.msra.mxu0 0.0
  %913 = vmatprep.subr.mxu0 0.0
  %914 = vmatpush1.msra.mxu0 0.0
  %915 = vmatprep.subr.mxu0 0.0
  %916 = vmatpush1.msra.mxu0 0.0
  %917 = vmatprep.subr.mxu0 0.0
  %918 = vmatpush1.msra.mxu0 0.0
  %919 = vmatprep.subr.mxu0 0.0
  %920 = vmatpush1.msra.mxu0 0.0
  %921 = vmatprep.subr.mxu0 0.0
  %922 = vmatpush1.msra.mxu0 0.0
  %923 = vmatprep.subr.mxu0 0.0
  %924 = vmatpush1.msra.mxu0 0.0
  %925 = vmatprep.subr.mxu0 0.0
  %926 = vmatpush1.msra.mxu0 0.0
  %927 = vmatprep.subr.mxu0 0.0
  %928 = vmatpush1.msra.mxu0 0.0
  %929 = vmatprep.subr.mxu0 0.0
  %930 = vmatpush1.msra.mxu0 0.0
  %931 = vmatprep.subr.mxu0 0.0
  %932 = vmatpush1.msra.mxu0 0.0
  %933 = vmatprep.subr.mxu0 0.0
  %934 = vmatpush1.msra.mxu0 0.0
  %935 = vmatprep.subr.mxu0 0.0
  %936 = vmatpush1.msra.mxu0 0.0
  %937 = vmatprep.subr.mxu0 0.0
  %938 = vmatpush1.msra.mxu0 0.0
  %939 = vmatprep.subr.mxu0 0.0
  %940 = vmatpush1.msra.mxu0 0.0
  %941 = vmatprep.subr.mxu0 0.0
  %942 = vmatpush1.msra.mxu0 0.0
  %943 = vmatprep.subr.mxu0 0.0
  %944 = vmatpush1.msra.mxu0 0.0
  %945 = vmatprep.subr.mxu0 0.0
  %946 = vmatpush1.msra.mxu0 0.0
  %947 = vmatprep.subr.mxu0 0.0
  %948 = vmatpush1.msra.mxu0 0.0
  %949 = vmatprep.subr.mxu0 0.0
  %950 = vmatpush1.msra.mxu0 0.0
  %951 = vmatprep.subr.mxu0 0.0
  %952 = vmatpush1.msra.mxu0 0.0
  %953 = vmatprep.subr.mxu0 0.0
  %954 = vmatpush1.msra.mxu0 0.0
  %955 = vmatprep.subr.mxu0 0.0
  %956 = vmatpush1.msra.mxu0 0.0
  %957 = vmatprep.subr.mxu0 0.0
  %958 = vmatpush1.msra.mxu0 0.0
  %959 = vmatprep.subr.mxu0 0.0
  %960 = vmatpush1.msra.mxu0 0.0
  %961 = vmatprep.subr.mxu0 0.0
  %962 = vmatpush1.msra.mxu0 0.0
  %963 = vmatprep.subr.mxu0 0.0
  %964 = vmatpush1.msra.mxu0 0.0
  %965 = vmatprep.subr.mxu0 0.0
  %966 = vmatpush1.msra.mxu0 0.0
  %967 = vmatprep.mubr.f32.mxu0 0.0
  %968 = vmatmul.mubr.f32.gmra.mrb[0].mxu0 %v901
  %v969 = vpop.f32.mrb[0].mxu0
  %v970 = vadd.f32 0.0, %v969
  %v971 = vpop.f32.mrb[0].mxu0
  %972 = vdwg.mxu0
  %v974 = vrot.slane %v970, 6
  %v975 = vrot.slane %v970, 7
  %v976 = vrot.slane %v970, 1
  %v977 = vrot.slane %v970, 2
  %v978 = vrot.slane %v970, 3
  %v979 = vrot.slane %v970, 4
  %v980 = vrot.slane %v970, 5
  %v989 = vadd.f32 %v141, %v974
  %v990 = vadd.f32 %v146, %v975
  %v991 = vadd.f32 %v151, %v970
  %v992 = vadd.f32 %v156, %v976
  %v993 = vadd.f32 %v161, %v977
  %v994 = vadd.f32 %v166, %v978
  %v995 = vadd.f32 %v171, %v979
  %v996 = vadd.f32 %v176, %v980
  %v997 = vxor.u32 %v989, 2147483648
  %v998 = vxor.u32 %v990, 2147483648
  %v999 = vxor.u32 %v991, 2147483648
  %v1000 = vxor.u32 %v992, 2147483648
  %v1001 = vxor.u32 %v993, 2147483648
  %v1002 = vxor.u32 %v994, 2147483648
  %v1003 = vxor.u32 %v995, 2147483648
  %v1004 = vxor.u32 %v996, 2147483648
  %v1005 = vmul.f32 %v997, 1.442695
  %v1006 = vpow.pop %v1005
  %v1007 = vmul.f32 %v998, 1.442695
  %v1008 = vpow.pop %v1007
  %v1009 = vmul.f32 %v999, 1.442695
  %v1010 = vpow.pop %v1009
  %v1011 = vmul.f32 %v1000, 1.442695
  %v1012 = vpow.pop %v1011
  %v1013 = vmul.f32 %v1001, 1.442695
  %v1014 = vpow.pop %v1013
  %v1015 = vmul.f32 %v1002, 1.442695
  %v1016 = vpow.pop %v1015
  %v1017 = vmul.f32 %v1003, 1.442695
  %v1018 = vpow.pop %v1017
  %v1019 = vmul.f32 %v1004, 1.442695
  %v1020 = vpow.pop %v1019
  %v1021 = vadd.f32 %v1006, 1.0
  %v1022 = vadd.f32 %v1008, 1.0
  %v1023 = vadd.f32 %v1010, 1.0
  %v1024 = vadd.f32 %v1012, 1.0
  %v1025 = vadd.f32 %v1014, 1.0
  %v1026 = vadd.f32 %v1016, 1.0
  %v1027 = vadd.f32 %v1018, 1.0
  %v1028 = vadd.f32 %v1020, 1.0
  %v1029 = vrcp.pop %v1021
  %v1030 = vmul.f32 1.0, %v1029
  %v1031 = vrcp.pop %v1022
  %v1032 = vmul.f32 1.0, %v1031
  %v1033 = vrcp.pop %v1023
  %v1034 = vmul.f32 1.0, %v1033
  %v1035 = vrcp.pop %v1024
  %v1036 = vmul.f32 1.0, %v1035
  %v1037 = vrcp.pop %v1025
  %v1038 = vmul.f32 1.0, %v1037
  %v1039 = vrcp.pop %v1026
  %v1040 = vmul.f32 1.0, %v1039
  %v1041 = vrcp.pop %v1027
  %v1042 = vmul.f32 1.0, %v1041
  %v1043 = vrcp.pop %v1028
  %v1044 = vmul.f32 1.0, %v1043
  %v1045 = vtanh.pop %v989
  %v1046 = vtanh.pop %v990
  %v1047 = vtanh.pop %v991
  %v1048 = vtanh.pop %v992
  %v1049 = vtanh.pop %v993
  %v1050 = vtanh.pop %v994
  %v1051 = vtanh.pop %v995
  %v1052 = vtanh.pop %v996
  %v1061 = vrot.slane %v788, 7
  %v1062 = vrot.slane %v789, 7
  %v1063 = vrot.slane %v790, 7
  %v1064 = vrot.slane %v791, 7
  %v1065 = vrot.slane %v792, 7
  %v1066 = vrot.slane %v793, 7
  %v1067 = vrot.slane %v794, 7
  %v1068 = vrot.slane %v795, 7
  %v1077 = vmul.f32 %v1030, %v1061
  %v1078 = vmul.f32 %v1032, %v1062
  %v1079 = vmul.f32 %v1034, %v1063
  %v1080 = vmul.f32 %v1036, %v1064
  %v1081 = vmul.f32 %v1038, %v1065
  %v1082 = vmul.f32 %v1040, %v1066
  %v1083 = vmul.f32 %v1042, %v1067
  %v1084 = vmul.f32 %v1044, %v1068
  %1093 = vrot.lane.b32.xlu0 %v1045, 64
  %v1094 = vpop.permute.xlu0 %1093
  %1095 = vrot.lane.b32.xlu0 %v1046, 64
  %v1096 = vpop.permute.xlu0 %1095
  %1097 = vrot.lane.b32.xlu0 %v1047, 64
  %v1098 = vpop.permute.xlu0 %1097
  %1099 = vrot.lane.b32.xlu0 %v1048, 64
  %v1100 = vpop.permute.xlu0 %1099
  %1101 = vrot.lane.b32.xlu0 %v1049, 64
  %v1102 = vpop.permute.xlu0 %1101
  %1103 = vrot.lane.b32.xlu0 %v1050, 64
  %v1104 = vpop.permute.xlu0 %1103
  %1105 = vrot.lane.b32.xlu0 %v1051, 64
  %v1106 = vpop.permute.xlu0 %1105
  %1107 = vrot.lane.b32.xlu0 %v1052, 64
  %v1108 = vpop.permute.xlu0 %1107
  %v1117 = vmul.f32 %v1030, %v1094
  %v1118 = vmul.f32 %v1032, %v1096
  %v1119 = vmul.f32 %v1034, %v1098
  %v1120 = vmul.f32 %v1036, %v1100
  %v1121 = vmul.f32 %v1038, %v1102
  %v1122 = vmul.f32 %v1040, %v1104
  %v1123 = vmul.f32 %v1042, %v1106
  %v1124 = vmul.f32 %v1044, %v1108
  %1133 = vrot.lane.b32.xlu0 %v1117, 32
  %v1134 = vpop.permute.xlu0 %1133
  %1135 = vrot.lane.b32.xlu0 %v1118, 32
  %v1136 = vpop.permute.xlu0 %1135
  %1137 = vrot.lane.b32.xlu0 %v1119, 32
  %v1138 = vpop.permute.xlu0 %1137
  %1139 = vrot.lane.b32.xlu0 %v1120, 32
  %v1140 = vpop.permute.xlu0 %1139
  %1141 = vrot.lane.b32.xlu0 %v1121, 32
  %v1142 = vpop.permute.xlu0 %1141
  %1143 = vrot.lane.b32.xlu0 %v1122, 32
  %v1144 = vpop.permute.xlu0 %1143
  %1145 = vrot.lane.b32.xlu0 %v1123, 32
  %v1146 = vpop.permute.xlu0 %1145
  %1147 = vrot.lane.b32.xlu0 %v1124, 32
  %v1148 = vpop.permute.xlu0 %1147
  %v1157 = vadd.f32 %v1077, %v1134
  %v1158 = vadd.f32 %v1078, %v1136
  %v1159 = vadd.f32 %v1079, %v1138
  %v1160 = vadd.f32 %v1080, %v1140
  %v1161 = vadd.f32 %v1081, %v1142
  %v1162 = vadd.f32 %v1082, %v1144
  %v1163 = vadd.f32 %v1083, %v1146
  %v1164 = vadd.f32 %v1084, %v1148
  %v1165 = vtanh.pop %v1157
  %v1166 = vtanh.pop %v1158
  %v1167 = vtanh.pop %v1159
  %v1168 = vtanh.pop %v1160
  %v1169 = vtanh.pop %v1161
  %v1170 = vtanh.pop %v1162
  %v1171 = vtanh.pop %v1163
  %v1172 = vtanh.pop %v1164
  %1181 = vrot.lane.b32.xlu0 %v1165, 64
  %v1182 = vpop.permute.xlu0 %1181
  %1183 = vrot.lane.b32.xlu0 %v1166, 64
  %v1184 = vpop.permute.xlu0 %1183
  %1185 = vrot.lane.b32.xlu0 %v1167, 64
  %v1186 = vpop.permute.xlu0 %1185
  %1187 = vrot.lane.b32.xlu0 %v1168, 64
  %v1188 = vpop.permute.xlu0 %1187
  %1189 = vrot.lane.b32.xlu0 %v1169, 64
  %v1190 = vpop.permute.xlu0 %1189
  %1191 = vrot.lane.b32.xlu0 %v1170, 64
  %v1192 = vpop.permute.xlu0 %1191
  %1193 = vrot.lane.b32.xlu0 %v1171, 64
  %v1194 = vpop.permute.xlu0 %1193
  %1195 = vrot.lane.b32.xlu0 %v1172, 64
  %v1196 = vpop.permute.xlu0 %1195
  %v1205 = vmul.f32 %v1030, %v1182
  %v1206 = vmul.f32 %v1032, %v1184
  %v1207 = vmul.f32 %v1034, %v1186
  %v1208 = vmul.f32 %v1036, %v1188
  %v1209 = vmul.f32 %v1038, %v1190
  %v1210 = vmul.f32 %v1040, %v1192
  %v1211 = vmul.f32 %v1042, %v1194
  %v1212 = vmul.f32 %v1044, %v1196
  %1221 = vrot.lane.b32.xlu0 %v1205, 32
  %v1222 = vpop.permute.xlu0 %1221
  %1223 = vrot.lane.b32.xlu0 %v1206, 32
  %v1224 = vpop.permute.xlu0 %1223
  %1225 = vrot.lane.b32.xlu0 %v1207, 32
  %v1226 = vpop.permute.xlu0 %1225
  %1227 = vrot.lane.b32.xlu0 %v1208, 32
  %v1228 = vpop.permute.xlu0 %1227
  %1229 = vrot.lane.b32.xlu0 %v1209, 32
  %v1230 = vpop.permute.xlu0 %1229
  %1231 = vrot.lane.b32.xlu0 %v1210, 32
  %v1232 = vpop.permute.xlu0 %1231
  %1233 = vrot.lane.b32.xlu0 %v1211, 32
  %v1234 = vpop.permute.xlu0 %1233
  %1235 = vrot.lane.b32.xlu0 %v1212, 32
  %v1236 = vpop.permute.xlu0 %1235
  %vm1245 = vcmask 256002
  %1246 = vst.msk [vmem:[#allocation2] sm:$0x4] %vm1245, %v1222
  %1247 = vst.msk [vmem:[#allocation2 + $0x8] sm:$0x4] %vm1245, %v1224
  %1248 = vst.msk [vmem:[#allocation2 + $0x10] sm:$0x4] %vm1245, %v1226
  %1249 = vst.msk [vmem:[#allocation2 + $0x18] sm:$0x4] %vm1245, %v1228
  %1250 = vst.msk [vmem:[#allocation2 + $0x20] sm:$0x4] %vm1245, %v1230
  %1251 = vst.msk [vmem:[#allocation2 + $0x28] sm:$0x4] %vm1245, %v1232
  %1252 = vst.msk [vmem:[#allocation2 + $0x30] sm:$0x4] %vm1245, %v1234
  %1253 = vst.msk [vmem:[#allocation2 + $0x38] sm:$0x4] %vm1245, %v1236
  %v1254 = vrot.slane %v1205, 2
  %v1255 = vrot.slane %v1206, 1
  %v1256 = vsel %vm510, %v1255, %v1254
  %v1257 = vsel %vm513, %v1207, %v1256
  %v1258 = vrot.slane %v1208, 7
  %v1259 = vsel %vm516, %v1258, %v1257
  %v1260 = vrot.slane %v1209, 6
  %v1261 = vsel %vm519, %v1260, %v1259
  %v1262 = vrot.slane %v1210, 5
  %v1263 = vsel %vm522, %v1262, %v1261
  %v1264 = vrot.slane %v1211, 4
  %v1265 = vsel %vm525, %v1264, %v1263
  %v1266 = vrot.slane %v1212, 3
  %v1267 = vsel %vm528, %v1266, %v1265
  %1268 = vrot.lane.b32.xlu0 %v1267, 32
  %v1269 = vpop.permute.xlu0 %1268
  %v1270 = vsel %vm49, %v1269, 0
  %1272 = vmatprep.subr.mxu0 0.0
  %1273 = vmatpush1.msra.mxu0 %v34
  %1274 = vmatprep.subr.mxu0 0.0
  %1275 = vmatpush1.msra.mxu0 %v35
  %1276 = vmatprep.subr.mxu0 0.0
  %1277 = vmatpush1.msra.mxu0 %v36
  %1278 = vmatprep.subr.mxu0 0.0
  %1279 = vmatpush1.msra.mxu0 %v37
  %1280 = vmatprep.subr.mxu0 0.0
  %1281 = vmatpush1.msra.mxu0 0.0
  %1282 = vmatprep.subr.mxu0 0.0
  %1283 = vmatpush1.msra.mxu0 0.0
  %1284 = vmatprep.subr.mxu0 0.0
  %1285 = vmatpush1.msra.mxu0 0.0
  %1286 = vmatprep.subr.mxu0 0.0
  %1287 = vmatpush1.msra.mxu0 0.0
  %1288 = vmatprep.subr.mxu0 0.0
  %1289 = vmatpush1.msra.mxu0 0.0
  %1290 = vmatprep.subr.mxu0 0.0
  %1291 = vmatpush1.msra.mxu0 0.0
  %1292 = vmatprep.subr.mxu0 0.0
  %1293 = vmatpush1.msra.mxu0 0.0
  %1294 = vmatprep.subr.mxu0 0.0
  %1295 = vmatpush1.msra.mxu0 0.0
  %1296 = vmatprep.subr.mxu0 0.0
  %1297 = vmatpush1.msra.mxu0 0.0
  %1298 = vmatprep.subr.mxu0 0.0
  %1299 = vmatpush1.msra.mxu0 0.0
  %1300 = vmatprep.subr.mxu0 0.0
  %1301 = vmatpush1.msra.mxu0 0.0
  %1302 = vmatprep.subr.mxu0 0.0
  %1303 = vmatpush1.msra.mxu0 0.0
  %1304 = vmatprep.subr.mxu0 0.0
  %1305 = vmatpush1.msra.mxu0 0.0
  %1306 = vmatprep.subr.mxu0 0.0
  %1307 = vmatpush1.msra.mxu0 0.0
  %1308 = vmatprep.subr.mxu0 0.0
  %1309 = vmatpush1.msra.mxu0 0.0
  %1310 = vmatprep.subr.mxu0 0.0
  %1311 = vmatpush1.msra.mxu0 0.0
  %1312 = vmatprep.subr.mxu0 0.0
  %1313 = vmatpush1.msra.mxu0 0.0
  %1314 = vmatprep.subr.mxu0 0.0
  %1315 = vmatpush1.msra.mxu0 0.0
  %1316 = vmatprep.subr.mxu0 0.0
  %1317 = vmatpush1.msra.mxu0 0.0
  %1318 = vmatprep.subr.mxu0 0.0
  %1319 = vmatpush1.msra.mxu0 0.0
  %1320 = vmatprep.subr.mxu0 0.0
  %1321 = vmatpush1.msra.mxu0 0.0
  %1322 = vmatprep.subr.mxu0 0.0
  %1323 = vmatpush1.msra.mxu0 0.0
  %1324 = vmatprep.subr.mxu0 0.0
  %1325 = vmatpush1.msra.mxu0 0.0
  %1326 = vmatprep.subr.mxu0 0.0
  %1327 = vmatpush1.msra.mxu0 0.0
  %1328 = vmatprep.subr.mxu0 0.0
  %1329 = vmatpush1.msra.mxu0 0.0
  %1330 = vmatprep.subr.mxu0 0.0
  %1331 = vmatpush1.msra.mxu0 0.0
  %1332 = vmatprep.subr.mxu0 0.0
  %1333 = vmatpush1.msra.mxu0 0.0
  %1334 = vmatprep.subr.mxu0 0.0
  %1335 = vmatpush1.msra.mxu0 0.0
  %1336 = vmatprep.mubr.f32.mxu0 0.0
  %1337 = vmatmul.mubr.f32.gmra.mrb[0].mxu0 %v1270
  %v1338 = vpop.f32.mrb[0].mxu0
  %v1339 = vadd.f32 0.0, %v1338
  %v1340 = vpop.f32.mrb[0].mxu0
  %1341 = vdwg.mxu0
  %v1343 = vrot.slane %v1339, 5
  %v1344 = vrot.slane %v1339, 6
  %v1345 = vrot.slane %v1339, 7
  %v1346 = vrot.slane %v1339, 1
  %v1347 = vrot.slane %v1339, 2
  %v1348 = vrot.slane %v1339, 3
  %v1349 = vrot.slane %v1339, 4
  %v1358 = vadd.f32 %v141, %v1343
  %v1359 = vadd.f32 %v146, %v1344
  %v1360 = vadd.f32 %v151, %v1345
  %v1361 = vadd.f32 %v156, %v1339
  %v1362 = vadd.f32 %v161, %v1346
  %v1363 = vadd.f32 %v166, %v1347
  %v1364 = vadd.f32 %v171, %v1348
  %v1365 = vadd.f32 %v176, %v1349
  %v1366 = vxor.u32 %v1358, 2147483648
  %v1367 = vxor.u32 %v1359, 2147483648
  %v1368 = vxor.u32 %v1360, 2147483648
  %v1369 = vxor.u32 %v1361, 2147483648
  %v1370 = vxor.u32 %v1362, 2147483648
  %v1371 = vxor.u32 %v1363, 2147483648
  %v1372 = vxor.u32 %v1364, 2147483648
  %v1373 = vxor.u32 %v1365, 2147483648
  %v1374 = vmul.f32 %v1366, 1.442695
  %v1375 = vpow.pop %v1374
  %v1376 = vmul.f32 %v1367, 1.442695
  %v1377 = vpow.pop %v1376
  %v1378 = vmul.f32 %v1368, 1.442695
  %v1379 = vpow.pop %v1378
  %v1380 = vmul.f32 %v1369, 1.442695
  %v1381 = vpow.pop %v1380
  %v1382 = vmul.f32 %v1370, 1.442695
  %v1383 = vpow.pop %v1382
  %v1384 = vmul.f32 %v1371, 1.442695
  %v1385 = vpow.pop %v1384
  %v1386 = vmul.f32 %v1372, 1.442695
  %v1387 = vpow.pop %v1386
  %v1388 = vmul.f32 %v1373, 1.442695
  %v1389 = vpow.pop %v1388
  %v1390 = vadd.f32 %v1375, 1.0
  %v1391 = vadd.f32 %v1377, 1.0
  %v1392 = vadd.f32 %v1379, 1.0
  %v1393 = vadd.f32 %v1381, 1.0
  %v1394 = vadd.f32 %v1383, 1.0
  %v1395 = vadd.f32 %v1385, 1.0
  %v1396 = vadd.f32 %v1387, 1.0
  %v1397 = vadd.f32 %v1389, 1.0
  %v1398 = vrcp.pop %v1390
  %v1399 = vmul.f32 1.0, %v1398
  %v1400 = vrcp.pop %v1391
  %v1401 = vmul.f32 1.0, %v1400
  %v1402 = vrcp.pop %v1392
  %v1403 = vmul.f32 1.0, %v1402
  %v1404 = vrcp.pop %v1393
  %v1405 = vmul.f32 1.0, %v1404
  %v1406 = vrcp.pop %v1394
  %v1407 = vmul.f32 1.0, %v1406
  %v1408 = vrcp.pop %v1395
  %v1409 = vmul.f32 1.0, %v1408
  %v1410 = vrcp.pop %v1396
  %v1411 = vmul.f32 1.0, %v1410
  %v1412 = vrcp.pop %v1397
  %v1413 = vmul.f32 1.0, %v1412
  %v1414 = vtanh.pop %v1358
  %v1415 = vtanh.pop %v1359
  %v1416 = vtanh.pop %v1360
  %v1417 = vtanh.pop %v1361
  %v1418 = vtanh.pop %v1362
  %v1419 = vtanh.pop %v1363
  %v1420 = vtanh.pop %v1364
  %v1421 = vtanh.pop %v1365
  %v1430 = vrot.slane %v1157, 7
  %v1431 = vrot.slane %v1158, 7
  %v1432 = vrot.slane %v1159, 7
  %v1433 = vrot.slane %v1160, 7
  %v1434 = vrot.slane %v1161, 7
  %v1435 = vrot.slane %v1162, 7
  %v1436 = vrot.slane %v1163, 7
  %v1437 = vrot.slane %v1164, 7
  %v1446 = vmul.f32 %v1399, %v1430
  %v1447 = vmul.f32 %v1401, %v1431
  %v1448 = vmul.f32 %v1403, %v1432
  %v1449 = vmul.f32 %v1405, %v1433
  %v1450 = vmul.f32 %v1407, %v1434
  %v1451 = vmul.f32 %v1409, %v1435
  %v1452 = vmul.f32 %v1411, %v1436
  %v1453 = vmul.f32 %v1413, %v1437
  %1462 = vrot.lane.b32.xlu0 %v1414, 64
  %v1463 = vpop.permute.xlu0 %1462
  %1464 = vrot.lane.b32.xlu0 %v1415, 64
  %v1465 = vpop.permute.xlu0 %1464
  %1466 = vrot.lane.b32.xlu0 %v1416, 64
  %v1467 = vpop.permute.xlu0 %1466
  %1468 = vrot.lane.b32.xlu0 %v1417, 64
  %v1469 = vpop.permute.xlu0 %1468
  %1470 = vrot.lane.b32.xlu0 %v1418, 64
  %v1471 = vpop.permute.xlu0 %1470
  %1472 = vrot.lane.b32.xlu0 %v1419, 64
  %v1473 = vpop.permute.xlu0 %1472
  %1474 = vrot.lane.b32.xlu0 %v1420, 64
  %v1475 = vpop.permute.xlu0 %1474
  %1476 = vrot.lane.b32.xlu0 %v1421, 64
  %v1477 = vpop.permute.xlu0 %1476
  %v1486 = vmul.f32 %v1399, %v1463
  %v1487 = vmul.f32 %v1401, %v1465
  %v1488 = vmul.f32 %v1403, %v1467
  %v1489 = vmul.f32 %v1405, %v1469
  %v1490 = vmul.f32 %v1407, %v1471
  %v1491 = vmul.f32 %v1409, %v1473
  %v1492 = vmul.f32 %v1411, %v1475
  %v1493 = vmul.f32 %v1413, %v1477
  %1502 = vrot.lane.b32.xlu0 %v1486, 32
  %v1503 = vpop.permute.xlu0 %1502
  %1504 = vrot.lane.b32.xlu0 %v1487, 32
  %v1505 = vpop.permute.xlu0 %1504
  %1506 = vrot.lane.b32.xlu0 %v1488, 32
  %v1507 = vpop.permute.xlu0 %1506
  %1508 = vrot.lane.b32.xlu0 %v1489, 32
  %v1509 = vpop.permute.xlu0 %1508
  %1510 = vrot.lane.b32.xlu0 %v1490, 32
  %v1511 = vpop.permute.xlu0 %1510
  %1512 = vrot.lane.b32.xlu0 %v1491, 32
  %v1513 = vpop.permute.xlu0 %1512
  %1514 = vrot.lane.b32.xlu0 %v1492, 32
  %v1515 = vpop.permute.xlu0 %1514
  %1516 = vrot.lane.b32.xlu0 %v1493, 32
  %v1517 = vpop.permute.xlu0 %1516
  %v1526 = vadd.f32 %v1446, %v1503
  %v1527 = vadd.f32 %v1447, %v1505
  %v1528 = vadd.f32 %v1448, %v1507
  %v1529 = vadd.f32 %v1449, %v1509
  %v1530 = vadd.f32 %v1450, %v1511
  %v1531 = vadd.f32 %v1451, %v1513
  %v1532 = vadd.f32 %v1452, %v1515
  %v1533 = vadd.f32 %v1453, %v1517
  %v1534 = vtanh.pop %v1526
  %v1535 = vtanh.pop %v1527
  %v1536 = vtanh.pop %v1528
  %v1537 = vtanh.pop %v1529
  %v1538 = vtanh.pop %v1530
  %v1539 = vtanh.pop %v1531
  %v1540 = vtanh.pop %v1532
  %v1541 = vtanh.pop %v1533
  %1550 = vrot.lane.b32.xlu0 %v1534, 64
  %v1551 = vpop.permute.xlu0 %1550
  %1552 = vrot.lane.b32.xlu0 %v1535, 64
  %v1553 = vpop.permute.xlu0 %1552
  %1554 = vrot.lane.b32.xlu0 %v1536, 64
  %v1555 = vpop.permute.xlu0 %1554
  %1556 = vrot.lane.b32.xlu0 %v1537, 64
  %v1557 = vpop.permute.xlu0 %1556
  %1558 = vrot.lane.b32.xlu0 %v1538, 64
  %v1559 = vpop.permute.xlu0 %1558
  %1560 = vrot.lane.b32.xlu0 %v1539, 64
  %v1561 = vpop.permute.xlu0 %1560
  %1562 = vrot.lane.b32.xlu0 %v1540, 64
  %v1563 = vpop.permute.xlu0 %1562
  %1564 = vrot.lane.b32.xlu0 %v1541, 64
  %v1565 = vpop.permute.xlu0 %1564
  %v1574 = vmul.f32 %v1399, %v1551
  %v1575 = vmul.f32 %v1401, %v1553
  %v1576 = vmul.f32 %v1403, %v1555
  %v1577 = vmul.f32 %v1405, %v1557
  %v1578 = vmul.f32 %v1407, %v1559
  %v1579 = vmul.f32 %v1409, %v1561
  %v1580 = vmul.f32 %v1411, %v1563
  %v1581 = vmul.f32 %v1413, %v1565
  %1590 = vrot.lane.b32.xlu0 %v1574, 32
  %v1591 = vpop.permute.xlu0 %1590
  %1592 = vrot.lane.b32.xlu0 %v1575, 32
  %v1593 = vpop.permute.xlu0 %1592
  %1594 = vrot.lane.b32.xlu0 %v1576, 32
  %v1595 = vpop.permute.xlu0 %1594
  %1596 = vrot.lane.b32.xlu0 %v1577, 32
  %v1597 = vpop.permute.xlu0 %1596
  %1598 = vrot.lane.b32.xlu0 %v1578, 32
  %v1599 = vpop.permute.xlu0 %1598
  %1600 = vrot.lane.b32.xlu0 %v1579, 32
  %v1601 = vpop.permute.xlu0 %1600
  %1602 = vrot.lane.b32.xlu0 %v1580, 32
  %v1603 = vpop.permute.xlu0 %1602
  %1604 = vrot.lane.b32.xlu0 %v1581, 32
  %v1605 = vpop.permute.xlu0 %1604
  %vm1614 = vcmask 257027
  %1615 = vst.msk [vmem:[#allocation2] sm:$0x8] %vm1614, %v1591
  %1616 = vst.msk [vmem:[#allocation2 + $0x8] sm:$0x8] %vm1614, %v1593
  %1617 = vst.msk [vmem:[#allocation2 + $0x10] sm:$0x8] %vm1614, %v1595
  %1618 = vst.msk [vmem:[#allocation2 + $0x18] sm:$0x8] %vm1614, %v1597
  %1619 = vst.msk [vmem:[#allocation2 + $0x20] sm:$0x8] %vm1614, %v1599
  %1620 = vst.msk [vmem:[#allocation2 + $0x28] sm:$0x8] %vm1614, %v1601
  %1621 = vst.msk [vmem:[#allocation2 + $0x30] sm:$0x8] %vm1614, %v1603
  %1622 = vst.msk [vmem:[#allocation2 + $0x38] sm:$0x8] %vm1614, %v1605
  %v1623 = vrot.slane %v1574, 3
  %v1624 = vrot.slane %v1575, 2
  %v1625 = vsel %vm510, %v1624, %v1623
  %v1626 = vrot.slane %v1576, 1
  %v1627 = vsel %vm513, %v1626, %v1625
  %v1628 = vsel %vm516, %v1577, %v1627
  %v1629 = vrot.slane %v1578, 7
  %v1630 = vsel %vm519, %v1629, %v1628
  %v1631 = vrot.slane %v1579, 6
  %v1632 = vsel %vm522, %v1631, %v1630
  %v1633 = vrot.slane %v1580, 5
  %v1634 = vsel %vm525, %v1633, %v1632
  %v1635 = vrot.slane %v1581, 4
  %v1636 = vsel %vm528, %v1635, %v1634
  %1637 = vrot.lane.b32.xlu0 %v1636, 32
  %v1638 = vpop.permute.xlu0 %1637
  %v1639 = vsel %vm49, %v1638, 0
  %1641 = vmatprep.subr.mxu0 0.0
  %1642 = vmatpush1.msra.mxu0 %v34
  %1643 = vmatprep.subr.mxu0 0.0
  %1644 = vmatpush1.msra.mxu0 %v35
  %1645 = vmatprep.subr.mxu0 0.0
  %1646 = vmatpush1.msra.mxu0 %v36
  %1647 = vmatprep.subr.mxu0 0.0
  %1648 = vmatpush1.msra.mxu0 %v37
  %1649 = vmatprep.subr.mxu0 0.0
  %1650 = vmatpush1.msra.mxu0 0.0
  %1651 = vmatprep.subr.mxu0 0.0
  %1652 = vmatpush1.msra.mxu0 0.0
  %1653 = vmatprep.subr.mxu0 0.0
  %1654 = vmatpush1.msra.mxu0 0.0
  %1655 = vmatprep.subr.mxu0 0.0
  %1656 = vmatpush1.msra.mxu0 0.0
  %1657 = vmatprep.subr.mxu0 0.0
  %1658 = vmatpush1.msra.mxu0 0.0
  %1659 = vmatprep.subr.mxu0 0.0
  %1660 = vmatpush1.msra.mxu0 0.0
  %1661 = vmatprep.subr.mxu0 0.0
  %1662 = vmatpush1.msra.mxu0 0.0
  %1663 = vmatprep.subr.mxu0 0.0
  %1664 = vmatpush1.msra.mxu0 0.0
  %1665 = vmatprep.subr.mxu0 0.0
  %1666 = vmatpush1.msra.mxu0 0.0
  %1667 = vmatprep.subr.mxu0 0.0
  %1668 = vmatpush1.msra.mxu0 0.0
  %1669 = vmatprep.subr.mxu0 0.0
  %1670 = vmatpush1.msra.mxu0 0.0
  %1671 = vmatprep.subr.mxu0 0.0
  %1672 = vmatpush1.msra.mxu0 0.0
  %1673 = vmatprep.subr.mxu0 0.0
  %1674 = vmatpush1.msra.mxu0 0.0
  %1675 = vmatprep.subr.mxu0 0.0
  %1676 = vmatpush1.msra.mxu0 0.0
  %1677 = vmatprep.subr.mxu0 0.0
  %1678 = vmatpush1.msra.mxu0 0.0
  %1679 = vmatprep.subr.mxu0 0.0
  %1680 = vmatpush1.msra.mxu0 0.0
  %1681 = vmatprep.subr.mxu0 0.0
  %1682 = vmatpush1.msra.mxu0 0.0
  %1683 = vmatprep.subr.mxu0 0.0
  %1684 = vmatpush1.msra.mxu0 0.0
  %1685 = vmatprep.subr.mxu0 0.0
  %1686 = vmatpush1.msra.mxu0 0.0
  %1687 = vmatprep.subr.mxu0 0.0
  %1688 = vmatpush1.msra.mxu0 0.0
  %1689 = vmatprep.subr.mxu0 0.0
  %1690 = vmatpush1.msra.mxu0 0.0
  %1691 = vmatprep.subr.mxu0 0.0
  %1692 = vmatpush1.msra.mxu0 0.0
  %1693 = vmatprep.subr.mxu0 0.0
  %1694 = vmatpush1.msra.mxu0 0.0
  %1695 = vmatprep.subr.mxu0 0.0
  %1696 = vmatpush1.msra.mxu0 0.0
  %1697 = vmatprep.subr.mxu0 0.0
  %1698 = vmatpush1.msra.mxu0 0.0
  %1699 = vmatprep.subr.mxu0 0.0
  %1700 = vmatpush1.msra.mxu0 0.0
  %1701 = vmatprep.subr.mxu0 0.0
  %1702 = vmatpush1.msra.mxu0 0.0
  %1703 = vmatprep.subr.mxu0 0.0
  %1704 = vmatpush1.msra.mxu0 0.0
  %1705 = vmatprep.mubr.f32.mxu0 0.0
  %1706 = vmatmul.mubr.f32.gmra.mrb[0].mxu0 %v1639
  %v1707 = vpop.f32.mrb[0].mxu0
  %v1708 = vadd.f32 0.0, %v1707
  %v1709 = vpop.f32.mrb[0].mxu0
  %1710 = vdwg.mxu0
  %v1712 = vrot.slane %v1708, 4
  %v1713 = vrot.slane %v1708, 5
  %v1714 = vrot.slane %v1708, 6
  %v1715 = vrot.slane %v1708, 7
  %v1716 = vrot.slane %v1708, 1
  %v1717 = vrot.slane %v1708, 2
  %v1718 = vrot.slane %v1708, 3
  %v1727 = vadd.f32 %v141, %v1712
  %v1728 = vadd.f32 %v146, %v1713
  %v1729 = vadd.f32 %v151, %v1714
  %v1730 = vadd.f32 %v156, %v1715
  %v1731 = vadd.f32 %v161, %v1708
  %v1732 = vadd.f32 %v166, %v1716
  %v1733 = vadd.f32 %v171, %v1717
  %v1734 = vadd.f32 %v176, %v1718
  %v1735 = vxor.u32 %v1727, 2147483648
  %v1736 = vxor.u32 %v1728, 2147483648
  %v1737 = vxor.u32 %v1729, 2147483648
  %v1738 = vxor.u32 %v1730, 2147483648
  %v1739 = vxor.u32 %v1731, 2147483648
  %v1740 = vxor.u32 %v1732, 2147483648
  %v1741 = vxor.u32 %v1733, 2147483648
  %v1742 = vxor.u32 %v1734, 2147483648
  %v1743 = vmul.f32 %v1735, 1.442695
  %v1744 = vpow.pop %v1743
  %v1745 = vmul.f32 %v1736, 1.442695
  %v1746 = vpow.pop %v1745
  %v1747 = vmul.f32 %v1737, 1.442695
  %v1748 = vpow.pop %v1747
  %v1749 = vmul.f32 %v1738, 1.442695
  %v1750 = vpow.pop %v1749
  %v1751 = vmul.f32 %v1739, 1.442695
  %v1752 = vpow.pop %v1751
  %v1753 = vmul.f32 %v1740, 1.442695
  %v1754 = vpow.pop %v1753
  %v1755 = vmul.f32 %v1741, 1.442695
  %v1756 = vpow.pop %v1755
  %v1757 = vmul.f32 %v1742, 1.442695
  %v1758 = vpow.pop %v1757
  %v1759 = vadd.f32 %v1744, 1.0
  %v1760 = vadd.f32 %v1746, 1.0
  %v1761 = vadd.f32 %v1748, 1.0
  %v1762 = vadd.f32 %v1750, 1.0
  %v1763 = vadd.f32 %v1752, 1.0
  %v1764 = vadd.f32 %v1754, 1.0
  %v1765 = vadd.f32 %v1756, 1.0
  %v1766 = vadd.f32 %v1758, 1.0
  %v1767 = vrcp.pop %v1759
  %v1768 = vmul.f32 1.0, %v1767
  %v1769 = vrcp.pop %v1760
  %v1770 = vmul.f32 1.0, %v1769
  %v1771 = vrcp.pop %v1761
  %v1772 = vmul.f32 1.0, %v1771
  %v1773 = vrcp.pop %v1762
  %v1774 = vmul.f32 1.0, %v1773
  %v1775 = vrcp.pop %v1763
  %v1776 = vmul.f32 1.0, %v1775
  %v1777 = vrcp.pop %v1764
  %v1778 = vmul.f32 1.0, %v1777
  %v1779 = vrcp.pop %v1765
  %v1780 = vmul.f32 1.0, %v1779
  %v1781 = vrcp.pop %v1766
  %v1782 = vmul.f32 1.0, %v1781
  %v1783 = vtanh.pop %v1727
  %v1784 = vtanh.pop %v1728
  %v1785 = vtanh.pop %v1729
  %v1786 = vtanh.pop %v1730
  %v1787 = vtanh.pop %v1731
  %v1788 = vtanh.pop %v1732
  %v1789 = vtanh.pop %v1733
  %v1790 = vtanh.pop %v1734
  %v1799 = vrot.slane %v1526, 7
  %v1800 = vrot.slane %v1527, 7
  %v1801 = vrot.slane %v1528, 7
  %v1802 = vrot.slane %v1529, 7
  %v1803 = vrot.slane %v1530, 7
  %v1804 = vrot.slane %v1531, 7
  %v1805 = vrot.slane %v1532, 7
  %v1806 = vrot.slane %v1533, 7
  %v1815 = vmul.f32 %v1768, %v1799
  %v1816 = vmul.f32 %v1770, %v1800
  %v1817 = vmul.f32 %v1772, %v1801
  %v1818 = vmul.f32 %v1774, %v1802
  %v1819 = vmul.f32 %v1776, %v1803
  %v1820 = vmul.f32 %v1778, %v1804
  %v1821 = vmul.f32 %v1780, %v1805
  %v1822 = vmul.f32 %v1782, %v1806
  %1831 = vrot.lane.b32.xlu0 %v1783, 64
  %v1832 = vpop.permute.xlu0 %1831
  %1833 = vrot.lane.b32.xlu0 %v1784, 64
  %v1834 = vpop.permute.xlu0 %1833
  %1835 = vrot.lane.b32.xlu0 %v1785, 64
  %v1836 = vpop.permute.xlu0 %1835
  %1837 = vrot.lane.b32.xlu0 %v1786, 64
  %v1838 = vpop.permute.xlu0 %1837
  %1839 = vrot.lane.b32.xlu0 %v1787, 64
  %v1840 = vpop.permute.xlu0 %1839
  %1841 = vrot.lane.b32.xlu0 %v1788, 64
  %v1842 = vpop.permute.xlu0 %1841
  %1843 = vrot.lane.b32.xlu0 %v1789, 64
  %v1844 = vpop.permute.xlu0 %1843
  %1845 = vrot.lane.b32.xlu0 %v1790, 64
  %v1846 = vpop.permute.xlu0 %1845
  %v1855 = vmul.f32 %v1768, %v1832
  %v1856 = vmul.f32 %v1770, %v1834
  %v1857 = vmul.f32 %v1772, %v1836
  %v1858 = vmul.f32 %v1774, %v1838
  %v1859 = vmul.f32 %v1776, %v1840
  %v1860 = vmul.f32 %v1778, %v1842
  %v1861 = vmul.f32 %v1780, %v1844
  %v1862 = vmul.f32 %v1782, %v1846
  %1871 = vrot.lane.b32.xlu0 %v1855, 32
  %v1872 = vpop.permute.xlu0 %1871
  %1873 = vrot.lane.b32.xlu0 %v1856, 32
  %v1874 = vpop.permute.xlu0 %1873
  %1875 = vrot.lane.b32.xlu0 %v1857, 32
  %v1876 = vpop.permute.xlu0 %1875
  %1877 = vrot.lane.b32.xlu0 %v1858, 32
  %v1878 = vpop.permute.xlu0 %1877
  %1879 = vrot.lane.b32.xlu0 %v1859, 32
  %v1880 = vpop.permute.xlu0 %1879
  %1881 = vrot.lane.b32.xlu0 %v1860, 32
  %v1882 = vpop.permute.xlu0 %1881
  %1883 = vrot.lane.b32.xlu0 %v1861, 32
  %v1884 = vpop.permute.xlu0 %1883
  %1885 = vrot.lane.b32.xlu0 %v1862, 32
  %v1886 = vpop.permute.xlu0 %1885
  %v1895 = vadd.f32 %v1815, %v1872
  %v1896 = vadd.f32 %v1816, %v1874
  %v1897 = vadd.f32 %v1817, %v1876
  %v1898 = vadd.f32 %v1818, %v1878
  %v1899 = vadd.f32 %v1819, %v1880
  %v1900 = vadd.f32 %v1820, %v1882
  %v1901 = vadd.f32 %v1821, %v1884
  %v1902 = vadd.f32 %v1822, %v1886
  %v1903 = vtanh.pop %v1895
  %v1904 = vtanh.pop %v1896
  %v1905 = vtanh.pop %v1897
  %v1906 = vtanh.pop %v1898
  %v1907 = vtanh.pop %v1899
  %v1908 = vtanh.pop %v1900
  %v1909 = vtanh.pop %v1901
  %v1910 = vtanh.pop %v1902
  %1919 = vrot.lane.b32.xlu0 %v1903, 64
  %v1920 = vpop.permute.xlu0 %1919
  %1921 = vrot.lane.b32.xlu0 %v1904, 64
  %v1922 = vpop.permute.xlu0 %1921
  %1923 = vrot.lane.b32.xlu0 %v1905, 64
  %v1924 = vpop.permute.xlu0 %1923
  %1925 = vrot.lane.b32.xlu0 %v1906, 64
  %v1926 = vpop.permute.xlu0 %1925
  %1927 = vrot.lane.b32.xlu0 %v1907, 64
  %v1928 = vpop.permute.xlu0 %1927
  %1929 = vrot.lane.b32.xlu0 %v1908, 64
  %v1930 = vpop.permute.xlu0 %1929
  %1931 = vrot.lane.b32.xlu0 %v1909, 64
  %v1932 = vpop.permute.xlu0 %1931
  %1933 = vrot.lane.b32.xlu0 %v1910, 64
  %v1934 = vpop.permute.xlu0 %1933
  %v1943 = vmul.f32 %v1768, %v1920
  %v1944 = vmul.f32 %v1770, %v1922
  %v1945 = vmul.f32 %v1772, %v1924
  %v1946 = vmul.f32 %v1774, %v1926
  %v1947 = vmul.f32 %v1776, %v1928
  %v1948 = vmul.f32 %v1778, %v1930
  %v1949 = vmul.f32 %v1780, %v1932
  %v1950 = vmul.f32 %v1782, %v1934
  %1959 = vrot.lane.b32.xlu0 %v1943, 32
  %v1960 = vpop.permute.xlu0 %1959
  %1961 = vrot.lane.b32.xlu0 %v1944, 32
  %v1962 = vpop.permute.xlu0 %1961
  %1963 = vrot.lane.b32.xlu0 %v1945, 32
  %v1964 = vpop.permute.xlu0 %1963
  %1965 = vrot.lane.b32.xlu0 %v1946, 32
  %v1966 = vpop.permute.xlu0 %1965
  %1967 = vrot.lane.b32.xlu0 %v1947, 32
  %v1968 = vpop.permute.xlu0 %1967
  %1969 = vrot.lane.b32.xlu0 %v1948, 32
  %v1970 = vpop.permute.xlu0 %1969
  %1971 = vrot.lane.b32.xlu0 %v1949, 32
  %v1972 = vpop.permute.xlu0 %1971
  %1973 = vrot.lane.b32.xlu0 %v1950, 32
  %v1974 = vpop.permute.xlu0 %1973
  %vm1983 = vcmask 258052
  %1984 = vst.msk [vmem:[#allocation2] sm:$0x10] %vm1983, %v1960
  %1985 = vst.msk [vmem:[#allocation2 + $0x8] sm:$0x10] %vm1983, %v1962
  %1986 = vst.msk [vmem:[#allocation2 + $0x10] sm:$0x10] %vm1983, %v1964
  %1987 = vst.msk [vmem:[#allocation2 + $0x18] sm:$0x10] %vm1983, %v1966
  %1988 = vst.msk [vmem:[#allocation2 + $0x20] sm:$0x10] %vm1983, %v1968
  %1989 = vst.msk [vmem:[#allocation2 + $0x28] sm:$0x10] %vm1983, %v1970
  %1990 = vst.msk [vmem:[#allocation2 + $0x30] sm:$0x10] %vm1983, %v1972
  %1991 = vst.msk [vmem:[#allocation2 + $0x38] sm:$0x10] %vm1983, %v1974
  %v1992 = vrot.slane %v1943, 4
  %v1993 = vrot.slane %v1944, 3
  %v1994 = vsel %vm510, %v1993, %v1992
  %v1995 = vrot.slane %v1945, 2
  %v1996 = vsel %vm513, %v1995, %v1994
  %v1997 = vrot.slane %v1946, 1
  %v1998 = vsel %vm516, %v1997, %v1996
  %v1999 = vsel %vm519, %v1947, %v1998
  %v2000 = vrot.slane %v1948, 7
  %v2001 = vsel %vm522, %v2000, %v1999
  %v2002 = vrot.slane %v1949, 6
  %v2003 = vsel %vm525, %v2002, %v2001
  %v2004 = vrot.slane %v1950, 5
  %v2005 = vsel %vm528, %v2004, %v2003
  %2006 = vrot.lane.b32.xlu0 %v2005, 32
  %v2007 = vpop.permute.xlu0 %2006
  %v2008 = vsel %vm49, %v2007, 0
  %2010 = vmatprep.subr.mxu0 0.0
  %2011 = vmatpush1.msra.mxu0 %v34
  %2012 = vmatprep.subr.mxu0 0.0
  %2013 = vmatpush1.msra.mxu0 %v35
  %2014 = vmatprep.subr.mxu0 0.0
  %2015 = vmatpush1.msra.mxu0 %v36
  %2016 = vmatprep.subr.mxu0 0.0
  %2017 = vmatpush1.msra.mxu0 %v37
  %2018 = vmatprep.subr.mxu0 0.0
  %2019 = vmatpush1.msra.mxu0 0.0
  %2020 = vmatprep.subr.mxu0 0.0
  %2021 = vmatpush1.msra.mxu0 0.0
  %2022 = vmatprep.subr.mxu0 0.0
  %2023 = vmatpush1.msra.mxu0 0.0
  %2024 = vmatprep.subr.mxu0 0.0
  %2025 = vmatpush1.msra.mxu0 0.0
  %2026 = vmatprep.subr.mxu0 0.0
  %2027 = vmatpush1.msra.mxu0 0.0
  %2028 = vmatprep.subr.mxu0 0.0
  %2029 = vmatpush1.msra.mxu0 0.0
  %2030 = vmatprep.subr.mxu0 0.0
  %2031 = vmatpush1.msra.mxu0 0.0
  %2032 = vmatprep.subr.mxu0 0.0
  %2033 = vmatpush1.msra.mxu0 0.0
  %2034 = vmatprep.subr.mxu0 0.0
  %2035 = vmatpush1.msra.mxu0 0.0
  %2036 = vmatprep.subr.mxu0 0.0
  %2037 = vmatpush1.msra.mxu0 0.0
  %2038 = vmatprep.subr.mxu0 0.0
  %2039 = vmatpush1.msra.mxu0 0.0
  %2040 = vmatprep.subr.mxu0 0.0
  %2041 = vmatpush1.msra.mxu0 0.0
  %2042 = vmatprep.subr.mxu0 0.0
  %2043 = vmatpush1.msra.mxu0 0.0
  %2044 = vmatprep.subr.mxu0 0.0
  %2045 = vmatpush1.msra.mxu0 0.0
  %2046 = vmatprep.subr.mxu0 0.0
  %2047 = vmatpush1.msra.mxu0 0.0
  %2048 = vmatprep.subr.mxu0 0.0
  %2049 = vmatpush1.msra.mxu0 0.0
  %2050 = vmatprep.subr.mxu0 0.0
  %2051 = vmatpush1.msra.mxu0 0.0
  %2052 = vmatprep.subr.mxu0 0.0
  %2053 = vmatpush1.msra.mxu0 0.0
  %2054 = vmatprep.subr.mxu0 0.0
  %2055 = vmatpush1.msra.mxu0 0.0
  %2056 = vmatprep.subr.mxu0 0.0
  %2057 = vmatpush1.msra.mxu0 0.0
  %2058 = vmatprep.subr.mxu0 0.0
  %2059 = vmatpush1.msra.mxu0 0.0
  %2060 = vmatprep.subr.mxu0 0.0
  %2061 = vmatpush1.msra.mxu0 0.0
  %2062 = vmatprep.subr.mxu0 0.0
  %2063 = vmatpush1.msra.mxu0 0.0
  %2064 = vmatprep.subr.mxu0 0.0
  %2065 = vmatpush1.msra.mxu0 0.0
  %2066 = vmatprep.subr.mxu0 0.0
  %2067 = vmatpush1.msra.mxu0 0.0
  %2068 = vmatprep.subr.mxu0 0.0
  %2069 = vmatpush1.msra.mxu0 0.0
  %2070 = vmatprep.subr.mxu0 0.0
  %2071 = vmatpush1.msra.mxu0 0.0
  %2072 = vmatprep.subr.mxu0 0.0
  %2073 = vmatpush1.msra.mxu0 0.0
  %2074 = vmatprep.mubr.f32.mxu0 0.0
  %2075 = vmatmul.mubr.f32.gmra.mrb[0].mxu0 %v2008
  %v2076 = vpop.f32.mrb[0].mxu0
  %v2077 = vadd.f32 0.0, %v2076
  %v2078 = vpop.f32.mrb[0].mxu0
  %2079 = vdwg.mxu0
  %v2081 = vrot.slane %v2077, 3
  %v2082 = vrot.slane %v2077, 4
  %v2083 = vrot.slane %v2077, 5
  %v2084 = vrot.slane %v2077, 6
  %v2085 = vrot.slane %v2077, 7
  %v2086 = vrot.slane %v2077, 1
  %v2087 = vrot.slane %v2077, 2
  %v2096 = vadd.f32 %v141, %v2081
  %v2097 = vadd.f32 %v146, %v2082
  %v2098 = vadd.f32 %v151, %v2083
  %v2099 = vadd.f32 %v156, %v2084
  %v2100 = vadd.f32 %v161, %v2085
  %v2101 = vadd.f32 %v166, %v2077
  %v2102 = vadd.f32 %v171, %v2086
  %v2103 = vadd.f32 %v176, %v2087
  %v2104 = vxor.u32 %v2096, 2147483648
  %v2105 = vxor.u32 %v2097, 2147483648
  %v2106 = vxor.u32 %v2098, 2147483648
  %v2107 = vxor.u32 %v2099, 2147483648
  %v2108 = vxor.u32 %v2100, 2147483648
  %v2109 = vxor.u32 %v2101, 2147483648
  %v2110 = vxor.u32 %v2102, 2147483648
  %v2111 = vxor.u32 %v2103, 2147483648
  %v2112 = vmul.f32 %v2104, 1.442695
  %v2113 = vpow.pop %v2112
  %v2114 = vmul.f32 %v2105, 1.442695
  %v2115 = vpow.pop %v2114
  %v2116 = vmul.f32 %v2106, 1.442695
  %v2117 = vpow.pop %v2116
  %v2118 = vmul.f32 %v2107, 1.442695
  %v2119 = vpow.pop %v2118
  %v2120 = vmul.f32 %v2108, 1.442695
  %v2121 = vpow.pop %v2120
  %v2122 = vmul.f32 %v2109, 1.442695
  %v2123 = vpow.pop %v2122
  %v2124 = vmul.f32 %v2110, 1.442695
  %v2125 = vpow.pop %v2124
  %v2126 = vmul.f32 %v2111, 1.442695
  %v2127 = vpow.pop %v2126
  %v2128 = vadd.f32 %v2113, 1.0
  %v2129 = vadd.f32 %v2115, 1.0
  %v2130 = vadd.f32 %v2117, 1.0
  %v2131 = vadd.f32 %v2119, 1.0
  %v2132 = vadd.f32 %v2121, 1.0
  %v2133 = vadd.f32 %v2123, 1.0
  %v2134 = vadd.f32 %v2125, 1.0
  %v2135 = vadd.f32 %v2127, 1.0
  %v2136 = vrcp.pop %v2128
  %v2137 = vmul.f32 1.0, %v2136
  %v2138 = vrcp.pop %v2129
  %v2139 = vmul.f32 1.0, %v2138
  %v2140 = vrcp.pop %v2130
  %v2141 = vmul.f32 1.0, %v2140
  %v2142 = vrcp.pop %v2131
  %v2143 = vmul.f32 1.0, %v2142
  %v2144 = vrcp.pop %v2132
  %v2145 = vmul.f32 1.0, %v2144
  %v2146 = vrcp.pop %v2133
  %v2147 = vmul.f32 1.0, %v2146
  %v2148 = vrcp.pop %v2134
  %v2149 = vmul.f32 1.0, %v2148
  %v2150 = vrcp.pop %v2135
  %v2151 = vmul.f32 1.0, %v2150
  %v2152 = vtanh.pop %v2096
  %v2153 = vtanh.pop %v2097
  %v2154 = vtanh.pop %v2098
  %v2155 = vtanh.pop %v2099
  %v2156 = vtanh.pop %v2100
  %v2157 = vtanh.pop %v2101
  %v2158 = vtanh.pop %v2102
  %v2159 = vtanh.pop %v2103
  %v2168 = vrot.slane %v1895, 7
  %v2169 = vrot.slane %v1896, 7
  %v2170 = vrot.slane %v1897, 7
  %v2171 = vrot.slane %v1898, 7
  %v2172 = vrot.slane %v1899, 7
  %v2173 = vrot.slane %v1900, 7
  %v2174 = vrot.slane %v1901, 7
  %v2175 = vrot.slane %v1902, 7
  %v2184 = vmul.f32 %v2137, %v2168
  %v2185 = vmul.f32 %v2139, %v2169
  %v2186 = vmul.f32 %v2141, %v2170
  %v2187 = vmul.f32 %v2143, %v2171
  %v2188 = vmul.f32 %v2145, %v2172
  %v2189 = vmul.f32 %v2147, %v2173
  %v2190 = vmul.f32 %v2149, %v2174
  %v2191 = vmul.f32 %v2151, %v2175
  %2200 = vrot.lane.b32.xlu0 %v2152, 64
  %v2201 = vpop.permute.xlu0 %2200
  %2202 = vrot.lane.b32.xlu0 %v2153, 64
  %v2203 = vpop.permute.xlu0 %2202
  %2204 = vrot.lane.b32.xlu0 %v2154, 64
  %v2205 = vpop.permute.xlu0 %2204
  %2206 = vrot.lane.b32.xlu0 %v2155, 64
  %v2207 = vpop.permute.xlu0 %2206
  %2208 = vrot.lane.b32.xlu0 %v2156, 64
  %v2209 = vpop.permute.xlu0 %2208
  %2210 = vrot.lane.b32.xlu0 %v2157, 64
  %v2211 = vpop.permute.xlu0 %2210
  %2212 = vrot.lane.b32.xlu0 %v2158, 64
  %v2213 = vpop.permute.xlu0 %2212
  %2214 = vrot.lane.b32.xlu0 %v2159, 64
  %v2215 = vpop.permute.xlu0 %2214
  %v2224 = vmul.f32 %v2137, %v2201
  %v2225 = vmul.f32 %v2139, %v2203
  %v2226 = vmul.f32 %v2141, %v2205
  %v2227 = vmul.f32 %v2143, %v2207
  %v2228 = vmul.f32 %v2145, %v2209
  %v2229 = vmul.f32 %v2147, %v2211
  %v2230 = vmul.f32 %v2149, %v2213
  %v2231 = vmul.f32 %v2151, %v2215
  %2240 = vrot.lane.b32.xlu0 %v2224, 32
  %v2241 = vpop.permute.xlu0 %2240
  %2242 = vrot.lane.b32.xlu0 %v2225, 32
  %v2243 = vpop.permute.xlu0 %2242
  %2244 = vrot.lane.b32.xlu0 %v2226, 32
  %v2245 = vpop.permute.xlu0 %2244
  %2246 = vrot.lane.b32.xlu0 %v2227, 32
  %v2247 = vpop.permute.xlu0 %2246
  %2248 = vrot.lane.b32.xlu0 %v2228, 32
  %v2249 = vpop.permute.xlu0 %2248
  %2250 = vrot.lane.b32.xlu0 %v2229, 32
  %v2251 = vpop.permute.xlu0 %2250
  %2252 = vrot.lane.b32.xlu0 %v2230, 32
  %v2253 = vpop.permute.xlu0 %2252
  %2254 = vrot.lane.b32.xlu0 %v2231, 32
  %v2255 = vpop.permute.xlu0 %2254
  %v2264 = vadd.f32 %v2184, %v2241
  %v2265 = vadd.f32 %v2185, %v2243
  %v2266 = vadd.f32 %v2186, %v2245
  %v2267 = vadd.f32 %v2187, %v2247
  %v2268 = vadd.f32 %v2188, %v2249
  %v2269 = vadd.f32 %v2189, %v2251
  %v2270 = vadd.f32 %v2190, %v2253
  %v2271 = vadd.f32 %v2191, %v2255
  %v2272 = vtanh.pop %v2264
  %v2273 = vtanh.pop %v2265
  %v2274 = vtanh.pop %v2266
  %v2275 = vtanh.pop %v2267
  %v2276 = vtanh.pop %v2268
  %v2277 = vtanh.pop %v2269
  %v2278 = vtanh.pop %v2270
  %v2279 = vtanh.pop %v2271
  %2288 = vrot.lane.b32.xlu0 %v2272, 64
  %v2289 = vpop.permute.xlu0 %2288
  %2290 = vrot.lane.b32.xlu0 %v2273, 64
  %v2291 = vpop.permute.xlu0 %2290
  %2292 = vrot.lane.b32.xlu0 %v2274, 64
  %v2293 = vpop.permute.xlu0 %2292
  %2294 = vrot.lane.b32.xlu0 %v2275, 64
  %v2295 = vpop.permute.xlu0 %2294
  %2296 = vrot.lane.b32.xlu0 %v2276, 64
  %v2297 = vpop.permute.xlu0 %2296
  %2298 = vrot.lane.b32.xlu0 %v2277, 64
  %v2299 = vpop.permute.xlu0 %2298
  %2300 = vrot.lane.b32.xlu0 %v2278, 64
  %v2301 = vpop.permute.xlu0 %2300
  %2302 = vrot.lane.b32.xlu0 %v2279, 64
  %v2303 = vpop.permute.xlu0 %2302
  %v2312 = vmul.f32 %v2137, %v2289
  %v2313 = vmul.f32 %v2139, %v2291
  %v2314 = vmul.f32 %v2141, %v2293
  %v2315 = vmul.f32 %v2143, %v2295
  %v2316 = vmul.f32 %v2145, %v2297
  %v2317 = vmul.f32 %v2147, %v2299
  %v2318 = vmul.f32 %v2149, %v2301
  %v2319 = vmul.f32 %v2151, %v2303
  %2328 = vrot.lane.b32.xlu0 %v2312, 32
  %v2329 = vpop.permute.xlu0 %2328
  %2330 = vrot.lane.b32.xlu0 %v2313, 32
  %v2331 = vpop.permute.xlu0 %2330
  %2332 = vrot.lane.b32.xlu0 %v2314, 32
  %v2333 = vpop.permute.xlu0 %2332
  %2334 = vrot.lane.b32.xlu0 %v2315, 32
  %v2335 = vpop.permute.xlu0 %2334
  %2336 = vrot.lane.b32.xlu0 %v2316, 32
  %v2337 = vpop.permute.xlu0 %2336
  %2338 = vrot.lane.b32.xlu0 %v2317, 32
  %v2339 = vpop.permute.xlu0 %2338
  %2340 = vrot.lane.b32.xlu0 %v2318, 32
  %v2341 = vpop.permute.xlu0 %2340
  %2342 = vrot.lane.b32.xlu0 %v2319, 32
  %v2343 = vpop.permute.xlu0 %2342
  %vm2352 = vcmask 259077
  %2353 = vst.msk [vmem:[#allocation2] sm:$0x20] %vm2352, %v2329
  %2354 = vst.msk [vmem:[#allocation2 + $0x8] sm:$0x20] %vm2352, %v2331
  %2355 = vst.msk [vmem:[#allocation2 + $0x10] sm:$0x20] %vm2352, %v2333
  %2356 = vst.msk [vmem:[#allocation2 + $0x18] sm:$0x20] %vm2352, %v2335
  %2357 = vst.msk [vmem:[#allocation2 + $0x20] sm:$0x20] %vm2352, %v2337
  %2358 = vst.msk [vmem:[#allocation2 + $0x28] sm:$0x20] %vm2352, %v2339
  %2359 = vst.msk [vmem:[#allocation2 + $0x30] sm:$0x20] %vm2352, %v2341
  %2360 = vst.msk [vmem:[#allocation2 + $0x38] sm:$0x20] %vm2352, %v2343
  %v2361 = vrot.slane %v2312, 5
  %v2362 = vrot.slane %v2313, 4
  %v2363 = vsel %vm510, %v2362, %v2361
  %v2364 = vrot.slane %v2314, 3
  %v2365 = vsel %vm513, %v2364, %v2363
  %v2366 = vrot.slane %v2315, 2
  %v2367 = vsel %vm516, %v2366, %v2365
  %v2368 = vrot.slane %v2316, 1
  %v2369 = vsel %vm519, %v2368, %v2367
  %v2370 = vsel %vm522, %v2317, %v2369
  %v2371 = vrot.slane %v2318, 7
  %v2372 = vsel %vm525, %v2371, %v2370
  %v2373 = vrot.slane %v2319, 6
  %v2374 = vsel %vm528, %v2373, %v2372
  %2375 = vrot.lane.b32.xlu0 %v2374, 32
  %v2376 = vpop.permute.xlu0 %2375
  %v2377 = vsel %vm49, %v2376, 0
  %2379 = vmatprep.subr.mxu0 0.0
  %2380 = vmatpush1.msra.mxu0 %v34
  %2381 = vmatprep.subr.mxu0 0.0
  %2382 = vmatpush1.msra.mxu0 %v35
  %2383 = vmatprep.subr.mxu0 0.0
  %2384 = vmatpush1.msra.mxu0 %v36
  %2385 = vmatprep.subr.mxu0 0.0
  %2386 = vmatpush1.msra.mxu0 %v37
  %2387 = vmatprep.subr.mxu0 0.0
  %2388 = vmatpush1.msra.mxu0 0.0
  %2389 = vmatprep.subr.mxu0 0.0
  %2390 = vmatpush1.msra.mxu0 0.0
  %2391 = vmatprep.subr.mxu0 0.0
  %2392 = vmatpush1.msra.mxu0 0.0
  %2393 = vmatprep.subr.mxu0 0.0
  %2394 = vmatpush1.msra.mxu0 0.0
  %2395 = vmatprep.subr.mxu0 0.0
  %2396 = vmatpush1.msra.mxu0 0.0
  %2397 = vmatprep.subr.mxu0 0.0
  %2398 = vmatpush1.msra.mxu0 0.0
  %2399 = vmatprep.subr.mxu0 0.0
  %2400 = vmatpush1.msra.mxu0 0.0
  %2401 = vmatprep.subr.mxu0 0.0
  %2402 = vmatpush1.msra.mxu0 0.0
  %2403 = vmatprep.subr.mxu0 0.0
  %2404 = vmatpush1.msra.mxu0 0.0
  %2405 = vmatprep.subr.mxu0 0.0
  %2406 = vmatpush1.msra.mxu0 0.0
  %2407 = vmatprep.subr.mxu0 0.0
  %2408 = vmatpush1.msra.mxu0 0.0
  %2409 = vmatprep.subr.mxu0 0.0
  %2410 = vmatpush1.msra.mxu0 0.0
  %2411 = vmatprep.subr.mxu0 0.0
  %2412 = vmatpush1.msra.mxu0 0.0
  %2413 = vmatprep.subr.mxu0 0.0
  %2414 = vmatpush1.msra.mxu0 0.0
  %2415 = vmatprep.subr.mxu0 0.0
  %2416 = vmatpush1.msra.mxu0 0.0
  %2417 = vmatprep.subr.mxu0 0.0
  %2418 = vmatpush1.msra.mxu0 0.0
  %2419 = vmatprep.subr.mxu0 0.0
  %2420 = vmatpush1.msra.mxu0 0.0
  %2421 = vmatprep.subr.mxu0 0.0
  %2422 = vmatpush1.msra.mxu0 0.0
  %2423 = vmatprep.subr.mxu0 0.0
  %2424 = vmatpush1.msra.mxu0 0.0
  %2425 = vmatprep.subr.mxu0 0.0
  %2426 = vmatpush1.msra.mxu0 0.0
  %2427 = vmatprep.subr.mxu0 0.0
  %2428 = vmatpush1.msra.mxu0 0.0
  %2429 = vmatprep.subr.mxu0 0.0
  %2430 = vmatpush1.msra.mxu0 0.0
  %2431 = vmatprep.subr.mxu0 0.0
  %2432 = vmatpush1.msra.mxu0 0.0
  %2433 = vmatprep.subr.mxu0 0.0
  %2434 = vmatpush1.msra.mxu0 0.0
  %2435 = vmatprep.subr.mxu0 0.0
  %2436 = vmatpush1.msra.mxu0 0.0
  %2437 = vmatprep.subr.mxu0 0.0
  %2438 = vmatpush1.msra.mxu0 0.0
  %2439 = vmatprep.subr.mxu0 0.0
  %2440 = vmatpush1.msra.mxu0 0.0
  %2441 = vmatprep.subr.mxu0 0.0
  %2442 = vmatpush1.msra.mxu0 0.0
  %2443 = vmatprep.mubr.f32.mxu0 0.0
  %2444 = vmatmul.mubr.f32.gmra.mrb[0].mxu0 %v2377
  %v2445 = vpop.f32.mrb[0].mxu0
  %v2446 = vadd.f32 0.0, %v2445
  %v2447 = vpop.f32.mrb[0].mxu0
  %2448 = vdwg.mxu0
  %v2450 = vrot.slane %v2446, 2
  %v2451 = vrot.slane %v2446, 3
  %v2452 = vrot.slane %v2446, 4
  %v2453 = vrot.slane %v2446, 5
  %v2454 = vrot.slane %v2446, 6
  %v2455 = vrot.slane %v2446, 7
  %v2456 = vrot.slane %v2446, 1
  %v2465 = vadd.f32 %v141, %v2450
  %v2466 = vadd.f32 %v146, %v2451
  %v2467 = vadd.f32 %v151, %v2452
  %v2468 = vadd.f32 %v156, %v2453
  %v2469 = vadd.f32 %v161, %v2454
  %v2470 = vadd.f32 %v166, %v2455
  %v2471 = vadd.f32 %v171, %v2446
  %v2472 = vadd.f32 %v176, %v2456
  %v2473 = vxor.u32 %v2465, 2147483648
  %v2474 = vxor.u32 %v2466, 2147483648
  %v2475 = vxor.u32 %v2467, 2147483648
  %v2476 = vxor.u32 %v2468, 2147483648
  %v2477 = vxor.u32 %v2469, 2147483648
  %v2478 = vxor.u32 %v2470, 2147483648
  %v2479 = vxor.u32 %v2471, 2147483648
  %v2480 = vxor.u32 %v2472, 2147483648
  %v2481 = vmul.f32 %v2473, 1.442695
  %v2482 = vpow.pop %v2481
  %v2483 = vmul.f32 %v2474, 1.442695
  %v2484 = vpow.pop %v2483
  %v2485 = vmul.f32 %v2475, 1.442695
  %v2486 = vpow.pop %v2485
  %v2487 = vmul.f32 %v2476, 1.442695
  %v2488 = vpow.pop %v2487
  %v2489 = vmul.f32 %v2477, 1.442695
  %v2490 = vpow.pop %v2489
  %v2491 = vmul.f32 %v2478, 1.442695
  %v2492 = vpow.pop %v2491
  %v2493 = vmul.f32 %v2479, 1.442695
  %v2494 = vpow.pop %v2493
  %v2495 = vmul.f32 %v2480, 1.442695
  %v2496 = vpow.pop %v2495
  %v2497 = vadd.f32 %v2482, 1.0
  %v2498 = vadd.f32 %v2484, 1.0
  %v2499 = vadd.f32 %v2486, 1.0
  %v2500 = vadd.f32 %v2488, 1.0
  %v2501 = vadd.f32 %v2490, 1.0
  %v2502 = vadd.f32 %v2492, 1.0
  %v2503 = vadd.f32 %v2494, 1.0
  %v2504 = vadd.f32 %v2496, 1.0
  %v2505 = vrcp.pop %v2497
  %v2506 = vmul.f32 1.0, %v2505
  %v2507 = vrcp.pop %v2498
  %v2508 = vmul.f32 1.0, %v2507
  %v2509 = vrcp.pop %v2499
  %v2510 = vmul.f32 1.0, %v2509
  %v2511 = vrcp.pop %v2500
  %v2512 = vmul.f32 1.0, %v2511
  %v2513 = vrcp.pop %v2501
  %v2514 = vmul.f32 1.0, %v2513
  %v2515 = vrcp.pop %v2502
  %v2516 = vmul.f32 1.0, %v2515
  %v2517 = vrcp.pop %v2503
  %v2518 = vmul.f32 1.0, %v2517
  %v2519 = vrcp.pop %v2504
  %v2520 = vmul.f32 1.0, %v2519
  %v2521 = vtanh.pop %v2465
  %v2522 = vtanh.pop %v2466
  %v2523 = vtanh.pop %v2467
  %v2524 = vtanh.pop %v2468
  %v2525 = vtanh.pop %v2469
  %v2526 = vtanh.pop %v2470
  %v2527 = vtanh.pop %v2471
  %v2528 = vtanh.pop %v2472
  %v2537 = vrot.slane %v2264, 7
  %v2538 = vrot.slane %v2265, 7
  %v2539 = vrot.slane %v2266, 7
  %v2540 = vrot.slane %v2267, 7
  %v2541 = vrot.slane %v2268, 7
  %v2542 = vrot.slane %v2269, 7
  %v2543 = vrot.slane %v2270, 7
  %v2544 = vrot.slane %v2271, 7
  %v2553 = vmul.f32 %v2506, %v2537
  %v2554 = vmul.f32 %v2508, %v2538
  %v2555 = vmul.f32 %v2510, %v2539
  %v2556 = vmul.f32 %v2512, %v2540
  %v2557 = vmul.f32 %v2514, %v2541
  %v2558 = vmul.f32 %v2516, %v2542
  %v2559 = vmul.f32 %v2518, %v2543
  %v2560 = vmul.f32 %v2520, %v2544
  %2569 = vrot.lane.b32.xlu0 %v2521, 64
  %v2570 = vpop.permute.xlu0 %2569
  %2571 = vrot.lane.b32.xlu0 %v2522, 64
  %v2572 = vpop.permute.xlu0 %2571
  %2573 = vrot.lane.b32.xlu0 %v2523, 64
  %v2574 = vpop.permute.xlu0 %2573
  %2575 = vrot.lane.b32.xlu0 %v2524, 64
  %v2576 = vpop.permute.xlu0 %2575
  %2577 = vrot.lane.b32.xlu0 %v2525, 64
  %v2578 = vpop.permute.xlu0 %2577
  %2579 = vrot.lane.b32.xlu0 %v2526, 64
  %v2580 = vpop.permute.xlu0 %2579
  %2581 = vrot.lane.b32.xlu0 %v2527, 64
  %v2582 = vpop.permute.xlu0 %2581
  %2583 = vrot.lane.b32.xlu0 %v2528, 64
  %v2584 = vpop.permute.xlu0 %2583
  %v2593 = vmul.f32 %v2506, %v2570
  %v2594 = vmul.f32 %v2508, %v2572
  %v2595 = vmul.f32 %v2510, %v2574
  %v2596 = vmul.f32 %v2512, %v2576
  %v2597 = vmul.f32 %v2514, %v2578
  %v2598 = vmul.f32 %v2516, %v2580
  %v2599 = vmul.f32 %v2518, %v2582
  %v2600 = vmul.f32 %v2520, %v2584
  %2609 = vrot.lane.b32.xlu0 %v2593, 32
  %v2610 = vpop.permute.xlu0 %2609
  %2611 = vrot.lane.b32.xlu0 %v2594, 32
  %v2612 = vpop.permute.xlu0 %2611
  %2613 = vrot.lane.b32.xlu0 %v2595, 32
  %v2614 = vpop.permute.xlu0 %2613
  %2615 = vrot.lane.b32.xlu0 %v2596, 32
  %v2616 = vpop.permute.xlu0 %2615
  %2617 = vrot.lane.b32.xlu0 %v2597, 32
  %v2618 = vpop.permute.xlu0 %2617
  %2619 = vrot.lane.b32.xlu0 %v2598, 32
  %v2620 = vpop.permute.xlu0 %2619
  %2621 = vrot.lane.b32.xlu0 %v2599, 32
  %v2622 = vpop.permute.xlu0 %2621
  %2623 = vrot.lane.b32.xlu0 %v2600, 32
  %v2624 = vpop.permute.xlu0 %2623
  %v2633 = vadd.f32 %v2553, %v2610
  %v2634 = vadd.f32 %v2554, %v2612
  %v2635 = vadd.f32 %v2555, %v2614
  %v2636 = vadd.f32 %v2556, %v2616
  %v2637 = vadd.f32 %v2557, %v2618
  %v2638 = vadd.f32 %v2558, %v2620
  %v2639 = vadd.f32 %v2559, %v2622
  %v2640 = vadd.f32 %v2560, %v2624
  %v2641 = vtanh.pop %v2633
  %v2642 = vtanh.pop %v2634
  %v2643 = vtanh.pop %v2635
  %v2644 = vtanh.pop %v2636
  %v2645 = vtanh.pop %v2637
  %v2646 = vtanh.pop %v2638
  %v2647 = vtanh.pop %v2639
  %v2648 = vtanh.pop %v2640
  %2657 = vrot.lane.b32.xlu0 %v2641, 64
  %v2658 = vpop.permute.xlu0 %2657
  %2659 = vrot.lane.b32.xlu0 %v2642, 64
  %v2660 = vpop.permute.xlu0 %2659
  %2661 = vrot.lane.b32.xlu0 %v2643, 64
  %v2662 = vpop.permute.xlu0 %2661
  %2663 = vrot.lane.b32.xlu0 %v2644, 64
  %v2664 = vpop.permute.xlu0 %2663
  %2665 = vrot.lane.b32.xlu0 %v2645, 64
  %v2666 = vpop.permute.xlu0 %2665
  %2667 = vrot.lane.b32.xlu0 %v2646, 64
  %v2668 = vpop.permute.xlu0 %2667
  %2669 = vrot.lane.b32.xlu0 %v2647, 64
  %v2670 = vpop.permute.xlu0 %2669
  %2671 = vrot.lane.b32.xlu0 %v2648, 64
  %v2672 = vpop.permute.xlu0 %2671
  %v2681 = vmul.f32 %v2506, %v2658
  %v2682 = vmul.f32 %v2508, %v2660
  %v2683 = vmul.f32 %v2510, %v2662
  %v2684 = vmul.f32 %v2512, %v2664
  %v2685 = vmul.f32 %v2514, %v2666
  %v2686 = vmul.f32 %v2516, %v2668
  %v2687 = vmul.f32 %v2518, %v2670
  %v2688 = vmul.f32 %v2520, %v2672
  %2697 = vrot.lane.b32.xlu0 %v2681, 32
  %v2698 = vpop.permute.xlu0 %2697
  %2699 = vrot.lane.b32.xlu0 %v2682, 32
  %v2700 = vpop.permute.xlu0 %2699
  %2701 = vrot.lane.b32.xlu0 %v2683, 32
  %v2702 = vpop.permute.xlu0 %2701
  %2703 = vrot.lane.b32.xlu0 %v2684, 32
  %v2704 = vpop.permute.xlu0 %2703
  %2705 = vrot.lane.b32.xlu0 %v2685, 32
  %v2706 = vpop.permute.xlu0 %2705
  %2707 = vrot.lane.b32.xlu0 %v2686, 32
  %v2708 = vpop.permute.xlu0 %2707
  %2709 = vrot.lane.b32.xlu0 %v2687, 32
  %v2710 = vpop.permute.xlu0 %2709
  %2711 = vrot.lane.b32.xlu0 %v2688, 32
  %v2712 = vpop.permute.xlu0 %2711
  %vm2721 = vcmask 260102
  %2722 = vst.msk [vmem:[#allocation2] sm:$0x40] %vm2721, %v2698
  %2723 = vst.msk [vmem:[#allocation2 + $0x8] sm:$0x40] %vm2721, %v2700
  %2724 = vst.msk [vmem:[#allocation2 + $0x10] sm:$0x40] %vm2721, %v2702
  %2725 = vst.msk [vmem:[#allocation2 + $0x18] sm:$0x40] %vm2721, %v2704
  %2726 = vst.msk [vmem:[#allocation2 + $0x20] sm:$0x40] %vm2721, %v2706
  %2727 = vst.msk [vmem:[#allocation2 + $0x28] sm:$0x40] %vm2721, %v2708
  %2728 = vst.msk [vmem:[#allocation2 + $0x30] sm:$0x40] %vm2721, %v2710
  %2729 = vst.msk [vmem:[#allocation2 + $0x38] sm:$0x40] %vm2721, %v2712
  %v2730 = vrot.slane %v2681, 6
  %v2731 = vrot.slane %v2682, 5
  %v2732 = vsel %vm510, %v2731, %v2730
  %v2733 = vrot.slane %v2683, 4
  %v2734 = vsel %vm513, %v2733, %v2732
  %v2735 = vrot.slane %v2684, 3
  %v2736 = vsel %vm516, %v2735, %v2734
  %v2737 = vrot.slane %v2685, 2
  %v2738 = vsel %vm519, %v2737, %v2736
  %v2739 = vrot.slane %v2686, 1
  %v2740 = vsel %vm522, %v2739, %v2738
  %v2741 = vsel %vm525, %v2687, %v2740
  %v2742 = vrot.slane %v2688, 7
  %v2743 = vsel %vm528, %v2742, %v2741
  %2744 = vrot.lane.b32.xlu0 %v2743, 32
  %v2745 = vpop.permute.xlu0 %2744
  %v2746 = vsel %vm49, %v2745, 0
  %2748 = vmatprep.subr.mxu0 0.0
  %2749 = vmatpush1.msra.mxu0 %v34
  %2750 = vmatprep.subr.mxu0 0.0
  %2751 = vmatpush1.msra.mxu0 %v35
  %2752 = vmatprep.subr.mxu0 0.0
  %2753 = vmatpush1.msra.mxu0 %v36
  %2754 = vmatprep.subr.mxu0 0.0
  %2755 = vmatpush1.msra.mxu0 %v37
  %2756 = vmatprep.subr.mxu0 0.0
  %2757 = vmatpush1.msra.mxu0 0.0
  %2758 = vmatprep.subr.mxu0 0.0
  %2759 = vmatpush1.msra.mxu0 0.0
  %2760 = vmatprep.subr.mxu0 0.0
  %2761 = vmatpush1.msra.mxu0 0.0
  %2762 = vmatprep.subr.mxu0 0.0
  %2763 = vmatpush1.msra.mxu0 0.0
  %2764 = vmatprep.subr.mxu0 0.0
  %2765 = vmatpush1.msra.mxu0 0.0
  %2766 = vmatprep.subr.mxu0 0.0
  %2767 = vmatpush1.msra.mxu0 0.0
  %2768 = vmatprep.subr.mxu0 0.0
  %2769 = vmatpush1.msra.mxu0 0.0
  %2770 = vmatprep.subr.mxu0 0.0
  %2771 = vmatpush1.msra.mxu0 0.0
  %2772 = vmatprep.subr.mxu0 0.0
  %2773 = vmatpush1.msra.mxu0 0.0
  %2774 = vmatprep.subr.mxu0 0.0
  %2775 = vmatpush1.msra.mxu0 0.0
  %2776 = vmatprep.subr.mxu0 0.0
  %2777 = vmatpush1.msra.mxu0 0.0
  %2778 = vmatprep.subr.mxu0 0.0
  %2779 = vmatpush1.msra.mxu0 0.0
  %2780 = vmatprep.subr.mxu0 0.0
  %2781 = vmatpush1.msra.mxu0 0.0
  %2782 = vmatprep.subr.mxu0 0.0
  %2783 = vmatpush1.msra.mxu0 0.0
  %2784 = vmatprep.subr.mxu0 0.0
  %2785 = vmatpush1.msra.mxu0 0.0
  %2786 = vmatprep.subr.mxu0 0.0
  %2787 = vmatpush1.msra.mxu0 0.0
  %2788 = vmatprep.subr.mxu0 0.0
  %2789 = vmatpush1.msra.mxu0 0.0
  %2790 = vmatprep.subr.mxu0 0.0
  %2791 = vmatpush1.msra.mxu0 0.0
  %2792 = vmatprep.subr.mxu0 0.0
  %2793 = vmatpush1.msra.mxu0 0.0
  %2794 = vmatprep.subr.mxu0 0.0
  %2795 = vmatpush1.msra.mxu0 0.0
  %2796 = vmatprep.subr.mxu0 0.0
  %2797 = vmatpush1.msra.mxu0 0.0
  %2798 = vmatprep.subr.mxu0 0.0
  %2799 = vmatpush1.msra.mxu0 0.0
  %2800 = vmatprep.subr.mxu0 0.0
  %2801 = vmatpush1.msra.mxu0 0.0
  %2802 = vmatprep.subr.mxu0 0.0
  %2803 = vmatpush1.msra.mxu0 0.0
  %2804 = vmatprep.subr.mxu0 0.0
  %2805 = vmatpush1.msra.mxu0 0.0
  %2806 = vmatprep.subr.mxu0 0.0
  %2807 = vmatpush1.msra.mxu0 0.0
  %2808 = vmatprep.subr.mxu0 0.0
  %2809 = vmatpush1.msra.mxu0 0.0
  %2810 = vmatprep.subr.mxu0 0.0
  %2811 = vmatpush1.msra.mxu0 0.0
  %2812 = vmatprep.mubr.f32.mxu0 0.0
  %2813 = vmatmul.mubr.f32.gmra.mrb[0].mxu0 %v2746
  %v2814 = vpop.f32.mrb[0].mxu0
  %v2815 = vadd.f32 0.0, %v2814
  %v2816 = vpop.f32.mrb[0].mxu0
  %2817 = vdwg.mxu0
  %v2819 = vrot.slane %v2815, 1
  %v2820 = vrot.slane %v2815, 2
  %v2821 = vrot.slane %v2815, 3
  %v2822 = vrot.slane %v2815, 4
  %v2823 = vrot.slane %v2815, 5
  %v2824 = vrot.slane %v2815, 6
  %v2825 = vrot.slane %v2815, 7
  %v2834 = vadd.f32 %v141, %v2819
  %v2835 = vadd.f32 %v146, %v2820
  %v2836 = vadd.f32 %v151, %v2821
  %v2837 = vadd.f32 %v156, %v2822
  %v2838 = vadd.f32 %v161, %v2823
  %v2839 = vadd.f32 %v166, %v2824
  %v2840 = vadd.f32 %v171, %v2825
  %v2841 = vadd.f32 %v176, %v2815
  %v2842 = vxor.u32 %v2834, 2147483648
  %v2843 = vxor.u32 %v2835, 2147483648
  %v2844 = vxor.u32 %v2836, 2147483648
  %v2845 = vxor.u32 %v2837, 2147483648
  %v2846 = vxor.u32 %v2838, 2147483648
  %v2847 = vxor.u32 %v2839, 2147483648
  %v2848 = vxor.u32 %v2840, 2147483648
  %v2849 = vxor.u32 %v2841, 2147483648
  %v2850 = vmul.f32 %v2842, 1.442695
  %v2851 = vpow.pop %v2850
  %v2852 = vmul.f32 %v2843, 1.442695
  %v2853 = vpow.pop %v2852
  %v2854 = vmul.f32 %v2844, 1.442695
  %v2855 = vpow.pop %v2854
  %v2856 = vmul.f32 %v2845, 1.442695
  %v2857 = vpow.pop %v2856
  %v2858 = vmul.f32 %v2846, 1.442695
  %v2859 = vpow.pop %v2858
  %v2860 = vmul.f32 %v2847, 1.442695
  %v2861 = vpow.pop %v2860
  %v2862 = vmul.f32 %v2848, 1.442695
  %v2863 = vpow.pop %v2862
  %v2864 = vmul.f32 %v2849, 1.442695
  %v2865 = vpow.pop %v2864
  %v2866 = vadd.f32 %v2851, 1.0
  %v2867 = vadd.f32 %v2853, 1.0
  %v2868 = vadd.f32 %v2855, 1.0
  %v2869 = vadd.f32 %v2857, 1.0
  %v2870 = vadd.f32 %v2859, 1.0
  %v2871 = vadd.f32 %v2861, 1.0
  %v2872 = vadd.f32 %v2863, 1.0
  %v2873 = vadd.f32 %v2865, 1.0
  %v2874 = vrcp.pop %v2866
  %v2875 = vmul.f32 1.0, %v2874
  %v2876 = vrcp.pop %v2867
  %v2877 = vmul.f32 1.0, %v2876
  %v2878 = vrcp.pop %v2868
  %v2879 = vmul.f32 1.0, %v2878
  %v2880 = vrcp.pop %v2869
  %v2881 = vmul.f32 1.0, %v2880
  %v2882 = vrcp.pop %v2870
  %v2883 = vmul.f32 1.0, %v2882
  %v2884 = vrcp.pop %v2871
  %v2885 = vmul.f32 1.0, %v2884
  %v2886 = vrcp.pop %v2872
  %v2887 = vmul.f32 1.0, %v2886
  %v2888 = vrcp.pop %v2873
  %v2889 = vmul.f32 1.0, %v2888
  %v2890 = vtanh.pop %v2834
  %v2891 = vtanh.pop %v2835
  %v2892 = vtanh.pop %v2836
  %v2893 = vtanh.pop %v2837
  %v2894 = vtanh.pop %v2838
  %v2895 = vtanh.pop %v2839
  %v2896 = vtanh.pop %v2840
  %v2897 = vtanh.pop %v2841
  %v2906 = vrot.slane %v2633, 7
  %v2907 = vrot.slane %v2634, 7
  %v2908 = vrot.slane %v2635, 7
  %v2909 = vrot.slane %v2636, 7
  %v2910 = vrot.slane %v2637, 7
  %v2911 = vrot.slane %v2638, 7
  %v2912 = vrot.slane %v2639, 7
  %v2913 = vrot.slane %v2640, 7
  %v2922 = vmul.f32 %v2875, %v2906
  %v2923 = vmul.f32 %v2877, %v2907
  %v2924 = vmul.f32 %v2879, %v2908
  %v2925 = vmul.f32 %v2881, %v2909
  %v2926 = vmul.f32 %v2883, %v2910
  %v2927 = vmul.f32 %v2885, %v2911
  %v2928 = vmul.f32 %v2887, %v2912
  %v2929 = vmul.f32 %v2889, %v2913
  %2938 = vrot.lane.b32.xlu0 %v2890, 64
  %v2939 = vpop.permute.xlu0 %2938
  %2940 = vrot.lane.b32.xlu0 %v2891, 64
  %v2941 = vpop.permute.xlu0 %2940
  %2942 = vrot.lane.b32.xlu0 %v2892, 64
  %v2943 = vpop.permute.xlu0 %2942
  %2944 = vrot.lane.b32.xlu0 %v2893, 64
  %v2945 = vpop.permute.xlu0 %2944
  %2946 = vrot.lane.b32.xlu0 %v2894, 64
  %v2947 = vpop.permute.xlu0 %2946
  %2948 = vrot.lane.b32.xlu0 %v2895, 64
  %v2949 = vpop.permute.xlu0 %2948
  %2950 = vrot.lane.b32.xlu0 %v2896, 64
  %v2951 = vpop.permute.xlu0 %2950
  %2952 = vrot.lane.b32.xlu0 %v2897, 64
  %v2953 = vpop.permute.xlu0 %2952
  %v2962 = vmul.f32 %v2875, %v2939
  %v2963 = vmul.f32 %v2877, %v2941
  %v2964 = vmul.f32 %v2879, %v2943
  %v2965 = vmul.f32 %v2881, %v2945
  %v2966 = vmul.f32 %v2883, %v2947
  %v2967 = vmul.f32 %v2885, %v2949
  %v2968 = vmul.f32 %v2887, %v2951
  %v2969 = vmul.f32 %v2889, %v2953
  %2978 = vrot.lane.b32.xlu0 %v2962, 32
  %v2979 = vpop.permute.xlu0 %2978
  %2980 = vrot.lane.b32.xlu0 %v2963, 32
  %v2981 = vpop.permute.xlu0 %2980
  %2982 = vrot.lane.b32.xlu0 %v2964, 32
  %v2983 = vpop.permute.xlu0 %2982
  %2984 = vrot.lane.b32.xlu0 %v2965, 32
  %v2985 = vpop.permute.xlu0 %2984
  %2986 = vrot.lane.b32.xlu0 %v2966, 32
  %v2987 = vpop.permute.xlu0 %2986
  %2988 = vrot.lane.b32.xlu0 %v2967, 32
  %v2989 = vpop.permute.xlu0 %2988
  %2990 = vrot.lane.b32.xlu0 %v2968, 32
  %v2991 = vpop.permute.xlu0 %2990
  %2992 = vrot.lane.b32.xlu0 %v2969, 32
  %v2993 = vpop.permute.xlu0 %2992
  %v3002 = vadd.f32 %v2922, %v2979
  %v3003 = vadd.f32 %v2923, %v2981
  %v3004 = vadd.f32 %v2924, %v2983
  %v3005 = vadd.f32 %v2925, %v2985
  %v3006 = vadd.f32 %v2926, %v2987
  %v3007 = vadd.f32 %v2927, %v2989
  %v3008 = vadd.f32 %v2928, %v2991
  %v3009 = vadd.f32 %v2929, %v2993
  %v3010 = vtanh.pop %v3002
  %v3011 = vtanh.pop %v3003
  %v3012 = vtanh.pop %v3004
  %v3013 = vtanh.pop %v3005
  %v3014 = vtanh.pop %v3006
  %v3015 = vtanh.pop %v3007
  %v3016 = vtanh.pop %v3008
  %v3017 = vtanh.pop %v3009
  %3026 = vrot.lane.b32.xlu0 %v3010, 64
  %v3027 = vpop.permute.xlu0 %3026
  %3028 = vrot.lane.b32.xlu0 %v3011, 64
  %v3029 = vpop.permute.xlu0 %3028
  %3030 = vrot.lane.b32.xlu0 %v3012, 64
  %v3031 = vpop.permute.xlu0 %3030
  %3032 = vrot.lane.b32.xlu0 %v3013, 64
  %v3033 = vpop.permute.xlu0 %3032
  %3034 = vrot.lane.b32.xlu0 %v3014, 64
  %v3035 = vpop.permute.xlu0 %3034
  %3036 = vrot.lane.b32.xlu0 %v3015, 64
  %v3037 = vpop.permute.xlu0 %3036
  %3038 = vrot.lane.b32.xlu0 %v3016, 64
  %v3039 = vpop.permute.xlu0 %3038
  %3040 = vrot.lane.b32.xlu0 %v3017, 64
  %v3041 = vpop.permute.xlu0 %3040
  %v3050 = vmul.f32 %v2875, %v3027
  %v3051 = vmul.f32 %v2877, %v3029
  %v3052 = vmul.f32 %v2879, %v3031
  %v3053 = vmul.f32 %v2881, %v3033
  %v3054 = vmul.f32 %v2883, %v3035
  %v3055 = vmul.f32 %v2885, %v3037
  %v3056 = vmul.f32 %v2887, %v3039
  %v3057 = vmul.f32 %v2889, %v3041
  %3066 = vrot.lane.b32.xlu0 %v3050, 32
  %v3067 = vpop.permute.xlu0 %3066
  %3068 = vrot.lane.b32.xlu0 %v3051, 32
  %v3069 = vpop.permute.xlu0 %3068
  %3070 = vrot.lane.b32.xlu0 %v3052, 32
  %v3071 = vpop.permute.xlu0 %3070
  %3072 = vrot.lane.b32.xlu0 %v3053, 32
  %v3073 = vpop.permute.xlu0 %3072
  %3074 = vrot.lane.b32.xlu0 %v3054, 32
  %v3075 = vpop.permute.xlu0 %3074
  %3076 = vrot.lane.b32.xlu0 %v3055, 32
  %v3077 = vpop.permute.xlu0 %3076
  %3078 = vrot.lane.b32.xlu0 %v3056, 32
  %v3079 = vpop.permute.xlu0 %3078
  %3080 = vrot.lane.b32.xlu0 %v3057, 32
  %v3081 = vpop.permute.xlu0 %3080
  %vm3090 = vcmask 261127
  %3091 = vst.msk [vmem:[#allocation2] sm:$0x80] %vm3090, %v3067
  %3092 = vst.msk [vmem:[#allocation2 + $0x8] sm:$0x80] %vm3090, %v3069
  %3093 = vst.msk [vmem:[#allocation2 + $0x10] sm:$0x80] %vm3090, %v3071
  %3094 = vst.msk [vmem:[#allocation2 + $0x18] sm:$0x80] %vm3090, %v3073
  %3095 = vst.msk [vmem:[#allocation2 + $0x20] sm:$0x80] %vm3090, %v3075
  %3096 = vst.msk [vmem:[#allocation2 + $0x28] sm:$0x80] %vm3090, %v3077
  %3097 = vst.msk [vmem:[#allocation2 + $0x30] sm:$0x80] %vm3090, %v3079
  %3098 = vst.msk [vmem:[#allocation2 + $0x38] sm:$0x80] %vm3090, %v3081
  %v3099 = vld [vmem:[#allocation2] sm:$0xff]
  %v3100 = vld [vmem:[#allocation2 + $0x8] sm:$0xff]
  %v3101 = vld [vmem:[#allocation2 + $0x10] sm:$0xff]
  %v3102 = vld [vmem:[#allocation2 + $0x18] sm:$0xff]
  %v3103 = vld [vmem:[#allocation2 + $0x20] sm:$0xff]
  %v3104 = vld [vmem:[#allocation2 + $0x28] sm:$0xff]
  %v3105 = vld [vmem:[#allocation2 + $0x30] sm:$0xff]
  %v3106 = vld [vmem:[#allocation2 + $0x38] sm:$0xff]
  %v3107 = vld [vmem:[%s4] sm:$0xff]
  %v3108 = vld [vmem:[%s4 + $0x8] sm:$0xff]
  %v3109 = vld [vmem:[%s4 + $0x10] sm:$0xff]
  %v3110 = vld [vmem:[%s4 + $0x18] sm:$0xff]
  %v3111 = vld [vmem:[%s5] sm:$0x1]
  %v3113 = vlaneseq
  %v3114 = vshrl.u32 %v3113, 7
  %v3115 = vsub.s32 0, %v3114
  %v3116 = vrot.slane %v3111, %v3115
  %v3119 = vsel %vm49, %v3099, 0
  %v3122 = vsel %vm49, %v3100, 0
  %v3125 = vsel %vm49, %v3101, 0
  %v3128 = vsel %vm49, %v3102, 0
  %v3131 = vsel %vm49, %v3103, 0
  %v3134 = vsel %vm49, %v3104, 0
  %v3137 = vsel %vm49, %v3105, 0
  %v3140 = vsel %vm49, %v3106, 0
  %3142 = vmatprep.subr.mxu0 0.0
  %3143 = vmatpush1.msra.mxu0 %v3107
  %3144 = vmatprep.subr.mxu0 0.0
  %3145 = vmatpush1.msra.mxu0 %v3108
  %3146 = vmatprep.subr.mxu0 0.0
  %3147 = vmatpush1.msra.mxu0 %v3109
  %3148 = vmatprep.subr.mxu0 0.0
  %3149 = vmatpush1.msra.mxu0 %v3110
  %3150 = vmatprep.subr.mxu0 0.0
  %3151 = vmatpush1.msra.mxu0 0.0
  %3152 = vmatprep.subr.mxu0 0.0
  %3153 = vmatpush1.msra.mxu0 0.0
  %3154 = vmatprep.subr.mxu0 0.0
  %3155 = vmatpush1.msra.mxu0 0.0
  %3156 = vmatprep.subr.mxu0 0.0
  %3157 = vmatpush1.msra.mxu0 0.0
  %3158 = vmatprep.subr.mxu0 0.0
  %3159 = vmatpush1.msra.mxu0 0.0
  %3160 = vmatprep.subr.mxu0 0.0
  %3161 = vmatpush1.msra.mxu0 0.0
  %3162 = vmatprep.subr.mxu0 0.0
  %3163 = vmatpush1.msra.mxu0 0.0
  %3164 = vmatprep.subr.mxu0 0.0
  %3165 = vmatpush1.msra.mxu0 0.0
  %3166 = vmatprep.subr.mxu0 0.0
  %3167 = vmatpush1.msra.mxu0 0.0
  %3168 = vmatprep.subr.mxu0 0.0
  %3169 = vmatpush1.msra.mxu0 0.0
  %3170 = vmatprep.subr.mxu0 0.0
  %3171 = vmatpush1.msra.mxu0 0.0
  %3172 = vmatprep.subr.mxu0 0.0
  %3173 = vmatpush1.msra.mxu0 0.0
  %3174 = vmatprep.subr.mxu0 0.0
  %3175 = vmatpush1.msra.mxu0 0.0
  %3176 = vmatprep.subr.mxu0 0.0
  %3177 = vmatpush1.msra.mxu0 0.0
  %3178 = vmatprep.subr.mxu0 0.0
  %3179 = vmatpush1.msra.mxu0 0.0
  %3180 = vmatprep.subr.mxu0 0.0
  %3181 = vmatpush1.msra.mxu0 0.0
  %3182 = vmatprep.subr.mxu0 0.0
  %3183 = vmatpush1.msra.mxu0 0.0
  %3184 = vmatprep.subr.mxu0 0.0
  %3185 = vmatpush1.msra.mxu0 0.0
  %3186 = vmatprep.subr.mxu0 0.0
  %3187 = vmatpush1.msra.mxu0 0.0
  %3188 = vmatprep.subr.mxu0 0.0
  %3189 = vmatpush1.msra.mxu0 0.0
  %3190 = vmatprep.subr.mxu0 0.0
  %3191 = vmatpush1.msra.mxu0 0.0
  %3192 = vmatprep.subr.mxu0 0.0
  %3193 = vmatpush1.msra.mxu0 0.0
  %3194 = vmatprep.subr.mxu0 0.0
  %3195 = vmatpush1.msra.mxu0 0.0
  %3196 = vmatprep.subr.mxu0 0.0
  %3197 = vmatpush1.msra.mxu0 0.0
  %3198 = vmatprep.subr.mxu0 0.0
  %3199 = vmatpush1.msra.mxu0 0.0
  %3200 = vmatprep.subr.mxu0 0.0
  %3201 = vmatpush1.msra.mxu0 0.0
  %3202 = vmatprep.subr.mxu0 0.0
  %3203 = vmatpush1.msra.mxu0 0.0
  %3204 = vmatprep.subr.mxu0 0.0
  %3205 = vmatpush1.msra.mxu0 0.0
  %3206 = vmatprep.mubr.f32.mxu0 0.0
  %3207 = vmatmul.mubr.f32.gmra.mrb[0].mxu0 %v3119
  %v3208 = vpop.f32.mrb[0].mxu0
  %v3209 = vadd.f32 %v3116, %v3208
  %v3210 = vpop.f32.mrb[0].mxu0
  %3211 = vmatprep.mubr.f32.mxu0 0.0
  %3212 = vmatmul.mubr.f32.gmra.mrb[0].mxu0 %v3122
  %v3213 = vpop.f32.mrb[0].mxu0
  %v3214 = vadd.f32 %v3116, %v3213
  %v3215 = vpop.f32.mrb[0].mxu0
  %3216 = vmatprep.mubr.f32.mxu0 0.0
  %3217 = vmatmul.mubr.f32.gmra.mrb[0].mxu0 %v3125
  %v3218 = vpop.f32.mrb[0].mxu0
  %v3219 = vadd.f32 %v3116, %v3218
  %v3220 = vpop.f32.mrb[0].mxu0
  %3221 = vmatprep.mubr.f32.mxu0 0.0
  %3222 = vmatmul.mubr.f32.gmra.mrb[0].mxu0 %v3128
  %v3223 = vpop.f32.mrb[0].mxu0
  %v3224 = vadd.f32 %v3116, %v3223
  %v3225 = vpop.f32.mrb[0].mxu0
  %3226 = vmatprep.mubr.f32.mxu0 0.0
  %3227 = vmatmul.mubr.f32.gmra.mrb[0].mxu0 %v3131
  %v3228 = vpop.f32.mrb[0].mxu0
  %v3229 = vadd.f32 %v3116, %v3228
  %v3230 = vpop.f32.mrb[0].mxu0
  %3231 = vmatprep.mubr.f32.mxu0 0.0
  %3232 = vmatmul.mubr.f32.gmra.mrb[0].mxu0 %v3134
  %v3233 = vpop.f32.mrb[0].mxu0
  %v3234 = vadd.f32 %v3116, %v3233
  %v3235 = vpop.f32.mrb[0].mxu0
  %3236 = vmatprep.mubr.f32.mxu0 0.0
  %3237 = vmatmul.mubr.f32.gmra.mrb[0].mxu0 %v3137
  %v3238 = vpop.f32.mrb[0].mxu0
  %v3239 = vadd.f32 %v3116, %v3238
  %v3240 = vpop.f32.mrb[0].mxu0
  %3241 = vmatprep.mubr.f32.mxu0 0.0
  %3242 = vmatmul.mubr.f32.gmra.mrb[0].mxu0 %v3140
  %v3243 = vpop.f32.mrb[0].mxu0
  %v3244 = vadd.f32 %v3116, %v3243
  %v3245 = vpop.f32.mrb[0].mxu0
  %3246 = vdwg.mxu0
  %v3247 = vadd.f32 %v26, %v3209
  %v3248 = vadd.f32 %v27, %v3214
  %v3249 = vadd.f32 %v28, %v3219
  %v3250 = vadd.f32 %v29, %v3224
  %v3251 = vadd.f32 %v30, %v3229
  %v3252 = vadd.f32 %v31, %v3234
  %v3253 = vadd.f32 %v32, %v3239
  %v3254 = vadd.f32 %v33, %v3244
  %3255 = vst.msk [vmem:[%s6] sm:$0xff] %vm49, %v3247
  %3256 = vst.msk [vmem:[%s6 + $0x8] sm:$0xff] %vm49, %v3248
  %3257 = vst.msk [vmem:[%s6 + $0x10] sm:$0xff] %vm49, %v3249
  %3258 = vst.msk [vmem:[%s6 + $0x18] sm:$0xff] %vm49, %v3250
  %3259 = vst.msk [vmem:[%s6 + $0x20] sm:$0xff] %vm49, %v3251
  %3260 = vst.msk [vmem:[%s6 + $0x28] sm:$0xff] %vm49, %v3252
  %3261 = vst.msk [vmem:[%s6 + $0x30] sm:$0xff] %vm49, %v3253
  %3262 = vst.msk [vmem:[%s6 + $0x38] sm:$0xff] %vm49, %v3254
  %v3263 = vrot.slane %v3051, 7
  %v3264 = vrot.slane %v3052, 6
  %v3265 = vsel %vm510, %v3264, %v3263
  %v3266 = vrot.slane %v3053, 5
  %v3267 = vsel %vm513, %v3266, %v3265
  %v3268 = vrot.slane %v3054, 4
  %v3269 = vsel %vm516, %v3268, %v3267
  %v3270 = vrot.slane %v3055, 3
  %v3271 = vsel %vm519, %v3270, %v3269
  %v3272 = vrot.slane %v3056, 2
  %v3273 = vsel %vm522, %v3272, %v3271
  %v3274 = vrot.slane %v3057, 1
  %v3275 = vsel %vm525, %v3274, %v3273
  %3276 = vrot.lane.b32.xlu0 %v3275, 32
  %v3277 = vpop.permute.xlu0 %3276
  %3279 = vst.msk [vmem:[%s7 - $0x7] sm:$0x80] %vm3090, %v3067
  %vm3280 = vcmask 260096
  %3281 = vst.msk [vmem:[%s7 + $0x1] sm:$0x7f] %vm3280, %v3277
  %v3290 = vrot.slane %v3003, 7
  %v3291 = vrot.slane %v3004, 6
  %v3292 = vsel %vm510, %v3291, %v3290
  %v3293 = vrot.slane %v3005, 5
  %v3294 = vsel %vm513, %v3293, %v3292
  %v3295 = vrot.slane %v3006, 4
  %v3296 = vsel %vm516, %v3295, %v3294
  %v3297 = vrot.slane %v3007, 3
  %v3298 = vsel %vm519, %v3297, %v3296
  %v3299 = vrot.slane %v3008, 2
  %v3300 = vsel %vm522, %v3299, %v3298
  %v3301 = vrot.slane %v3009, 1
  %v3302 = vsel %vm525, %v3301, %v3300
  %3303 = vrot.lane.b32.xlu0 %v3002, 96
  %v3304 = vpop.permute.xlu0 %3303
  %3305 = vrot.lane.b32.xlu0 %v3302, 96
  %v3306 = vpop.permute.xlu0 %3305
  %3309 = vst.msk [vmem:[%s8 - $0x7] sm:$0x80] %vm3090, %v3304
  %3310 = vst.msk [vmem:[%s8 + $0x1] sm:$0x7f] %vm3280, %v3306
  // Predicated region
  $region26: #{residual_lstm_forward.1} parent=0 // pred_check
    _
  $region27: #{residual_lstm_forward.1} parent=0 // pred_check_branch
    %3312 = sbr.rel (0) target = $region29
  $region28: #{residual_lstm_forward.1} parent=0 // pred_region
    _
  $region29: #{residual_lstm_forward.1} parent=0 // pred_fallthru
    _
  // Predicated region
  $region30: #{residual_lstm_forward.1} parent=0 // pred_check
    _
  $region31: #{residual_lstm_forward.1} parent=0 // pred_check_branch
    %3314 = sbr.rel (0) target = $region33
  $region32: #{residual_lstm_forward.1} parent=0 // pred_region
    _
  $region33: #{residual_lstm_forward.1} parent=0 // pred_fallthru
    _
  // Predicated region
  $region34: #{residual_lstm_forward.1} parent=0 // pred_check
    _
  $region35: #{residual_lstm_forward.1} parent=0 // pred_check_branch
    %3316 = sbr.rel (0) target = $region37
  $region36: #{residual_lstm_forward.1} parent=0 // pred_region
    _
  $region37: #{residual_lstm_forward.1} parent=0 // pred_fallthru
    _
  // Predicated region
  $region38: #{residual_lstm_forward.1} parent=0 // pred_check
    _
  $region39: #{residual_lstm_forward.1} parent=0 // pred_check_branch
    %3318 = sbr.rel (0) target = $region41
  $region40: #{residual_lstm_forward.1} parent=0 // pred_region
    _
  $region41: #{residual_lstm_forward.1} parent=0 // pred_fallthru
    _
  // Predicated region
  $region42: #{residual_lstm_forward.1} parent=0 // pred_check
    _
  $region43: #{residual_lstm_forward.1} parent=0 // pred_check_branch
    %3320 = sbr.rel (0) target = $region45
  $region44: #{residual_lstm_forward.1} parent=0 // pred_region
    _
  $region45: #{residual_lstm_forward.1} parent=0 // pred_fallthru
    _
  // Predicated region
  $region46: #{residual_lstm_forward.1} parent=0 // pred_check
    _
  $region47: #{residual_lstm_forward.1} parent=0 // pred_check_branch
    %3322 = sbr.rel (0) target = $region49
  $region48: #{residual_lstm_forward.1} parent=0 // pred_region
    _
  $region49: #{residual_lstm_forward.1} parent=0 // pred_fallthru
    _

</llo_original>
